<compile_context>
chip_gen: v7x
topology: tpu7x:2x2x1
jax: 0.10.0
libtpu: 0.0.40
codegen_flags: <defaults>
</compile_context>

<pallas_src>
import jax
import jax.numpy as jnp
import numpy as np
from jax.experimental import pallas as pl
from jax.experimental.pallas import tpu as pltpu

EPS = 1e-5
LANE = 128


def _round_up(x, m):
    return (x + m - 1) // m * m


# ---------------------------------------------------------------------------
# Kernels
# ---------------------------------------------------------------------------
def _conv3x3_stats(src, w_ref, y_ref, st_ref, col_ref):
    """3x3 conv of one halo row-tile + per-tile partial BN statistics.

    src     : ref, (TH+2, W+2, Cp) bf16  spatially padded / halo'd input tile
    w_ref   : ref, (9*Cp, Cp)      bf16  tap-major packed weights (resident)
    y_ref   : ref, (TH, W, Cp)     bf16  pre-BN conv output tile
    st_ref  : ref, (2, Cp)         f32   partial [sum, sum_sq] for this tile
    col_ref : ref, (TH, W, 9*Cp)   bf16  per-tile im2col scratch
    """
    TH, W, Cp = y_ref.shape
    M = TH * W

    # im2col: each tap lands in its own lane-aligned 128-wide block.
    for t in range(9):
        ky, kx = divmod(t, 3)
        col_ref[:, :, t * Cp:(t + 1) * Cp] = src[ky:ky + TH, kx:kx + W, :]

    # One big-K MXU matmul per tile (bf16 operands, f32 accumulation).
    acc = jnp.dot(col_ref[...].reshape(M, 9 * Cp), w_ref[...],
                  preferred_element_type=jnp.float32)            # (M, Cp) f32

    # BN statistics fused with the producing pass (no accumulator re-read).
    st_ref[0:1, :] = jnp.sum(acc, axis=0, keepdims=True)
    st_ref[1:2, :] = jnp.sum(acc * acc, axis=0, keepdims=True)

    y_ref[...] = acc.reshape(TH, W, Cp).astype(y_ref.dtype)


def conv_stats_kernel(x_ref, w_ref, y_ref, st_ref, col_ref):
    """Pass A: conv1 on the raw (zero-padded) input tile + partial stats."""
    _conv3x3_stats(x_ref, w_ref, y_ref, st_ref, col_ref)


def act_conv_stats_kernel(x_ref, w_ref, sc_ref, bs_ref, y_ref, st_ref,
                          col_ref, xact_ref):
    """Pass B: fused BN1+ReLU on the pre-BN conv1 tile, then conv2 + stats.

    The halo of x_ref was padded (wrapper-side) with v = -bias/scale per
    channel, so relu(scale*v + bias) == 0 and the activated halo is exactly
    the zero padding conv2 expects.
    """
    xact_ref[...] = jnp.maximum(
        x_ref[...].astype(jnp.float32) * sc_ref[...] + bs_ref[...], 0.0
    ).astype(xact_ref.dtype)
    _conv3x3_stats(xact_ref, w_ref, y_ref, st_ref, col_ref)


def bn_relu_kernel(z_ref, sc_ref, bs_ref, o_ref):
    """Pass C: final BN2 + ReLU."""
    o_ref[...] = jnp.maximum(
        z_ref[...].astype(jnp.float32) * sc_ref[...] + bs_ref[...], 0.0)


# ---------------------------------------------------------------------------
# Wrapper
# ---------------------------------------------------------------------------
def _vmem_limit_bytes():
    # Per-generation VMEM allowance with ~20% headroom for Mosaic internal
    # scratch and pipeline double buffers (instead of a hard-coded 64 MiB).
    try:
        return int(0.8 * pltpu.get_tpu_info().vmem_capacity_bytes)
    except Exception:
        return None       # fall back to the Mosaic default scoped limit


def _halo_row_tiles(xp, th):
    """(N, H+2, Wp, Cp) padded map -> (N, T, th+2, Wp, Cp) overlapping row
    tiles.  The 1-row halo is duplicated wrapper-side (layout plumbing) so the
    gridded BlockSpec pipeline stays purely rectangular."""
    n, hp, wp, cp = xp.shape
    h = hp - 2
    t = h // th
    return jnp.stack([xp[:, i * th:i * th + th + 2] for i in range(t)], axis=1)


def _fold_bn(stats, count, gamma_p, beta_p):
    """Fold per-tile partial sums into BN scale/bias (training-mode batch
    statistics, biased variance, like nn.BatchNorm2d in train())."""
    s1 = jnp.sum(stats[:, :, 0, :], axis=(0, 1))                  # (Cp,)
    s2 = jnp.sum(stats[:, :, 1, :], axis=(0, 1))
    mean = s1 / count
    var = jnp.maximum(s2 / count - mean * mean, 0.0)
    scale = gamma_p * jax.lax.rsqrt(var + EPS)
    bias = beta_p - mean * scale
    return scale.reshape(1, -1), bias.reshape(1, -1)


def unet_block(x_nchw, w1, w2, g1, b1, g2, b2):
    """x_nchw: (N, Cin, H, W); w1: (Cout, Cin, 3, 3); w2: (Cout, Cout, 3, 3)."""
    N, Cin, H, W = x_nchw.shape
    Cout = w1.shape[0]
    Cp = _round_up(max(Cin, Cout), LANE)        # lane-dense channel width
    Wp = W + 2
    # Row-tile height: divisor of H keeping per-tile scratch to ~100s of KiB.
    TH = 8 if (H % 8 == 0 and H > 8) else H
    T = H // TH
    grid = (N, T)
    count = N * H * W

    cparams = pltpu.CompilerParams(
        dimension_semantics=("parallel", "parallel"),   # 2-TC split on v7x
        vmem_limit_bytes=_vmem_limit_bytes())

    # ---- layout glue: NHWC, channel pad, weight / affine repack ------------
    x = jnp.transpose(x_nchw, (0, 2, 3, 1))
    xpad = jnp.pad(x, ((0, 0), (1, 1), (1, 1), (0, Cp - Cin))).astype(jnp.bfloat16)

    def pack_w(w, cin):
        wt = jnp.transpose(w, (2, 3, 1, 0))                      # (3,3,cin,Cout)
        wt = jnp.pad(wt, ((0, 0), (0, 0), (0, Cp - cin), (0, Cp - Cout)))
        return wt.reshape(9 * Cp, Cp).astype(jnp.bfloat16)

    def pack_v(v):
        # padded channels get gamma=0 / beta=0 so their activations stay 0.
        return jnp.pad(v.astype(jnp.float32), (0, Cp - Cout))

    w1p, w2p = pack_w(w1, Cin), pack_w(w2, Cout)
    g1p, b1p, g2p, b2p = pack_v(g1), pack_v(b1), pack_v(g2), pack_v(b2)

    # ---- shared BlockSpecs for the two conv passes --------------------------
    tile_in_spec = pl.BlockSpec((None, None, TH + 2, Wp, Cp),
                                lambda n, t: (n, t, 0, 0, 0))
    w_spec = pl.BlockSpec((9 * Cp, Cp), lambda n, t: (0, 0))     # resident
    vec_spec = pl.BlockSpec((1, Cp), lambda n, t: (0, 0))        # resident
    y_spec = pl.BlockSpec((None, None, TH, W, Cp),
                          lambda n, t: (n, t, 0, 0, 0))
    st_spec = pl.BlockSpec((None, None, 2, Cp), lambda n, t: (n, t, 0, 0))
    conv_out_shape = [jax.ShapeDtypeStruct((N, T, TH, W, Cp), jnp.bfloat16),
                      jax.ShapeDtypeStruct((N, T, 2, Cp), jnp.float32)]
    col_scratch = pltpu.VMEM((TH, W, 9 * Cp), jnp.bfloat16)

    # ---------------- pass A: conv1 + partial BN1 stats ----------------------
    y1_tiles, st1 = pl.pallas_call(
        conv_stats_kernel,
        grid=grid,
        in_specs=[tile_in_spec, w_spec],
        out_specs=[y_spec, st_spec],
        out_shape=conv_out_shape,
        scratch_shapes=[col_scratch],
        compiler_params=cparams,
    )(_halo_row_tiles(xpad, TH), w1p)

    scale1, bias1 = _fold_bn(st1, count, g1p, b1p)

    # ---- glue: stage conv2 input with per-channel pad_val halo --------------
    # pad value v = -bias/scale  =>  relu(scale*v + bias) == 0, i.e. the
    # activated halo is the zero padding conv2 expects.
    s1v, b1v = scale1[0], bias1[0]
    pad_val = jnp.where(s1v != 0, -b1v / jnp.where(s1v != 0, s1v, 1.0), 0.0)
    y1_full = y1_tiles.reshape(N, H, W, Cp)
    y1_pad = jnp.broadcast_to(pad_val.astype(jnp.bfloat16), (N, H + 2, Wp, Cp))
    y1_pad = y1_pad.at[:, 1:H + 1, 1:W + 1, :].set(y1_full)

    # ---------------- pass B: BN1+ReLU (fused) + conv2 + partial BN2 stats ---
    z2_tiles, st2 = pl.pallas_call(
        act_conv_stats_kernel,
        grid=grid,
        in_specs=[tile_in_spec, w_spec, vec_spec, vec_spec],
        out_specs=[y_spec, st_spec],
        out_shape=conv_out_shape,
        scratch_shapes=[col_scratch,
                        pltpu.VMEM((TH + 2, Wp, Cp), jnp.bfloat16)],
        compiler_params=cparams,
    )(_halo_row_tiles(y1_pad, TH), w2p, scale1, bias1)

    scale2, bias2 = _fold_bn(st2, count, g2p, b2p)

    # ---------------- pass C: final BN2 + ReLU --------------------------------
    out_nhwc = pl.pallas_call(
        bn_relu_kernel,
        grid=grid,
        in_specs=[pl.BlockSpec((None, TH, W, Cp), lambda n, t: (n, t, 0, 0)),
                  vec_spec, vec_spec],
        out_specs=pl.BlockSpec((None, TH, W, Cp), lambda n, t: (n, t, 0, 0)),
        out_shape=jax.ShapeDtypeStruct((N, H, W, Cp), jnp.float32),
        compiler_params=cparams,
    )(z2_tiles.reshape(N, H, W, Cp), scale2, bias2)

    # strip channel padding, back to NCHW
    return jnp.transpose(out_nhwc[..., :Cout], (0, 3, 1, 2))


# ---------------------------------------------------------------------------
# Pure-JAX reference reproducing the PyTorch forward (training-mode BN)
# ---------------------------------------------------------------------------
def reference(x, w1, w2, g1, b1, g2, b2):
    def conv(x, w):
        return jax.lax.conv_general_dilated(
            x, w, window_strides=(1, 1), padding=((1, 1), (1, 1)),
            dimension_numbers=('NCHW', 'OIHW', 'NCHW'))

    def bn_relu(y, g, b):
        mean = jnp.mean(y, axis=(0, 2, 3), keepdims=True)
        var = jnp.mean((y - mean) ** 2, axis=(0, 2, 3), keepdims=True)
        yn = (y - mean) * jax.lax.rsqrt(var + EPS)
        yn = yn * g.reshape(1, -1, 1, 1) + b.reshape(1, -1, 1, 1)
        return jnp.maximum(yn, 0.0)

    y = bn_relu(conv(x, w1), g1, b1)
    return bn_relu(conv(y, w2), g2, b2)


if __name__ == "__main__":
    N, Cin, Cout, H, W = 2, 4, 8, 16, 16

    key = jax.random.PRNGKey(0)
    k_x, k_w1, k_w2 = jax.random.split(key, 3)
    x = jax.random.normal(k_x, (N, Cin, H, W), jnp.float32)
    w1 = jax.random.normal(k_w1, (Cout, Cin, 3, 3), jnp.float32) * 0.1
    w2 = jax.random.normal(k_w2, (Cout, Cout, 3, 3), jnp.float32) * 0.1
    # BatchNorm2d default affine init: weight=1, bias=0 (training-mode stats).
    g1 = jnp.ones((Cout,), jnp.float32)
    b1 = jnp.zeros((Cout,), jnp.float32)
    g2 = jnp.ones((Cout,), jnp.float32)
    b2 = jnp.zeros((Cout,), jnp.float32)

    out = jax.block_until_ready(jax.jit(unet_block)(x, w1, w2, g1, b1, g2, b2))
    ref = jax.block_until_ready(reference(x, w1, w2, g1, b1, g2, b2))

    # bf16 MXU operands + bf16 intermediate activations (f32 accumulation and
    # f32 BN math) give ~1e-2 worst-case error on these O(1) BN-normalized
    # outputs; 5e-2 leaves headroom vs the f32 reference.
    o_np, r_np = np.asarray(out), np.asarray(ref)
    if not np.allclose(o_np, r_np, atol=5e-2, rtol=5e-2):
        raise AssertionError(
            f"mismatch: max abs err {np.max(np.abs(o_np - r_np))}")
    print("KERNEL_OK")
</pallas_src>

<mosaic_0001>
module attributes {stable_mosaic.version = 11 : i64} {
  func.func @conv_stats_kernel(%arg0: i32, %arg1: i32, %arg2: memref<1x1x10x18x128xbf16, #tpu.memory_space<vmem>>, %arg3: memref<1152x128xbf16, #tpu.memory_space<vmem>>, %arg4: memref<1x1x8x16x128xbf16, #tpu.memory_space<vmem>>, %arg5: memref<1x1x2x128xf32, #tpu.memory_space<vmem>>, %arg6: memref<8x16x1152xbf16, #tpu.memory_space<vmem>>) attributes {dimension_semantics = [#tpu.dimension_semantics<parallel>, #tpu.dimension_semantics<parallel>], iteration_bounds = array<i64: 2, 2>, scalar_prefetch = 0 : i64, scratch_operands = 1 : i64, tpu.core_type = #tpu.core_type<tc>, window_params = [{transform_indices = @transform_0, window_bounds = array<i64: 1, 1, 10, 18, 128>}, {pipeline_mode = #tpu.pipeline_mode<synchronous>, transform_indices = @transform_1, window_bounds = array<i64: 1152, 128>}, {transform_indices = @transform_2, window_bounds = array<i64: 1, 1, 8, 16, 128>}, {transform_indices = @transform_3, window_bounds = array<i64: 1, 1, 2, 128>}]} {
    %c0 = arith.constant 0 : index
    %c0_0 = arith.constant 0 : index
    %c0_1 = arith.constant 0 : index
    %c0_2 = arith.constant 0 : index
    %c0_3 = arith.constant 0 : index
    %0 = vector.load %arg2[%c0, %c0_0, %c0_1, %c0_2, %c0_3] : memref<1x1x10x18x128xbf16, #tpu.memory_space<vmem>>, vector<1x1x8x16x128xbf16>
    %1 = vector.shape_cast %0 : vector<1x1x8x16x128xbf16> to vector<8x16x128xbf16>
    %c0_4 = arith.constant 0 : index
    %c0_5 = arith.constant 0 : index
    %c0_6 = arith.constant 0 : index
    %2 = vector.load %arg6[%c0_4, %c0_5, %c0_6] : memref<8x16x1152xbf16, #tpu.memory_space<vmem>>, vector<8x16x128xbf16>
    tpu.vector_store %arg6[%c0_4, %c0_5, %c0_6], %1 {strides = array<i32>} : memref<8x16x1152xbf16, #tpu.memory_space<vmem>>, vector<8x16x128xbf16>,
    %c0_7 = arith.constant 0 : index
    %c0_8 = arith.constant 0 : index
    %c0_9 = arith.constant 0 : index
    %c1 = arith.constant 1 : index
    %c0_10 = arith.constant 0 : index
    %3 = vector.load %arg2[%c0_7, %c0_8, %c0_9, %c1, %c0_10] : memref<1x1x10x18x128xbf16, #tpu.memory_space<vmem>>, vector<1x1x8x16x128xbf16>
    %4 = vector.shape_cast %3 : vector<1x1x8x16x128xbf16> to vector<8x16x128xbf16>
    %c0_11 = arith.constant 0 : index
    %c0_12 = arith.constant 0 : index
    %c128 = arith.constant 128 : index
    %5 = vector.load %arg6[%c0_11, %c0_12, %c128] : memref<8x16x1152xbf16, #tpu.memory_space<vmem>>, vector<8x16x128xbf16>
    tpu.vector_store %arg6[%c0_11, %c0_12, %c128], %4 {strides = array<i32>} : memref<8x16x1152xbf16, #tpu.memory_space<vmem>>, vector<8x16x128xbf16>,
    %c0_13 = arith.constant 0 : index
    %c0_14 = arith.constant 0 : index
    %c0_15 = arith.constant 0 : index
    %c2 = arith.constant 2 : index
    %c0_16 = arith.constant 0 : index
    %6 = vector.load %arg2[%c0_13, %c0_14, %c0_15, %c2, %c0_16] : memref<1x1x10x18x128xbf16, #tpu.memory_space<vmem>>, vector<1x1x8x16x128xbf16>
    %7 = vector.shape_cast %6 : vector<1x1x8x16x128xbf16> to vector<8x16x128xbf16>
    %c0_17 = arith.constant 0 : index
    %c0_18 = arith.constant 0 : index
    %c256 = arith.constant 256 : index
    %8 = vector.load %arg6[%c0_17, %c0_18, %c256] : memref<8x16x1152xbf16, #tpu.memory_space<vmem>>, vector<8x16x128xbf16>
    tpu.vector_store %arg6[%c0_17, %c0_18, %c256], %7 {strides = array<i32>} : memref<8x16x1152xbf16, #tpu.memory_space<vmem>>, vector<8x16x128xbf16>,
    %c0_19 = arith.constant 0 : index
    %c0_20 = arith.constant 0 : index
    %c1_21 = arith.constant 1 : index
    %c0_22 = arith.constant 0 : index
    %c0_23 = arith.constant 0 : index
    %9 = vector.load %arg2[%c0_19, %c0_20, %c1_21, %c0_22, %c0_23] : memref<1x1x10x18x128xbf16, #tpu.memory_space<vmem>>, vector<1x1x8x16x128xbf16>
    %10 = vector.shape_cast %9 : vector<1x1x8x16x128xbf16> to vector<8x16x128xbf16>
    %c0_24 = arith.constant 0 : index
    %c0_25 = arith.constant 0 : index
    %c384 = arith.constant 384 : index
    %11 = vector.load %arg6[%c0_24, %c0_25, %c384] : memref<8x16x1152xbf16, #tpu.memory_space<vmem>>, vector<8x16x128xbf16>
    tpu.vector_store %arg6[%c0_24, %c0_25, %c384], %10 {strides = array<i32>} : memref<8x16x1152xbf16, #tpu.memory_space<vmem>>, vector<8x16x128xbf16>,
    %c0_26 = arith.constant 0 : index
    %c0_27 = arith.constant 0 : index
    %c1_28 = arith.constant 1 : index
    %c1_29 = arith.constant 1 : index
    %c0_30 = arith.constant 0 : index
    %12 = vector.load %arg2[%c0_26, %c0_27, %c1_28, %c1_29, %c0_30] : memref<1x1x10x18x128xbf16, #tpu.memory_space<vmem>>, vector<1x1x8x16x128xbf16>
    %13 = vector.shape_cast %12 : vector<1x1x8x16x128xbf16> to vector<8x16x128xbf16>
    %c0_31 = arith.constant 0 : index
    %c0_32 = arith.constant 0 : index
    %c512 = arith.constant 512 : index
    %14 = vector.load %arg6[%c0_31, %c0_32, %c512] : memref<8x16x1152xbf16, #tpu.memory_space<vmem>>, vector<8x16x128xbf16>
    tpu.vector_store %arg6[%c0_31, %c0_32, %c512], %13 {strides = array<i32>} : memref<8x16x1152xbf16, #tpu.memory_space<vmem>>, vector<8x16x128xbf16>,
    %c0_33 = arith.constant 0 : index
    %c0_34 = arith.constant 0 : index
    %c1_35 = arith.constant 1 : index
    %c2_36 = arith.constant 2 : index
    %c0_37 = arith.constant 0 : index
    %15 = vector.load %arg2[%c0_33, %c0_34, %c1_35, %c2_36, %c0_37] : memref<1x1x10x18x128xbf16, #tpu.memory_space<vmem>>, vector<1x1x8x16x128xbf16>
    %16 = vector.shape_cast %15 : vector<1x1x8x16x128xbf16> to vector<8x16x128xbf16>
    %c0_38 = arith.constant 0 : index
    %c0_39 = arith.constant 0 : index
    %c640 = arith.constant 640 : index
    %17 = vector.load %arg6[%c0_38, %c0_39, %c640] : memref<8x16x1152xbf16, #tpu.memory_space<vmem>>, vector<8x16x128xbf16>
    tpu.vector_store %arg6[%c0_38, %c0_39, %c640], %16 {strides = array<i32>} : memref<8x16x1152xbf16, #tpu.memory_space<vmem>>, vector<8x16x128xbf16>,
    %c0_40 = arith.constant 0 : index
    %c0_41 = arith.constant 0 : index
    %c2_42 = arith.constant 2 : index
    %c0_43 = arith.constant 0 : index
    %c0_44 = arith.constant 0 : index
    %18 = vector.load %arg2[%c0_40, %c0_41, %c2_42, %c0_43, %c0_44] : memref<1x1x10x18x128xbf16, #tpu.memory_space<vmem>>, vector<1x1x8x16x128xbf16>
    %19 = vector.shape_cast %18 : vector<1x1x8x16x128xbf16> to vector<8x16x128xbf16>
    %c0_45 = arith.constant 0 : index
    %c0_46 = arith.constant 0 : index
    %c768 = arith.constant 768 : index
    %20 = vector.load %arg6[%c0_45, %c0_46, %c768] : memref<8x16x1152xbf16, #tpu.memory_space<vmem>>, vector<8x16x128xbf16>
    tpu.vector_store %arg6[%c0_45, %c0_46, %c768], %19 {strides = array<i32>} : memref<8x16x1152xbf16, #tpu.memory_space<vmem>>, vector<8x16x128xbf16>,
    %c0_47 = arith.constant 0 : index
    %c0_48 = arith.constant 0 : index
    %c2_49 = arith.constant 2 : index
    %c1_50 = arith.constant 1 : index
    %c0_51 = arith.constant 0 : index
    %21 = vector.load %arg2[%c0_47, %c0_48, %c2_49, %c1_50, %c0_51] : memref<1x1x10x18x128xbf16, #tpu.memory_space<vmem>>, vector<1x1x8x16x128xbf16>
    %22 = vector.shape_cast %21 : vector<1x1x8x16x128xbf16> to vector<8x16x128xbf16>
    %c0_52 = arith.constant 0 : index
    %c0_53 = arith.constant 0 : index
    %c896 = arith.constant 896 : index
    %23 = vector.load %arg6[%c0_52, %c0_53, %c896] : memref<8x16x1152xbf16, #tpu.memory_space<vmem>>, vector<8x16x128xbf16>
    tpu.vector_store %arg6[%c0_52, %c0_53, %c896], %22 {strides = array<i32>} : memref<8x16x1152xbf16, #tpu.memory_space<vmem>>, vector<8x16x128xbf16>,
    %c0_54 = arith.constant 0 : index
    %c0_55 = arith.constant 0 : index
    %c2_56 = arith.constant 2 : index
    %c2_57 = arith.constant 2 : index
    %c0_58 = arith.constant 0 : index
    %24 = vector.load %arg2[%c0_54, %c0_55, %c2_56, %c2_57, %c0_58] : memref<1x1x10x18x128xbf16, #tpu.memory_space<vmem>>, vector<1x1x8x16x128xbf16>
    %25 = vector.shape_cast %24 : vector<1x1x8x16x128xbf16> to vector<8x16x128xbf16>
    %c0_59 = arith.constant 0 : index
    %c0_60 = arith.constant 0 : index
    %c1024 = arith.constant 1024 : index
    %26 = vector.load %arg6[%c0_59, %c0_60, %c1024] : memref<8x16x1152xbf16, #tpu.memory_space<vmem>>, vector<8x16x128xbf16>
    tpu.vector_store %arg6[%c0_59, %c0_60, %c1024], %25 {strides = array<i32>} : memref<8x16x1152xbf16, #tpu.memory_space<vmem>>, vector<8x16x128xbf16>,
    %c0_61 = arith.constant 0 : index
    %c0_62 = arith.constant 0 : index
    %c0_63 = arith.constant 0 : index
    %27 = vector.load %arg6[%c0_61, %c0_62, %c0_63] : memref<8x16x1152xbf16, #tpu.memory_space<vmem>>, vector<8x16x1152xbf16>
    %28 = vector.shape_cast %27 : vector<8x16x1152xbf16> to vector<128x1152xbf16>
    %c0_64 = arith.constant 0 : index
    %c0_65 = arith.constant 0 : index
    %29 = vector.load %arg3[%c0_64, %c0_65] : memref<1152x128xbf16, #tpu.memory_space<vmem>>, vector<1152x128xbf16>
    %cst = arith.constant dense<0.000000e+00> : vector<128x128xf32>
    %30 = tpu.matmul %28, %29, %cst {dimension_numbers = #tpu.dot_dimension_numbers<[1], [0], [0], [1], [0, 0, 1, 1], [], []>} : vector<128x1152xbf16>, vector<1152x128xbf16>, vector<128x128xf32> -> vector<128x128xf32>
    %cst_66 = arith.constant dense<0.000000e+00> : vector<128xf32>
    %31 = vector.multi_reduction <add>, %30, %cst_66 [0] : vector<128x128xf32> to vector<128xf32>
    %32 = vector.shape_cast %31 : vector<128xf32> to vector<1x128xf32>
    %c0_67 = arith.constant 0 : index
    %c0_68 = arith.constant 0 : index
    %c0_69 = arith.constant 0 : index
    %c0_70 = arith.constant 0 : index
    %33 = vector.load %arg5[%c0_67, %c0_68, %c0_69, %c0_70] : memref<1x1x2x128xf32, #tpu.memory_space<vmem>>, vector<1x1x1x128xf32>
    %34 = vector.shape_cast %33 : vector<1x1x1x128xf32> to vector<1x128xf32>
    %35 = vector.shape_cast %32 : vector<1x128xf32> to vector<1x1x1x128xf32>
    tpu.vector_store %arg5[%c0_67, %c0_68, %c0_69, %c0_70], %35 {strides = array<i32>} : memref<1x1x2x128xf32, #tpu.memory_space<vmem>>, vector<1x1x1x128xf32>,
    %36 = arith.mulf %30, %30 : vector<128x128xf32>
    %cst_71 = arith.constant dense<0.000000e+00> : vector<128xf32>
    %37 = vector.multi_reduction <add>, %36, %cst_71 [0] : vector<128x128xf32> to vector<128xf32>
    %38 = vector.shape_cast %37 : vector<128xf32> to vector<1x128xf32>
    %c0_72 = arith.constant 0 : index
    %c0_73 = arith.constant 0 : index
    %c1_74 = arith.constant 1 : index
    %c0_75 = arith.constant 0 : index
    %39 = vector.load %arg5[%c0_72, %c0_73, %c1_74, %c0_75] : memref<1x1x2x128xf32, #tpu.memory_space<vmem>>, vector<1x1x1x128xf32>
    %40 = vector.shape_cast %39 : vector<1x1x1x128xf32> to vector<1x128xf32>
    %41 = vector.shape_cast %38 : vector<1x128xf32> to vector<1x1x1x128xf32>
    tpu.vector_store %arg5[%c0_72, %c0_73, %c1_74, %c0_75], %41 {strides = array<i32>} : memref<1x1x2x128xf32, #tpu.memory_space<vmem>>, vector<1x1x1x128xf32>,
    %42 = vector.shape_cast %30 : vector<128x128xf32> to vector<8x16x128xf32>
    %43 = arith.truncf %42 : vector<8x16x128xf32> to vector<8x16x128xbf16>
    %c0_76 = arith.constant 0 : index
    %c0_77 = arith.constant 0 : index
    %c0_78 = arith.constant 0 : index
    %c0_79 = arith.constant 0 : index
    %c0_80 = arith.constant 0 : index
    %44 = vector.load %arg4[%c0_76, %c0_77, %c0_78, %c0_79, %c0_80] : memref<1x1x8x16x128xbf16, #tpu.memory_space<vmem>>, vector<1x1x8x16x128xbf16>
    %45 = vector.shape_cast %44 : vector<1x1x8x16x128xbf16> to vector<8x16x128xbf16>
    %46 = vector.shape_cast %43 : vector<8x16x128xbf16> to vector<1x1x8x16x128xbf16>
    tpu.vector_store %arg4[%c0_76, %c0_77, %c0_78, %c0_79, %c0_80], %46 {strides = array<i32>} : memref<1x1x8x16x128xbf16, #tpu.memory_space<vmem>>, vector<1x1x8x16x128xbf16>,
    return
  }
  func.func @transform_0(%arg0: i32, %arg1: i32) -> (i32, i32, i32, i32, i32) {
    %c0_i32 = arith.constant 0 : i32
    %c0_i32_0 = arith.constant 0 : i32
    %c0_i32_1 = arith.constant 0 : i32
    %c0_i32_2 = arith.constant 0 : i32
    return %arg0, %arg1, %c0_i32, %c0_i32_0, %c0_i32_1 : i32, i32, i32, i32, i32
  }
  func.func @transform_1(%arg0: i32, %arg1: i32) -> (i32, i32) {
    %c0_i32 = arith.constant 0 : i32
    %c0_i32_0 = arith.constant 0 : i32
    %c0_i32_1 = arith.constant 0 : i32
    return %c0_i32, %c0_i32_0 : i32, i32
  }
  func.func @transform_2(%arg0: i32, %arg1: i32) -> (i32, i32, i32, i32, i32) {
    %c0_i32 = arith.constant 0 : i32
    %c0_i32_0 = arith.constant 0 : i32
    %c0_i32_1 = arith.constant 0 : i32
    %c0_i32_2 = arith.constant 0 : i32
    return %arg0, %arg1, %c0_i32, %c0_i32_0, %c0_i32_1 : i32, i32, i32, i32, i32
  }
  func.func @transform_3(%arg0: i32, %arg1: i32) -> (i32, i32, i32, i32) {
    %c0_i32 = arith.constant 0 : i32
    %c0_i32_0 = arith.constant 0 : i32
    %c0_i32_1 = arith.constant 0 : i32
    return %arg0, %arg1, %c0_i32, %c0_i32_0 : i32, i32, i32, i32
  }
}

module attributes {stable_mosaic.version = 11 : i64} {
  func.func @act_conv_stats_kernel(%arg0: i32, %arg1: i32, %arg2: memref<1x1x10x18x128xbf16, #tpu.memory_space<vmem>>, %arg3: memref<1152x128xbf16, #tpu.memory_space<vmem>>, %arg4: memref<1x128xf32, #tpu.memory_space<vmem>>, %arg5: memref<1x128xf32, #tpu.memory_space<vmem>>, %arg6: memref<1x1x8x16x128xbf16, #tpu.memory_space<vmem>>, %arg7: memref<1x1x2x128xf32, #tpu.memory_space<vmem>>, %arg8: memref<8x16x1152xbf16, #tpu.memory_space<vmem>>, %arg9: memref<10x18x128xbf16, #tpu.memory_space<vmem>>) attributes {dimension_semantics = [#tpu.dimension_semantics<parallel>, #tpu.dimension_semantics<parallel>], iteration_bounds = array<i64: 2, 2>, scalar_prefetch = 0 : i64, scratch_operands = 2 : i64, tpu.core_type = #tpu.core_type<tc>, window_params = [{transform_indices = @transform_0, window_bounds = array<i64: 1, 1, 10, 18, 128>}, {pipeline_mode = #tpu.pipeline_mode<synchronous>, transform_indices = @transform_1, window_bounds = array<i64: 1152, 128>}, {pipeline_mode = #tpu.pipeline_mode<synchronous>, transform_indices = @transform_2, window_bounds = array<i64: 1, 128>}, {pipeline_mode = #tpu.pipeline_mode<synchronous>, transform_indices = @transform_3, window_bounds = array<i64: 1, 128>}, {transform_indices = @transform_4, window_bounds = array<i64: 1, 1, 8, 16, 128>}, {transform_indices = @transform_5, window_bounds = array<i64: 1, 1, 2, 128>}]} {
    %c0 = arith.constant 0 : index
    %c0_0 = arith.constant 0 : index
    %c0_1 = arith.constant 0 : index
    %c0_2 = arith.constant 0 : index
    %c0_3 = arith.constant 0 : index
    %0 = vector.load %arg2[%c0, %c0_0, %c0_1, %c0_2, %c0_3] : memref<1x1x10x18x128xbf16, #tpu.memory_space<vmem>>, vector<1x1x10x18x128xbf16>
    %1 = vector.shape_cast %0 : vector<1x1x10x18x128xbf16> to vector<10x18x128xbf16>
    %2 = arith.extf %1 : vector<10x18x128xbf16> to vector<10x18x128xf32>
    %c0_4 = arith.constant 0 : index
    %c0_5 = arith.constant 0 : index
    %3 = vector.load %arg4[%c0_4, %c0_5] : memref<1x128xf32, #tpu.memory_space<vmem>>, vector<1x128xf32>
    %4 = vector.shape_cast %3 : vector<1x128xf32> to vector<1x1x128xf32>
    %5 = vector.broadcast %4 : vector<1x1x128xf32> to vector<10x18x128xf32>
    %6 = arith.mulf %2, %5 : vector<10x18x128xf32>
    %c0_6 = arith.constant 0 : index
    %c0_7 = arith.constant 0 : index
    %7 = vector.load %arg5[%c0_6, %c0_7] : memref<1x128xf32, #tpu.memory_space<vmem>>, vector<1x128xf32>
    %8 = vector.shape_cast %7 : vector<1x128xf32> to vector<1x1x128xf32>
    %9 = vector.broadcast %8 : vector<1x1x128xf32> to vector<10x18x128xf32>
    %10 = arith.addf %6, %9 : vector<10x18x128xf32>
    %cst = arith.constant 0.000000e+00 : f32
    %11 = vector.broadcast %cst : f32 to vector<10x18x128xf32>
    %12 = arith.maximumf %10, %11 : vector<10x18x128xf32>
    %13 = arith.truncf %12 : vector<10x18x128xf32> to vector<10x18x128xbf16>
    %c0_8 = arith.constant 0 : index
    %c0_9 = arith.constant 0 : index
    %c0_10 = arith.constant 0 : index
    %14 = vector.load %arg9[%c0_8, %c0_9, %c0_10] : memref<10x18x128xbf16, #tpu.memory_space<vmem>>, vector<10x18x128xbf16>
    tpu.vector_store %arg9[%c0_8, %c0_9, %c0_10], %13 {strides = array<i32>} : memref<10x18x128xbf16, #tpu.memory_space<vmem>>, vector<10x18x128xbf16>,
    %c0_11 = arith.constant 0 : index
    %c0_12 = arith.constant 0 : index
    %c0_13 = arith.constant 0 : index
    %15 = vector.load %arg9[%c0_11, %c0_12, %c0_13] : memref<10x18x128xbf16, #tpu.memory_space<vmem>>, vector<8x16x128xbf16>
    %c0_14 = arith.constant 0 : index
    %c0_15 = arith.constant 0 : index
    %c0_16 = arith.constant 0 : index
    %16 = vector.load %arg8[%c0_14, %c0_15, %c0_16] : memref<8x16x1152xbf16, #tpu.memory_space<vmem>>, vector<8x16x128xbf16>
    tpu.vector_store %arg8[%c0_14, %c0_15, %c0_16], %15 {strides = array<i32>} : memref<8x16x1152xbf16, #tpu.memory_space<vmem>>, vector<8x16x128xbf16>,
    %c0_17 = arith.constant 0 : index
    %c1 = arith.constant 1 : index
    %c0_18 = arith.constant 0 : index
    %17 = vector.load %arg9[%c0_17, %c1, %c0_18] : memref<10x18x128xbf16, #tpu.memory_space<vmem>>, vector<8x16x128xbf16>
    %c0_19 = arith.constant 0 : index
    %c0_20 = arith.constant 0 : index
    %c128 = arith.constant 128 : index
    %18 = vector.load %arg8[%c0_19, %c0_20, %c128] : memref<8x16x1152xbf16, #tpu.memory_space<vmem>>, vector<8x16x128xbf16>
    tpu.vector_store %arg8[%c0_19, %c0_20, %c128], %17 {strides = array<i32>} : memref<8x16x1152xbf16, #tpu.memory_space<vmem>>, vector<8x16x128xbf16>,
    %c0_21 = arith.constant 0 : index
    %c2 = arith.constant 2 : index
    %c0_22 = arith.constant 0 : index
    %19 = vector.load %arg9[%c0_21, %c2, %c0_22] : memref<10x18x128xbf16, #tpu.memory_space<vmem>>, vector<8x16x128xbf16>
    %c0_23 = arith.constant 0 : index
    %c0_24 = arith.constant 0 : index
    %c256 = arith.constant 256 : index
    %20 = vector.load %arg8[%c0_23, %c0_24, %c256] : memref<8x16x1152xbf16, #tpu.memory_space<vmem>>, vector<8x16x128xbf16>
    tpu.vector_store %arg8[%c0_23, %c0_24, %c256], %19 {strides = array<i32>} : memref<8x16x1152xbf16, #tpu.memory_space<vmem>>, vector<8x16x128xbf16>,
    %c1_25 = arith.constant 1 : index
    %c0_26 = arith.constant 0 : index
    %c0_27 = arith.constant 0 : index
    %21 = vector.load %arg9[%c1_25, %c0_26, %c0_27] : memref<10x18x128xbf16, #tpu.memory_space<vmem>>, vector<8x16x128xbf16>
    %c0_28 = arith.constant 0 : index
    %c0_29 = arith.constant 0 : index
    %c384 = arith.constant 384 : index
    %22 = vector.load %arg8[%c0_28, %c0_29, %c384] : memref<8x16x1152xbf16, #tpu.memory_space<vmem>>, vector<8x16x128xbf16>
    tpu.vector_store %arg8[%c0_28, %c0_29, %c384], %21 {strides = array<i32>} : memref<8x16x1152xbf16, #tpu.memory_space<vmem>>, vector<8x16x128xbf16>,
    %c1_30 = arith.constant 1 : index
    %c1_31 = arith.constant 1 : index
    %c0_32 = arith.constant 0 : index
    %23 = vector.load %arg9[%c1_30, %c1_31, %c0_32] : memref<10x18x128xbf16, #tpu.memory_space<vmem>>, vector<8x16x128xbf16>
    %c0_33 = arith.constant 0 : index
    %c0_34 = arith.constant 0 : index
    %c512 = arith.constant 512 : index
    %24 = vector.load %arg8[%c0_33, %c0_34, %c512] : memref<8x16x1152xbf16, #tpu.memory_space<vmem>>, vector<8x16x128xbf16>
    tpu.vector_store %arg8[%c0_33, %c0_34, %c512], %23 {strides = array<i32>} : memref<8x16x1152xbf16, #tpu.memory_space<vmem>>, vector<8x16x128xbf16>,
    %c1_35 = arith.constant 1 : index
    %c2_36 = arith.constant 2 : index
    %c0_37 = arith.constant 0 : index
    %25 = vector.load %arg9[%c1_35, %c2_36, %c0_37] : memref<10x18x128xbf16, #tpu.memory_space<vmem>>, vector<8x16x128xbf16>
    %c0_38 = arith.constant 0 : index
    %c0_39 = arith.constant 0 : index
    %c640 = arith.constant 640 : index
    %26 = vector.load %arg8[%c0_38, %c0_39, %c640] : memref<8x16x1152xbf16, #tpu.memory_space<vmem>>, vector<8x16x128xbf16>
    tpu.vector_store %arg8[%c0_38, %c0_39, %c640], %25 {strides = array<i32>} : memref<8x16x1152xbf16, #tpu.memory_space<vmem>>, vector<8x16x128xbf16>,
    %c2_40 = arith.constant 2 : index
    %c0_41 = arith.constant 0 : index
    %c0_42 = arith.constant 0 : index
    %27 = vector.load %arg9[%c2_40, %c0_41, %c0_42] : memref<10x18x128xbf16, #tpu.memory_space<vmem>>, vector<8x16x128xbf16>
    %c0_43 = arith.constant 0 : index
    %c0_44 = arith.constant 0 : index
    %c768 = arith.constant 768 : index
    %28 = vector.load %arg8[%c0_43, %c0_44, %c768] : memref<8x16x1152xbf16, #tpu.memory_space<vmem>>, vector<8x16x128xbf16>
    tpu.vector_store %arg8[%c0_43, %c0_44, %c768], %27 {strides = array<i32>} : memref<8x16x1152xbf16, #tpu.memory_space<vmem>>, vector<8x16x128xbf16>,
    %c2_45 = arith.constant 2 : index
    %c1_46 = arith.constant 1 : index
    %c0_47 = arith.constant 0 : index
    %29 = vector.load %arg9[%c2_45, %c1_46, %c0_47] : memref<10x18x128xbf16, #tpu.memory_space<vmem>>, vector<8x16x128xbf16>
    %c0_48 = arith.constant 0 : index
    %c0_49 = arith.constant 0 : index
    %c896 = arith.constant 896 : index
    %30 = vector.load %arg8[%c0_48, %c0_49, %c896] : memref<8x16x1152xbf16, #tpu.memory_space<vmem>>, vector<8x16x128xbf16>
    tpu.vector_store %arg8[%c0_48, %c0_49, %c896], %29 {strides = array<i32>} : memref<8x16x1152xbf16, #tpu.memory_space<vmem>>, vector<8x16x128xbf16>,
    %c2_50 = arith.constant 2 : index
    %c2_51 = arith.constant 2 : index
    %c0_52 = arith.constant 0 : index
    %31 = vector.load %arg9[%c2_50, %c2_51, %c0_52] : memref<10x18x128xbf16, #tpu.memory_space<vmem>>, vector<8x16x128xbf16>
    %c0_53 = arith.constant 0 : index
    %c0_54 = arith.constant 0 : index
    %c1024 = arith.constant 1024 : index
    %32 = vector.load %arg8[%c0_53, %c0_54, %c1024] : memref<8x16x1152xbf16, #tpu.memory_space<vmem>>, vector<8x16x128xbf16>
    tpu.vector_store %arg8[%c0_53, %c0_54, %c1024], %31 {strides = array<i32>} : memref<8x16x1152xbf16, #tpu.memory_space<vmem>>, vector<8x16x128xbf16>,
    %c0_55 = arith.constant 0 : index
    %c0_56 = arith.constant 0 : index
    %c0_57 = arith.constant 0 : index
    %33 = vector.load %arg8[%c0_55, %c0_56, %c0_57] : memref<8x16x1152xbf16, #tpu.memory_space<vmem>>, vector<8x16x1152xbf16>
    %34 = vector.shape_cast %33 : vector<8x16x1152xbf16> to vector<128x1152xbf16>
    %c0_58 = arith.constant 0 : index
    %c0_59 = arith.constant 0 : index
    %35 = vector.load %arg3[%c0_58, %c0_59] : memref<1152x128xbf16, #tpu.memory_space<vmem>>, vector<1152x128xbf16>
    %cst_60 = arith.constant dense<0.000000e+00> : vector<128x128xf32>
    %36 = tpu.matmul %34, %35, %cst_60 {dimension_numbers = #tpu.dot_dimension_numbers<[1], [0], [0], [1], [0, 0, 1, 1], [], []>} : vector<128x1152xbf16>, vector<1152x128xbf16>, vector<128x128xf32> -> vector<128x128xf32>
    %cst_61 = arith.constant dense<0.000000e+00> : vector<128xf32>
    %37 = vector.multi_reduction <add>, %36, %cst_61 [0] : vector<128x128xf32> to vector<128xf32>
    %38 = vector.shape_cast %37 : vector<128xf32> to vector<1x128xf32>
    %c0_62 = arith.constant 0 : index
    %c0_63 = arith.constant 0 : index
    %c0_64 = arith.constant 0 : index
    %c0_65 = arith.constant 0 : index
    %39 = vector.load %arg7[%c0_62, %c0_63, %c0_64, %c0_65] : memref<1x1x2x128xf32, #tpu.memory_space<vmem>>, vector<1x1x1x128xf32>
    %40 = vector.shape_cast %39 : vector<1x1x1x128xf32> to vector<1x128xf32>
    %41 = vector.shape_cast %38 : vector<1x128xf32> to vector<1x1x1x128xf32>
    tpu.vector_store %arg7[%c0_62, %c0_63, %c0_64, %c0_65], %41 {strides = array<i32>} : memref<1x1x2x128xf32, #tpu.memory_space<vmem>>, vector<1x1x1x128xf32>,
    %42 = arith.mulf %36, %36 : vector<128x128xf32>
    %cst_66 = arith.constant dense<0.000000e+00> : vector<128xf32>
    %43 = vector.multi_reduction <add>, %42, %cst_66 [0] : vector<128x128xf32> to vector<128xf32>
    %44 = vector.shape_cast %43 : vector<128xf32> to vector<1x128xf32>
    %c0_67 = arith.constant 0 : index
    %c0_68 = arith.constant 0 : index
    %c1_69 = arith.constant 1 : index
    %c0_70 = arith.constant 0 : index
    %45 = vector.load %arg7[%c0_67, %c0_68, %c1_69, %c0_70] : memref<1x1x2x128xf32, #tpu.memory_space<vmem>>, vector<1x1x1x128xf32>
    %46 = vector.shape_cast %45 : vector<1x1x1x128xf32> to vector<1x128xf32>
    %47 = vector.shape_cast %44 : vector<1x128xf32> to vector<1x1x1x128xf32>
    tpu.vector_store %arg7[%c0_67, %c0_68, %c1_69, %c0_70], %47 {strides = array<i32>} : memref<1x1x2x128xf32, #tpu.memory_space<vmem>>, vector<1x1x1x128xf32>,
    %48 = vector.shape_cast %36 : vector<128x128xf32> to vector<8x16x128xf32>
    %49 = arith.truncf %48 : vector<8x16x128xf32> to vector<8x16x128xbf16>
    %c0_71 = arith.constant 0 : index
    %c0_72 = arith.constant 0 : index
    %c0_73 = arith.constant 0 : index
    %c0_74 = arith.constant 0 : index
    %c0_75 = arith.constant 0 : index
    %50 = vector.load %arg6[%c0_71, %c0_72, %c0_73, %c0_74, %c0_75] : memref<1x1x8x16x128xbf16, #tpu.memory_space<vmem>>, vector<1x1x8x16x128xbf16>
    %51 = vector.shape_cast %50 : vector<1x1x8x16x128xbf16> to vector<8x16x128xbf16>
    %52 = vector.shape_cast %49 : vector<8x16x128xbf16> to vector<1x1x8x16x128xbf16>
    tpu.vector_store %arg6[%c0_71, %c0_72, %c0_73, %c0_74, %c0_75], %52 {strides = array<i32>} : memref<1x1x8x16x128xbf16, #tpu.memory_space<vmem>>, vector<1x1x8x16x128xbf16>,
    return
  }
  func.func @transform_0(%arg0: i32, %arg1: i32) -> (i32, i32, i32, i32, i32) {
    %c0_i32 = arith.constant 0 : i32
    %c0_i32_0 = arith.constant 0 : i32
    %c0_i32_1 = arith.constant 0 : i32
    %c0_i32_2 = arith.constant 0 : i32
    return %arg0, %arg1, %c0_i32, %c0_i32_0, %c0_i32_1 : i32, i32, i32, i32, i32
  }
  func.func @transform_1(%arg0: i32, %arg1: i32) -> (i32, i32) {
    %c0_i32 = arith.constant 0 : i32
    %c0_i32_0 = arith.constant 0 : i32
    %c0_i32_1 = arith.constant 0 : i32
    return %c0_i32, %c0_i32_0 : i32, i32
  }
  func.func @transform_2(%arg0: i32, %arg1: i32) -> (i32, i32) {
    %c0_i32 = arith.constant 0 : i32
    %c0_i32_0 = arith.constant 0 : i32
    %c0_i32_1 = arith.constant 0 : i32
    return %c0_i32, %c0_i32_0 : i32, i32
  }
  func.func @transform_3(%arg0: i32, %arg1: i32) -> (i32, i32) {
    %c0_i32 = arith.constant 0 : i32
    %c0_i32_0 = arith.constant 0 : i32
    %c0_i32_1 = arith.constant 0 : i32
    return %c0_i32, %c0_i32_0 : i32, i32
  }
  func.func @transform_4(%arg0: i32, %arg1: i32) -> (i32, i32, i32, i32, i32) {
    %c0_i32 = arith.constant 0 : i32
    %c0_i32_0 = arith.constant 0 : i32
    %c0_i32_1 = arith.constant 0 : i32
    %c0_i32_2 = arith.constant 0 : i32
    return %arg0, %arg1, %c0_i32, %c0_i32_0, %c0_i32_1 : i32, i32, i32, i32, i32
  }
  func.func @transform_5(%arg0: i32, %arg1: i32) -> (i32, i32, i32, i32) {
    %c0_i32 = arith.constant 0 : i32
    %c0_i32_0 = arith.constant 0 : i32
    %c0_i32_1 = arith.constant 0 : i32
    return %arg0, %arg1, %c0_i32, %c0_i32_0 : i32, i32, i32, i32
  }
}

module attributes {stable_mosaic.version = 11 : i64} {
  func.func @bn_relu_kernel(%arg0: i32, %arg1: i32, %arg2: memref<1x8x16x128xbf16, #tpu.memory_space<vmem>>, %arg3: memref<1x128xf32, #tpu.memory_space<vmem>>, %arg4: memref<1x128xf32, #tpu.memory_space<vmem>>, %arg5: memref<1x8x16x128xf32, #tpu.memory_space<vmem>>) attributes {dimension_semantics = [#tpu.dimension_semantics<parallel>, #tpu.dimension_semantics<parallel>], iteration_bounds = array<i64: 2, 2>, scalar_prefetch = 0 : i64, scratch_operands = 0 : i64, tpu.core_type = #tpu.core_type<tc>, window_params = [{transform_indices = @transform_0, window_bounds = array<i64: 1, 8, 16, 128>}, {pipeline_mode = #tpu.pipeline_mode<synchronous>, transform_indices = @transform_1, window_bounds = array<i64: 1, 128>}, {pipeline_mode = #tpu.pipeline_mode<synchronous>, transform_indices = @transform_2, window_bounds = array<i64: 1, 128>}, {transform_indices = @transform_3, window_bounds = array<i64: 1, 8, 16, 128>}]} {
    %c0 = arith.constant 0 : index
    %c0_0 = arith.constant 0 : index
    %c0_1 = arith.constant 0 : index
    %c0_2 = arith.constant 0 : index
    %0 = vector.load %arg2[%c0, %c0_0, %c0_1, %c0_2] : memref<1x8x16x128xbf16, #tpu.memory_space<vmem>>, vector<1x8x16x128xbf16>
    %1 = vector.shape_cast %0 : vector<1x8x16x128xbf16> to vector<8x16x128xbf16>
    %2 = arith.extf %1 : vector<8x16x128xbf16> to vector<8x16x128xf32>
    %c0_3 = arith.constant 0 : index
    %c0_4 = arith.constant 0 : index
    %3 = vector.load %arg3[%c0_3, %c0_4] : memref<1x128xf32, #tpu.memory_space<vmem>>, vector<1x128xf32>
    %4 = vector.shape_cast %3 : vector<1x128xf32> to vector<1x1x128xf32>
    %5 = vector.broadcast %4 : vector<1x1x128xf32> to vector<8x16x128xf32>
    %6 = arith.mulf %2, %5 : vector<8x16x128xf32>
    %c0_5 = arith.constant 0 : index
    %c0_6 = arith.constant 0 : index
    %7 = vector.load %arg4[%c0_5, %c0_6] : memref<1x128xf32, #tpu.memory_space<vmem>>, vector<1x128xf32>
    %8 = vector.shape_cast %7 : vector<1x128xf32> to vector<1x1x128xf32>
    %9 = vector.broadcast %8 : vector<1x1x128xf32> to vector<8x16x128xf32>
    %10 = arith.addf %6, %9 : vector<8x16x128xf32>
    %cst = arith.constant 0.000000e+00 : f32
    %11 = vector.broadcast %cst : f32 to vector<8x16x128xf32>
    %12 = arith.maximumf %10, %11 : vector<8x16x128xf32>
    %c0_7 = arith.constant 0 : index
    %c0_8 = arith.constant 0 : index
    %c0_9 = arith.constant 0 : index
    %c0_10 = arith.constant 0 : index
    %13 = vector.load %arg5[%c0_7, %c0_8, %c0_9, %c0_10] : memref<1x8x16x128xf32, #tpu.memory_space<vmem>>, vector<1x8x16x128xf32>
    %14 = vector.shape_cast %13 : vector<1x8x16x128xf32> to vector<8x16x128xf32>
    %15 = vector.shape_cast %12 : vector<8x16x128xf32> to vector<1x8x16x128xf32>
    tpu.vector_store %arg5[%c0_7, %c0_8, %c0_9, %c0_10], %15 {strides = array<i32>} : memref<1x8x16x128xf32, #tpu.memory_space<vmem>>, vector<1x8x16x128xf32>,
    return
  }
  func.func @transform_0(%arg0: i32, %arg1: i32) -> (i32, i32, i32, i32) {
    %c0_i32 = arith.constant 0 : i32
    %c0_i32_0 = arith.constant 0 : i32
    %c0_i32_1 = arith.constant 0 : i32
    return %arg0, %arg1, %c0_i32, %c0_i32_0 : i32, i32, i32, i32
  }
  func.func @transform_1(%arg0: i32, %arg1: i32) -> (i32, i32) {
    %c0_i32 = arith.constant 0 : i32
    %c0_i32_0 = arith.constant 0 : i32
    %c0_i32_1 = arith.constant 0 : i32
    return %c0_i32, %c0_i32_0 : i32, i32
  }
  func.func @transform_2(%arg0: i32, %arg1: i32) -> (i32, i32) {
    %c0_i32 = arith.constant 0 : i32
    %c0_i32_0 = arith.constant 0 : i32
    %c0_i32_1 = arith.constant 0 : i32
    return %c0_i32, %c0_i32_0 : i32, i32
  }
  func.func @transform_3(%arg0: i32, %arg1: i32) -> (i32, i32, i32, i32) {
    %c0_i32 = arith.constant 0 : i32
    %c0_i32_0 = arith.constant 0 : i32
    %c0_i32_1 = arith.constant 0 : i32
    return %arg0, %arg1, %c0_i32, %c0_i32_0 : i32, i32, i32, i32
  }
}

</mosaic_0001>

<llo_original>
// kernel: unet_block.5
$region0: #{unet_block.5}
  #allocation0 [shape = 'u32[]', space=smem, size = 0x4, offset = 0x4, fixed_abs, tag = 'smem constant byte address 0x4 - core index']
  #allocation1 [shape = 'u32[144,128]{1,0:T(1,128)}', space=vmem, size = 0x12000, scoped, tag = 'internal scratch']
  %s0 = inlined_call_operand.vmem [shape: bf16[2,16,16,128], index: 0, kind: input, shape index: {}]
  %s1 = inlined_call_operand.vmem [shape: f32[1,128], index: 1, kind: input, shape index: {}]
  %s2 = inlined_call_operand.vmem [shape: f32[1,128], index: 2, kind: input, shape index: {}]
  %s3 = inlined_call_operand.vmem [shape: f32[2,16,16,128], index: 3, kind: output, shape index: {}]
  %s4 = sld [smem:[#allocation0]]
  $region45: #{unet_block.5} parent=0
    _
  %s6 = ssub.s32 1, %s4
  %s7 = scalar_select 0, %s6, %s4
  loop: start=0, step=1, limit=6
  $region2: #{unet_block.5} parent=0 // loop_pre_header
    _
  $region3: #{unet_block.5} parent=0 // loop_header
    %s9 = sphi 0, %s13
    %p10 = scmp.ge.s32.totalorder %s9, 6
    %s16 = sphi 0, %s28
    %s17 = sphi 0, %s24
    %s18 = sphi 0, %s16
    %s19 = sphi 0, %s17
    %s20 = sphi 0, %s18
    %s21 = sphi 0, %s19
    %s33 = sphi 0, %s35
    %s36 = sphi 0, %s33
    %s37 = sphi 0, %s36
    %s53 = sphi 0, %s37
    %s57 = sphi 0, %s57
    %s59 = sphi 0, %s57
    %s60 = sphi 0, %s59
    %s74 = sphi 0, %s60
    %s78 = sphi 0, %s78
    %s80 = sphi 0, %s78
    %s81 = sphi 0, %s80
    %s95 = sphi 0, %s81
    %s103 = sphi 0, %s105
    %s106 = sphi 0, %s103
    %s107 = sphi 0, %s106
    %s123 = sphi 0, %s107
  $region4: #{unet_block.5} parent=0 // loop_header_branch
    %12 = sbr.rel (%p10) target = $region8
  $region5: #{unet_block.5} parent=0 // loop_body
    %s14 = ssub.s32 %s9, 1
    %s15 = ssub.s32 %s9, 2
    %s22 = sadd.s32 1, %s17
    %p23 = scmp.ge.s32.totalorder %s22, 2
    %s24 = scalar_select %p23, 0, %s22
    %s25 = sadd.s32 1, %s16
    %s26 = scalar_select %p23, %s25, %s16
    %p27 = scmp.ge.s32.totalorder %s26, 2
    %s28 = scalar_select %p27, 0, %s26
    %s29 = ssub.s32 %s16, %s28
    %s30 = ssub.s32 %s17, %s24
    %s31 = sor.u32 %s29, %s30
    %p32 = scmp.eq.s32.totalorder %s31, 0
    %s34 = sadd.s32 %s33, 1
    %s35 = scalar_select %p32, %s33, %s34
    %p38 = pneg %p32
    %p39 = scmp.eq.s32.totalorder %s9, 3
    %p40 = por %p38, %p39
    %p41 = scmp.ne.s32.totalorder %s33, %s36
    %p42 = scmp.eq.s32.totalorder %s9, 0
    %p43 = por %p41, %p42
    %p44 = scmp.ne.s32.totalorder %s33, %s36
    %p45 = scmp.eq.s32.totalorder %s14, 3
    %p46 = por %p44, %p45
    %p47 = scmp.ne.s32.totalorder %s36, %s37
    %p48 = scmp.eq.s32.totalorder %s14, 0
    %p49 = por %p47, %p48
    %p50 = scmp.ne.s32.totalorder %s36, %s37
    %p51 = scmp.eq.s32.totalorder %s15, 3
    %p52 = por %p50, %p51
    %p54 = scmp.ne.s32.totalorder %s37, %s53
    %p55 = scmp.eq.s32.totalorder %s15, 0
    %p56 = por %p54, %p55
    %s58 = sadd.s32 %s57, 1
    %p61 = scmp.eq.s32.totalorder %s9, 3
    %p62 = scmp.ne.s32.totalorder %s57, %s59
    %p63 = scmp.eq.s32.totalorder %s9, 0
    %p64 = por %p62, %p63
    %p65 = scmp.ne.s32.totalorder %s57, %s59
    %p66 = scmp.eq.s32.totalorder %s14, 3
    %p67 = por %p65, %p66
    %p68 = scmp.ne.s32.totalorder %s59, %s60
    %p69 = scmp.eq.s32.totalorder %s14, 0
    %p70 = por %p68, %p69
    %p71 = scmp.ne.s32.totalorder %s59, %s60
    %p72 = scmp.eq.s32.totalorder %s15, 3
    %p73 = por %p71, %p72
    %p75 = scmp.ne.s32.totalorder %s60, %s74
    %p76 = scmp.eq.s32.totalorder %s15, 0
    %p77 = por %p75, %p76
    %s79 = sadd.s32 %s78, 1
    %p82 = scmp.eq.s32.totalorder %s9, 3
    %p83 = scmp.ne.s32.totalorder %s78, %s80
    %p84 = scmp.eq.s32.totalorder %s9, 0
    %p85 = por %p83, %p84
    %p86 = scmp.ne.s32.totalorder %s78, %s80
    %p87 = scmp.eq.s32.totalorder %s14, 3
    %p88 = por %p86, %p87
    %p89 = scmp.ne.s32.totalorder %s80, %s81
    %p90 = scmp.eq.s32.totalorder %s14, 0
    %p91 = por %p89, %p90
    %p92 = scmp.ne.s32.totalorder %s80, %s81
    %p93 = scmp.eq.s32.totalorder %s15, 3
    %p94 = por %p92, %p93
    %p96 = scmp.ne.s32.totalorder %s81, %s95
    %p97 = scmp.eq.s32.totalorder %s15, 0
    %p98 = por %p96, %p97
    %s99 = ssub.s32 %s16, %s28
    %s100 = ssub.s32 %s17, %s24
    %s101 = sor.u32 %s99, %s100
    %p102 = scmp.eq.s32.totalorder %s101, 0
    %s104 = sadd.s32 %s103, 1
    %s105 = scalar_select %p102, %s103, %s104
    %p108 = pneg %p102
    %p109 = scmp.eq.s32.totalorder %s9, 3
    %p110 = por %p108, %p109
    %p111 = scmp.ne.s32.totalorder %s103, %s106
    %p112 = scmp.eq.s32.totalorder %s9, 0
    %p113 = por %p111, %p112
    %p114 = scmp.ne.s32.totalorder %s103, %s106
    %p115 = scmp.eq.s32.totalorder %s14, 3
    %p116 = por %p114, %p115
    %p117 = scmp.ne.s32.totalorder %s106, %s107
    %p118 = scmp.eq.s32.totalorder %s14, 0
    %p119 = por %p117, %p118
    %p120 = scmp.ne.s32.totalorder %s106, %s107
    %p121 = scmp.eq.s32.totalorder %s15, 3
    %p122 = por %p120, %p121
    %p124 = scmp.ne.s32.totalorder %s107, %s123
    %p125 = scmp.eq.s32.totalorder %s15, 0
    %p126 = por %p124, %p125
    %p127 = scmp.le.s32.totalorder 1, %s9
    %p128 = scmp.lt.s32.totalorder %s9, 5
    %p129 = pnand %p127, %p128
    %p130 = pneg %p129
    // Predicated region
    $region9: #{unet_block.5} parent=5 // pred_check
      _
    $region10: #{unet_block.5} parent=5 // pred_check_branch
      %132 = sbr.rel (%p129) target = $region12
    $region11: #{unet_block.5} parent=5 // pred_region
      %s133 = ssub.s32 %s9, 1
      // Predicated region
      $region13: #{unet_block.5} parent=11 // pred_check
        %p134 = pneg %p70
      $region14: #{unet_block.5} parent=11 // pred_check_branch
        %136 = sbr.rel (%p134) target = $region16
      $region15: #{unet_block.5} parent=11 // pred_region
        _
      $region16: #{unet_block.5} parent=11 // pred_fallthru
        _
      // Predicated region
      $region17: #{unet_block.5} parent=11 // pred_check
        %p137 = pneg %p91
      $region18: #{unet_block.5} parent=11 // pred_check_branch
        %139 = sbr.rel (%p137) target = $region20
      $region19: #{unet_block.5} parent=11 // pred_region
        _
      $region20: #{unet_block.5} parent=11 // pred_fallthru
        _
    $region12: #{unet_block.5} parent=5 // pred_fallthru
      _
    %p140 = scmp.lt.s32.totalorder %s9, 4
    // Predicated region
    $region21: #{unet_block.5} parent=5 // pred_check
      %p141 = pneg %p140
    $region22: #{unet_block.5} parent=5 // pred_check_branch
      %143 = sbr.rel (%p141) target = $region24
    $region23: #{unet_block.5} parent=5 // pred_region
      // Predicated region
      $region25: #{unet_block.5} parent=23 // pred_check
        %p144 = pneg %p43
      $region26: #{unet_block.5} parent=23 // pred_check_branch
        %146 = sbr.rel (%p144) target = $region28
      $region27: #{unet_block.5} parent=23 // pred_region
        %s147 = smul.u32 8, %s17
        %p148 = scmp.lt.s32.totalorder %s16, 1
        %s149 = scalar_select %p148, %s16, 1
        %p150 = scmp.lt.s32.totalorder %s147, 15
        %s151 = scalar_select %p150, %s147, 15
        %s152 = smul.addr %s151, 2
        %s153 = smul.addr %s149, 32
        %s154 = sadd.s32 %s152, %s153
        %s155 = smul.addr %s154, 4
        %s156 = scalar_lea.vmem %s0, %s155
        %s157 = smul.u32 8, %s17
      $region28: #{unet_block.5} parent=23 // pred_fallthru
        _
    $region24: #{unet_block.5} parent=5 // pred_fallthru
      _
    %p158 = scmp.le.s32.totalorder 1, %s9
    %p159 = scmp.lt.s32.totalorder %s9, 5
    %p160 = pnand %p158, %p159
    %p161 = pneg %p160
    // Predicated region
    $region29: #{unet_block.5} parent=5 // pred_check
      _
    $region30: #{unet_block.5} parent=5 // pred_check_branch
      %163 = sbr.rel (%p160) target = $region32
    $region31: #{unet_block.5} parent=5 // pred_region
      %s164 = ssub.s32 %s9, 1
      %s165 = smul.u32 8, %s19
      %p166 = scmp.lt.s32.totalorder %s18, 1
      %s167 = scalar_select %p166, %s18, 1
      %p168 = scmp.lt.s32.totalorder %s165, 15
      %s169 = scalar_select %p168, %s165, 15
      %s170 = smul.addr %s169, 2
      %s171 = smul.addr %s167, 32
      %s172 = sadd.s32 %s170, %s171
      %s173 = smul.addr %s172, 4
      %s174 = scalar_lea.vmem %s0, %s173
      %p175 = pneg %p49
      %p176 = pneg %p46
      %p177 = pneg %p70
      %p178 = pneg %p67
      %p179 = pneg %p91
      %p180 = pneg %p88
      %p181 = pneg %p119
      %p182 = pneg %p116
      %s183 = smul.u32 8, %s19
      %p184 = scmp.lt.s32.totalorder %s18, 1
      %s185 = scalar_select %p184, %s18, 1
      %p186 = scmp.lt.s32.totalorder %s183, 15
      %s187 = scalar_select %p186, %s183, 15
      %s188 = smul.addr %s187, 2
      %s189 = smul.addr %s185, 32
      %s190 = sadd.s32 %s188, %s189
      %s191 = smul.addr %s190, 8
      %s192 = scalar_lea.vmem %s3, %s191
      %s193 = smul.u32 8, %s19
      %p194 = scmp.lt.s32.totalorder %s18, 1
      %s195 = scalar_select %p194, %s18, 1
      %p196 = scmp.lt.s32.totalorder %s193, 15
      %s197 = scalar_select %p196, %s193, 15
      %s198 = smul.addr %s197, 2
      %s199 = smul.addr %s195, 32
      %s200 = sadd.s32 %s198, %s199
      %s201 = smul.addr %s200, 4
      %s202 = scalar_lea.vmem %s0, %s201
      %s203 = smul.u32 8, %s19
      %s204 = smul.u32 8, %s19
      %p205 = scmp.lt.s32.totalorder %s18, 1
      %s206 = scalar_select %p205, %s18, 1
      %p207 = scmp.lt.s32.totalorder %s204, 15
      %s208 = scalar_select %p207, %s204, 15
      %s209 = smul.addr %s208, 2
      %s210 = smul.addr %s206, 32
      %s211 = sadd.s32 %s209, %s210
      %s212 = smul.addr %s211, 8
      %s213 = scalar_lea.vmem %s3, %s212
      %s214 = smul.u32 8, %s19
      %v215 = vld [vmem:[%s202] sm:$0xf]
      %v216 = vld [vmem:[%s202 + $0x4] sm:$0xf]
      %v217 = vld [vmem:[%s202 + $0x8] sm:$0xf]
      %v218 = vld [vmem:[%s202 + $0xc] sm:$0xf]
      %v219 = vld [vmem:[%s202 + $0x10] sm:$0xf]
      %v220 = vld [vmem:[%s202 + $0x14] sm:$0xf]
      %v221 = vld [vmem:[%s202 + $0x18] sm:$0xf]
      %v222 = vld [vmem:[%s202 + $0x1c] sm:$0xf]
      %v223 = vld [vmem:[%s202 + $0x20] sm:$0xf]
      %v224 = vld [vmem:[%s202 + $0x24] sm:$0xf]
      %v225 = vld [vmem:[%s202 + $0x28] sm:$0xf]
      %v226 = vld [vmem:[%s202 + $0x2c] sm:$0xf]
      %v227 = vld [vmem:[%s202 + $0x30] sm:$0xf]
      %v228 = vld [vmem:[%s202 + $0x34] sm:$0xf]
      %v229 = vld [vmem:[%s202 + $0x38] sm:$0xf]
      %v230 = vld [vmem:[%s202 + $0x3c] sm:$0xf]
      %v231 = vunpack.c.l.bf16 %v215
      %v232 = vunpack.c.l.bf16 %v216
      %v233 = vunpack.c.l.bf16 %v217
      %v234 = vunpack.c.l.bf16 %v218
      %v235 = vunpack.c.l.bf16 %v219
      %v236 = vunpack.c.l.bf16 %v220
      %v237 = vunpack.c.l.bf16 %v221
      %v238 = vunpack.c.l.bf16 %v222
      %v239 = vunpack.c.l.bf16 %v223
      %v240 = vunpack.c.l.bf16 %v224
      %v241 = vunpack.c.l.bf16 %v225
      %v242 = vunpack.c.l.bf16 %v226
      %v243 = vunpack.c.l.bf16 %v227
      %v244 = vunpack.c.l.bf16 %v228
      %v245 = vunpack.c.l.bf16 %v229
      %v246 = vunpack.c.l.bf16 %v230
      %v247 = vld [vmem:[%s1] sm:$0x1]
      %v249 = vlaneseq
      %v250 = vshrl.u32 %v249, 7
      %v251 = vsub.s32 0, %v250
      %v252 = vrot.slane %v247, %v251
      %v254 = vmul.f32 %v231, %v252
      %v255 = vmul.f32 %v232, %v252
      %v256 = vmul.f32 %v233, %v252
      %v257 = vmul.f32 %v234, %v252
      %v258 = vmul.f32 %v235, %v252
      %v259 = vmul.f32 %v236, %v252
      %v260 = vmul.f32 %v237, %v252
      %v261 = vmul.f32 %v238, %v252
      %v262 = vmul.f32 %v239, %v252
      %v263 = vmul.f32 %v240, %v252
      %v264 = vmul.f32 %v241, %v252
      %v265 = vmul.f32 %v242, %v252
      %v266 = vmul.f32 %v243, %v252
      %v267 = vmul.f32 %v244, %v252
      %v268 = vmul.f32 %v245, %v252
      %v269 = vmul.f32 %v246, %v252
      %v270 = vld [vmem:[%s2] sm:$0x1]
      %v272 = vlaneseq
      %v273 = vshrl.u32 %v272, 7
      %v274 = vsub.s32 0, %v273
      %v275 = vrot.slane %v270, %v274
      %v277 = vadd.f32 %v254, %v275
      %v278 = vadd.f32 %v255, %v275
      %v279 = vadd.f32 %v256, %v275
      %v280 = vadd.f32 %v257, %v275
      %v281 = vadd.f32 %v258, %v275
      %v282 = vadd.f32 %v259, %v275
      %v283 = vadd.f32 %v260, %v275
      %v284 = vadd.f32 %v261, %v275
      %v285 = vadd.f32 %v262, %v275
      %v286 = vadd.f32 %v263, %v275
      %v287 = vadd.f32 %v264, %v275
      %v288 = vadd.f32 %v265, %v275
      %v289 = vadd.f32 %v266, %v275
      %v290 = vadd.f32 %v267, %v275
      %v291 = vadd.f32 %v268, %v275
      %v292 = vadd.f32 %v269, %v275
      %v293 = vmax.f32 %v277, 0.0
      %v294 = vmax.f32 %v278, 0.0
      %v295 = vmax.f32 %v279, 0.0
      %v296 = vmax.f32 %v280, 0.0
      %v297 = vmax.f32 %v281, 0.0
      %v298 = vmax.f32 %v282, 0.0
      %v299 = vmax.f32 %v283, 0.0
      %v300 = vmax.f32 %v284, 0.0
      %v301 = vmax.f32 %v285, 0.0
      %v302 = vmax.f32 %v286, 0.0
      %v303 = vmax.f32 %v287, 0.0
      %v304 = vmax.f32 %v288, 0.0
      %v305 = vmax.f32 %v289, 0.0
      %v306 = vmax.f32 %v290, 0.0
      %v307 = vmax.f32 %v291, 0.0
      %v308 = vmax.f32 %v292, 0.0
      %309 = vst [vmem:[%s213] sm:$0xff] %v293
      %310 = vst [vmem:[%s213 + $0x8] sm:$0xff] %v294
      %311 = vst [vmem:[%s213 + $0x10] sm:$0xff] %v295
      %312 = vst [vmem:[%s213 + $0x18] sm:$0xff] %v296
      %313 = vst [vmem:[%s213 + $0x20] sm:$0xff] %v297
      %314 = vst [vmem:[%s213 + $0x28] sm:$0xff] %v298
      %315 = vst [vmem:[%s213 + $0x30] sm:$0xff] %v299
      %316 = vst [vmem:[%s213 + $0x38] sm:$0xff] %v300
      %317 = vst [vmem:[%s213 + $0x40] sm:$0xff] %v301
      %318 = vst [vmem:[%s213 + $0x48] sm:$0xff] %v302
      %319 = vst [vmem:[%s213 + $0x50] sm:$0xff] %v303
      %320 = vst [vmem:[%s213 + $0x58] sm:$0xff] %v304
      %321 = vst [vmem:[%s213 + $0x60] sm:$0xff] %v305
      %322 = vst [vmem:[%s213 + $0x68] sm:$0xff] %v306
      %323 = vst [vmem:[%s213 + $0x70] sm:$0xff] %v307
      %324 = vst [vmem:[%s213 + $0x78] sm:$0xff] %v308
      %s325 = smul.u32 8, %s19
      %p326 = scmp.lt.s32.totalorder %s18, 1
      %s327 = scalar_select %p326, %s18, 1
      %p328 = scmp.lt.s32.totalorder %s325, 15
      %s329 = scalar_select %p328, %s325, 15
      %s330 = smul.addr %s329, 2
      %s331 = smul.addr %s327, 32
      %s332 = sadd.s32 %s330, %s331
      %s333 = smul.addr %s332, 8
      %s334 = scalar_lea.vmem %s3, %s333
      // Predicated region
      $region33: #{unet_block.5} parent=31 // pred_check
        %p335 = pneg %p116
      $region34: #{unet_block.5} parent=31 // pred_check_branch
        %337 = sbr.rel (%p335) target = $region36
      $region35: #{unet_block.5} parent=31 // pred_region
        %s338 = smul.u32 8, %s19
      $region36: #{unet_block.5} parent=31 // pred_fallthru
        _
    $region32: #{unet_block.5} parent=5 // pred_fallthru
      _
    %p339 = scmp.le.s32.totalorder 2, %s9
    // Predicated region
    $region37: #{unet_block.5} parent=5 // pred_check
      %p340 = pneg %p339
    $region38: #{unet_block.5} parent=5 // pred_check_branch
      %342 = sbr.rel (%p340) target = $region40
    $region39: #{unet_block.5} parent=5 // pred_region
      %s343 = ssub.s32 %s9, 2
      // Predicated region
      $region41: #{unet_block.5} parent=39 // pred_check
        %p344 = pneg %p122
      $region42: #{unet_block.5} parent=39 // pred_check_branch
        %346 = sbr.rel (%p344) target = $region44
      $region43: #{unet_block.5} parent=39 // pred_region
        %s347 = smul.u32 8, %s21
        %p348 = scmp.lt.s32.totalorder %s20, 1
        %s349 = scalar_select %p348, %s20, 1
        %p350 = scmp.lt.s32.totalorder %s347, 15
        %s351 = scalar_select %p350, %s347, 15
        %s352 = smul.addr %s351, 2
        %s353 = smul.addr %s349, 32
        %s354 = sadd.s32 %s352, %s353
        %s355 = smul.addr %s354, 8
        %s356 = scalar_lea.vmem %s3, %s355
      $region44: #{unet_block.5} parent=39 // pred_fallthru
        _
    $region40: #{unet_block.5} parent=5 // pred_fallthru
      _
  $region6: #{unet_block.5} parent=0 // loop_footer
    %s13 = sadd.s32 1, %s9
  $region7: #{unet_block.5} parent=0 // loop_footer_branch
    %8 = sbr.rel target = $region3
  $region8: #{unet_block.5} parent=0 // loop_exit
    _

// kernel: unet_block.3
$region0: #{unet_block.3}
  #allocation0 [shape = 'u32[]', space=smem, size = 0x4, offset = 0x4, fixed_abs, tag = 'smem constant byte address 0x4 - core index']
  #allocation1 [shape = 'u32[144,128]{1,0:T(1,128)}', space=vmem, size = 0x12000, scoped, tag = 'internal scratch']
  #allocation2 [shape = 'bf16[8,16,1152]{2,1,0:T(16,128)(2,1)}', space=vmem, size = 0x48000, scoped, tag = 'scratch operand']
  %s0 = inlined_call_operand.vmem [shape: bf16[2,2,10,18,128], index: 0, kind: input, shape index: {}]
  %s1 = inlined_call_operand.vmem [shape: bf16[1152,128], index: 1, kind: input, shape index: {}]
  %s2 = inlined_call_operand.vmem [shape: bf16[2,2,8,16,128], index: 2, kind: output, shape index: {0}]
  %s3 = inlined_call_operand.vmem [shape: f32[2,2,2,128], index: 3, kind: output, shape index: {1}]
  %4 = xla_tuple %s2, %s3
  %s5 = sld [smem:[#allocation0]]
  $region49: #{unet_block.3} parent=0
    _
  %s7 = ssub.s32 1, %s5
  %s8 = scalar_select 0, %s7, %s5
  loop: start=0, step=1, limit=6
  $region2: #{unet_block.3} parent=0 // loop_pre_header
    _
  $region3: #{unet_block.3} parent=0 // loop_header
    %s10 = sphi 0, %s14
    %p11 = scmp.ge.s32.totalorder %s10, 6
    %s17 = sphi 0, %s29
    %s18 = sphi 0, %s25
    %s19 = sphi 0, %s17
    %s20 = sphi 0, %s18
    %s21 = sphi 0, %s19
    %s22 = sphi 0, %s20
    %s34 = sphi 0, %s36
    %s37 = sphi 0, %s34
    %s38 = sphi 0, %s37
    %s54 = sphi 0, %s38
    %s58 = sphi 0, %s58
    %s60 = sphi 0, %s58
    %s61 = sphi 0, %s60
    %s75 = sphi 0, %s61
    %s83 = sphi 0, %s85
    %s86 = sphi 0, %s83
    %s87 = sphi 0, %s86
    %s103 = sphi 0, %s87
    %s111 = sphi 0, %s113
    %s114 = sphi 0, %s111
    %s115 = sphi 0, %s114
    %s131 = sphi 0, %s115
  $region4: #{unet_block.3} parent=0 // loop_header_branch
    %13 = sbr.rel (%p11) target = $region8
  $region5: #{unet_block.3} parent=0 // loop_body
    %s15 = ssub.s32 %s10, 1
    %s16 = ssub.s32 %s10, 2
    %s23 = sadd.s32 1, %s18
    %p24 = scmp.ge.s32.totalorder %s23, 2
    %s25 = scalar_select %p24, 0, %s23
    %s26 = sadd.s32 1, %s17
    %s27 = scalar_select %p24, %s26, %s17
    %p28 = scmp.ge.s32.totalorder %s27, 2
    %s29 = scalar_select %p28, 0, %s27
    %s30 = ssub.s32 %s17, %s29
    %s31 = ssub.s32 %s18, %s25
    %s32 = sor.u32 %s30, %s31
    %p33 = scmp.eq.s32.totalorder %s32, 0
    %s35 = sadd.s32 %s34, 1
    %s36 = scalar_select %p33, %s34, %s35
    %p39 = pneg %p33
    %p40 = scmp.eq.s32.totalorder %s10, 3
    %p41 = por %p39, %p40
    %p42 = scmp.ne.s32.totalorder %s34, %s37
    %p43 = scmp.eq.s32.totalorder %s10, 0
    %p44 = por %p42, %p43
    %p45 = scmp.ne.s32.totalorder %s34, %s37
    %p46 = scmp.eq.s32.totalorder %s15, 3
    %p47 = por %p45, %p46
    %p48 = scmp.ne.s32.totalorder %s37, %s38
    %p49 = scmp.eq.s32.totalorder %s15, 0
    %p50 = por %p48, %p49
    %p51 = scmp.ne.s32.totalorder %s37, %s38
    %p52 = scmp.eq.s32.totalorder %s16, 3
    %p53 = por %p51, %p52
    %p55 = scmp.ne.s32.totalorder %s38, %s54
    %p56 = scmp.eq.s32.totalorder %s16, 0
    %p57 = por %p55, %p56
    %s59 = sadd.s32 %s58, 1
    %p62 = scmp.eq.s32.totalorder %s10, 3
    %p63 = scmp.ne.s32.totalorder %s58, %s60
    %p64 = scmp.eq.s32.totalorder %s10, 0
    %p65 = por %p63, %p64
    %p66 = scmp.ne.s32.totalorder %s58, %s60
    %p67 = scmp.eq.s32.totalorder %s15, 3
    %p68 = por %p66, %p67
    %p69 = scmp.ne.s32.totalorder %s60, %s61
    %p70 = scmp.eq.s32.totalorder %s15, 0
    %p71 = por %p69, %p70
    %p72 = scmp.ne.s32.totalorder %s60, %s61
    %p73 = scmp.eq.s32.totalorder %s16, 3
    %p74 = por %p72, %p73
    %p76 = scmp.ne.s32.totalorder %s61, %s75
    %p77 = scmp.eq.s32.totalorder %s16, 0
    %p78 = por %p76, %p77
    %s79 = ssub.s32 %s17, %s29
    %s80 = ssub.s32 %s18, %s25
    %s81 = sor.u32 %s79, %s80
    %p82 = scmp.eq.s32.totalorder %s81, 0
    %s84 = sadd.s32 %s83, 1
    %s85 = scalar_select %p82, %s83, %s84
    %p88 = pneg %p82
    %p89 = scmp.eq.s32.totalorder %s10, 3
    %p90 = por %p88, %p89
    %p91 = scmp.ne.s32.totalorder %s83, %s86
    %p92 = scmp.eq.s32.totalorder %s10, 0
    %p93 = por %p91, %p92
    %p94 = scmp.ne.s32.totalorder %s83, %s86
    %p95 = scmp.eq.s32.totalorder %s15, 3
    %p96 = por %p94, %p95
    %p97 = scmp.ne.s32.totalorder %s86, %s87
    %p98 = scmp.eq.s32.totalorder %s15, 0
    %p99 = por %p97, %p98
    %p100 = scmp.ne.s32.totalorder %s86, %s87
    %p101 = scmp.eq.s32.totalorder %s16, 3
    %p102 = por %p100, %p101
    %p104 = scmp.ne.s32.totalorder %s87, %s103
    %p105 = scmp.eq.s32.totalorder %s16, 0
    %p106 = por %p104, %p105
    %s107 = ssub.s32 %s17, %s29
    %s108 = ssub.s32 %s18, %s25
    %s109 = sor.u32 %s107, %s108
    %p110 = scmp.eq.s32.totalorder %s109, 0
    %s112 = sadd.s32 %s111, 1
    %s113 = scalar_select %p110, %s111, %s112
    %p116 = pneg %p110
    %p117 = scmp.eq.s32.totalorder %s10, 3
    %p118 = por %p116, %p117
    %p119 = scmp.ne.s32.totalorder %s111, %s114
    %p120 = scmp.eq.s32.totalorder %s10, 0
    %p121 = por %p119, %p120
    %p122 = scmp.ne.s32.totalorder %s111, %s114
    %p123 = scmp.eq.s32.totalorder %s15, 3
    %p124 = por %p122, %p123
    %p125 = scmp.ne.s32.totalorder %s114, %s115
    %p126 = scmp.eq.s32.totalorder %s15, 0
    %p127 = por %p125, %p126
    %p128 = scmp.ne.s32.totalorder %s114, %s115
    %p129 = scmp.eq.s32.totalorder %s16, 3
    %p130 = por %p128, %p129
    %p132 = scmp.ne.s32.totalorder %s115, %s131
    %p133 = scmp.eq.s32.totalorder %s16, 0
    %p134 = por %p132, %p133
    %p135 = scmp.le.s32.totalorder 1, %s10
    %p136 = scmp.lt.s32.totalorder %s10, 5
    %p137 = pnand %p135, %p136
    %p138 = pneg %p137
    // Predicated region
    $region9: #{unet_block.3} parent=5 // pred_check
      _
    $region10: #{unet_block.3} parent=5 // pred_check_branch
      %140 = sbr.rel (%p137) target = $region12
    $region11: #{unet_block.3} parent=5 // pred_region
      %s141 = ssub.s32 %s10, 1
      // Predicated region
      $region13: #{unet_block.3} parent=11 // pred_check
        %p142 = pneg %p71
      $region14: #{unet_block.3} parent=11 // pred_check_branch
        %144 = sbr.rel (%p142) target = $region16
      $region15: #{unet_block.3} parent=11 // pred_region
        _
      $region16: #{unet_block.3} parent=11 // pred_fallthru
        _
    $region12: #{unet_block.3} parent=5 // pred_fallthru
      _
    %p145 = scmp.lt.s32.totalorder %s10, 4
    // Predicated region
    $region17: #{unet_block.3} parent=5 // pred_check
      %p146 = pneg %p145
    $region18: #{unet_block.3} parent=5 // pred_check_branch
      %148 = sbr.rel (%p146) target = $region20
    $region19: #{unet_block.3} parent=5 // pred_region
      // Predicated region
      $region21: #{unet_block.3} parent=19 // pred_check
        %p149 = pneg %p44
      $region22: #{unet_block.3} parent=19 // pred_check_branch
        %151 = sbr.rel (%p149) target = $region24
      $region23: #{unet_block.3} parent=19 // pred_region
        %p152 = scmp.lt.s32.totalorder %s17, 1
        %s153 = scalar_select %p152, %s17, 1
        %p154 = scmp.lt.s32.totalorder %s18, 1
        %s155 = scalar_select %p154, %s18, 1
        %s156 = smul.addr %s155, 30
        %s157 = smul.addr %s153, 60
        %s158 = sadd.s32 %s156, %s157
        %s159 = smul.addr %s158, 4
        %s160 = scalar_lea.vmem %s0, %s159
      $region24: #{unet_block.3} parent=19 // pred_fallthru
        _
    $region20: #{unet_block.3} parent=5 // pred_fallthru
      _
    %p161 = scmp.le.s32.totalorder 1, %s10
    %p162 = scmp.lt.s32.totalorder %s10, 5
    %p163 = pnand %p161, %p162
    %p164 = pneg %p163
    // Predicated region
    $region25: #{unet_block.3} parent=5 // pred_check
      _
    $region26: #{unet_block.3} parent=5 // pred_check_branch
      %166 = sbr.rel (%p163) target = $region28
    $region27: #{unet_block.3} parent=5 // pred_region
      %s167 = ssub.s32 %s10, 1
      %p168 = scmp.lt.s32.totalorder %s19, 1
      %s169 = scalar_select %p168, %s19, 1
      %p170 = scmp.lt.s32.totalorder %s20, 1
      %s171 = scalar_select %p170, %s20, 1
      %s172 = smul.addr %s171, 30
      %s173 = smul.addr %s169, 60
      %s174 = sadd.s32 %s172, %s173
      %s175 = smul.addr %s174, 4
      %s176 = scalar_lea.vmem %s0, %s175
      %p177 = pneg %p50
      %p178 = pneg %p47
      %p179 = pneg %p71
      %p180 = pneg %p68
      %p181 = pneg %p99
      %p182 = pneg %p96
      %p183 = scmp.lt.s32.totalorder %s19, 1
      %s184 = scalar_select %p183, %s19, 1
      %p185 = scmp.lt.s32.totalorder %s20, 1
      %s186 = scalar_select %p185, %s20, 1
      %s187 = smul.addr %s186, 16
      %s188 = smul.addr %s184, 32
      %s189 = sadd.s32 %s187, %s188
      %s190 = smul.addr %s189, 4
      %s191 = scalar_lea.vmem %s2, %s190
      %p192 = pneg %p127
      %p193 = pneg %p124
      %p194 = scmp.lt.s32.totalorder %s19, 1
      %s195 = scalar_select %p194, %s19, 1
      %p196 = scmp.lt.s32.totalorder %s20, 1
      %s197 = scalar_select %p196, %s20, 1
      %s198 = smul.addr %s195, 2
      %s199 = sadd.s32 %s197, %s198
      %s200 = smul.addr %s199, 2
      %s201 = scalar_lea.vmem %s3, %s200
      %p202 = scmp.lt.s32.totalorder %s19, 1
      %s203 = scalar_select %p202, %s19, 1
      %p204 = scmp.lt.s32.totalorder %s20, 1
      %s205 = scalar_select %p204, %s20, 1
      %s206 = smul.addr %s205, 30
      %s207 = smul.addr %s203, 60
      %s208 = sadd.s32 %s206, %s207
      %s209 = smul.addr %s208, 4
      %s210 = scalar_lea.vmem %s0, %s209
      %p211 = scmp.lt.s32.totalorder %s19, 1
      %s212 = scalar_select %p211, %s19, 1
      %p213 = scmp.lt.s32.totalorder %s20, 1
      %s214 = scalar_select %p213, %s20, 1
      %s215 = smul.addr %s214, 16
      %s216 = smul.addr %s212, 32
      %s217 = sadd.s32 %s215, %s216
      %s218 = smul.addr %s217, 4
      %s219 = scalar_lea.vmem %s2, %s218
      %p220 = scmp.lt.s32.totalorder %s19, 1
      %s221 = scalar_select %p220, %s19, 1
      %p222 = scmp.lt.s32.totalorder %s20, 1
      %s223 = scalar_select %p222, %s20, 1
      %s224 = smul.addr %s221, 2
      %s225 = sadd.s32 %s223, %s224
      %s226 = smul.addr %s225, 2
      %s227 = scalar_lea.vmem %s3, %s226
      %v229 = vld [vmem:[%s210] sm:$0xf]
      %v230 = vld [vmem:[%s210 + $0x4] sm:$0xf]
      %v231 = vld [vmem:[%s210 + $0xc] sm:$0xf]
      %v232 = vld [vmem:[%s210 + $0x10] sm:$0xf]
      %v233 = vld [vmem:[%s210 + $0x18] sm:$0xf]
      %v234 = vld [vmem:[%s210 + $0x1c] sm:$0xf]
      %v235 = vld [vmem:[%s210 + $0x24] sm:$0xf]
      %v236 = vld [vmem:[%s210 + $0x28] sm:$0xf]
      %v237 = vld [vmem:[%s210 + $0x30] sm:$0xf]
      %v238 = vld [vmem:[%s210 + $0x34] sm:$0xf]
      %v239 = vld [vmem:[%s210 + $0x3c] sm:$0xf]
      %v240 = vld [vmem:[%s210 + $0x40] sm:$0xf]
      %v241 = vld [vmem:[%s210 + $0x48] sm:$0xf]
      %v242 = vld [vmem:[%s210 + $0x4c] sm:$0xf]
      %v243 = vld [vmem:[%s210 + $0x54] sm:$0xf]
      %v244 = vld [vmem:[%s210 + $0x58] sm:$0xf]
      %v261 = vunpack.c.l.b16 %v229
      %v262 = vunpack.c.l.b16 %v230
      %v263 = vunpack.c.l.b16 %v231
      %v264 = vunpack.c.l.b16 %v232
      %v265 = vunpack.c.l.b16 %v233
      %v266 = vunpack.c.l.b16 %v234
      %v267 = vunpack.c.l.b16 %v235
      %v268 = vunpack.c.l.b16 %v236
      %v269 = vunpack.c.l.b16 %v237
      %v270 = vunpack.c.l.b16 %v238
      %v271 = vunpack.c.l.b16 %v239
      %v272 = vunpack.c.l.b16 %v240
      %v273 = vunpack.c.l.b16 %v241
      %v274 = vunpack.c.l.b16 %v242
      %v275 = vunpack.c.l.b16 %v243
      %v276 = vunpack.c.l.b16 %v244
      %v277 = vpack.c.b16 %v262, %v261
      %v278 = vpack.c.b16 %v264, %v263
      %v279 = vpack.c.b16 %v266, %v265
      %v280 = vpack.c.b16 %v268, %v267
      %v281 = vpack.c.b16 %v270, %v269
      %v282 = vpack.c.b16 %v272, %v271
      %v283 = vpack.c.b16 %v274, %v273
      %v284 = vpack.c.b16 %v276, %v275
      %293 = vst [vmem:[#allocation2] sm:$0xff] %v277
      %294 = vst [vmem:[#allocation2 + $0x48] sm:$0xff] %v278
      %295 = vst [vmem:[#allocation2 + $0x90] sm:$0xff] %v279
      %296 = vst [vmem:[#allocation2 + $0xd8] sm:$0xff] %v280
      %297 = vst [vmem:[#allocation2 + $0x120] sm:$0xff] %v281
      %298 = vst [vmem:[#allocation2 + $0x168] sm:$0xff] %v282
      %299 = vst [vmem:[#allocation2 + $0x1b0] sm:$0xff] %v283
      %300 = vst [vmem:[#allocation2 + $0x1f8] sm:$0xff] %v284
      %v301 = vld [vmem:[%s210] sm:$0xf]
      %v302 = vld [vmem:[%s210 + $0x4] sm:$0xf]
      %v303 = vld [vmem:[%s210 + $0x8] sm:$0x1]
      %v304 = vld [vmem:[%s210 + $0xc] sm:$0xf]
      %v305 = vld [vmem:[%s210 + $0x10] sm:$0xf]
      %v306 = vld [vmem:[%s210 + $0x14] sm:$0x1]
      %v307 = vld [vmem:[%s210 + $0x18] sm:$0xf]
      %v308 = vld [vmem:[%s210 + $0x1c] sm:$0xf]
      %v309 = vld [vmem:[%s210 + $0x20] sm:$0x1]
      %v310 = vld [vmem:[%s210 + $0x24] sm:$0xf]
      %v311 = vld [vmem:[%s210 + $0x28] sm:$0xf]
      %v312 = vld [vmem:[%s210 + $0x2c] sm:$0x1]
      %v313 = vld [vmem:[%s210 + $0x30] sm:$0xf]
      %v314 = vld [vmem:[%s210 + $0x34] sm:$0xf]
      %v315 = vld [vmem:[%s210 + $0x38] sm:$0x1]
      %v316 = vld [vmem:[%s210 + $0x3c] sm:$0xf]
      %v317 = vld [vmem:[%s210 + $0x40] sm:$0xf]
      %v318 = vld [vmem:[%s210 + $0x44] sm:$0x1]
      %v319 = vld [vmem:[%s210 + $0x48] sm:$0xf]
      %v320 = vld [vmem:[%s210 + $0x4c] sm:$0xf]
      %v321 = vld [vmem:[%s210 + $0x50] sm:$0x1]
      %v322 = vld [vmem:[%s210 + $0x54] sm:$0xf]
      %v323 = vld [vmem:[%s210 + $0x58] sm:$0xf]
      %v324 = vld [vmem:[%s210 + $0x5c] sm:$0x1]
      %v349 = vunpack.c.l.b16 %v301
      %v350 = vunpack.c.l.b16 %v302
      %v351 = vunpack.c.l.b16 %v303
      %v352 = vunpack.c.l.b16 %v304
      %v353 = vunpack.c.l.b16 %v305
      %v354 = vunpack.c.l.b16 %v306
      %v355 = vunpack.c.l.b16 %v307
      %v356 = vunpack.c.l.b16 %v308
      %v357 = vunpack.c.l.b16 %v309
      %v358 = vunpack.c.l.b16 %v310
      %v359 = vunpack.c.l.b16 %v311
      %v360 = vunpack.c.l.b16 %v312
      %v361 = vunpack.c.l.b16 %v313
      %v362 = vunpack.c.l.b16 %v314
      %v363 = vunpack.c.l.b16 %v315
      %v364 = vunpack.c.l.b16 %v316
      %v365 = vunpack.c.l.b16 %v317
      %v366 = vunpack.c.l.b16 %v318
      %v367 = vunpack.c.l.b16 %v319
      %v368 = vunpack.c.l.b16 %v320
      %v369 = vunpack.c.l.b16 %v321
      %v370 = vunpack.c.l.b16 %v322
      %v371 = vunpack.c.l.b16 %v323
      %v372 = vunpack.c.l.b16 %v324
      %v373 = vpack.c.b16 %v350, %v349
      %v374 = vpack.c.b16 %v351, %v351
      %v375 = vpack.c.b16 %v353, %v352
      %v376 = vpack.c.b16 %v354, %v354
      %v377 = vpack.c.b16 %v356, %v355
      %v378 = vpack.c.b16 %v357, %v357
      %v379 = vpack.c.b16 %v359, %v358
      %v380 = vpack.c.b16 %v360, %v360
      %v381 = vpack.c.b16 %v362, %v361
      %v382 = vpack.c.b16 %v363, %v363
      %v383 = vpack.c.b16 %v365, %v364
      %v384 = vpack.c.b16 %v366, %v366
      %v385 = vpack.c.b16 %v368, %v367
      %v386 = vpack.c.b16 %v369, %v369
      %v387 = vpack.c.b16 %v371, %v370
      %v388 = vpack.c.b16 %v372, %v372
      %vm389 = vsmask.f32 7424
      %v391 = vshrl.u32 %v373, 16
      %v393 = vshll.u32 %v373, 16
      %v395 = vrot.slane %v393, 1
      %v396 = vor.u32 %v391, %v395
      %v398 = vshll.u32 %v374, 16
      %v400 = vrot.slane %v398, 1
      %v401 = vsel %vm389, %v396, %v400
      %v403 = vshrl.u32 %v375, 16
      %v405 = vshll.u32 %v375, 16
      %v407 = vrot.slane %v405, 1
      %v408 = vor.u32 %v403, %v407
      %v410 = vshll.u32 %v376, 16
      %v412 = vrot.slane %v410, 1
      %v413 = vsel %vm389, %v408, %v412
      %v415 = vshrl.u32 %v377, 16
      %v417 = vshll.u32 %v377, 16
      %v419 = vrot.slane %v417, 1
      %v420 = vor.u32 %v415, %v419
      %v422 = vshll.u32 %v378, 16
      %v424 = vrot.slane %v422, 1
      %v425 = vsel %vm389, %v420, %v424
      %v427 = vshrl.u32 %v379, 16
      %v429 = vshll.u32 %v379, 16
      %v431 = vrot.slane %v429, 1
      %v432 = vor.u32 %v427, %v431
      %v434 = vshll.u32 %v380, 16
      %v436 = vrot.slane %v434, 1
      %v437 = vsel %vm389, %v432, %v436
      %v439 = vshrl.u32 %v381, 16
      %v441 = vshll.u32 %v381, 16
      %v443 = vrot.slane %v441, 1
      %v444 = vor.u32 %v439, %v443
      %v446 = vshll.u32 %v382, 16
      %v448 = vrot.slane %v446, 1
      %v449 = vsel %vm389, %v444, %v448
      %v451 = vshrl.u32 %v383, 16
      %v453 = vshll.u32 %v383, 16
      %v455 = vrot.slane %v453, 1
      %v456 = vor.u32 %v451, %v455
      %v458 = vshll.u32 %v384, 16
      %v460 = vrot.slane %v458, 1
      %v461 = vsel %vm389, %v456, %v460
      %v463 = vshrl.u32 %v385, 16
      %v465 = vshll.u32 %v385, 16
      %v467 = vrot.slane %v465, 1
      %v468 = vor.u32 %v463, %v467
      %v470 = vshll.u32 %v386, 16
      %v472 = vrot.slane %v470, 1
      %v473 = vsel %vm389, %v468, %v472
      %v475 = vshrl.u32 %v387, 16
      %v477 = vshll.u32 %v387, 16
      %v479 = vrot.slane %v477, 1
      %v480 = vor.u32 %v475, %v479
      %v482 = vshll.u32 %v388, 16
      %v484 = vrot.slane %v482, 1
      %v485 = vsel %vm389, %v480, %v484
      %494 = vst [vmem:[#allocation2 + $0x8] sm:$0xff] %v401
      %495 = vst [vmem:[#allocation2 + $0x50] sm:$0xff] %v413
      %496 = vst [vmem:[#allocation2 + $0x98] sm:$0xff] %v425
      %497 = vst [vmem:[#allocation2 + $0xe0] sm:$0xff] %v437
      %498 = vst [vmem:[#allocation2 + $0x128] sm:$0xff] %v449
      %499 = vst [vmem:[#allocation2 + $0x170] sm:$0xff] %v461
      %500 = vst [vmem:[#allocation2 + $0x1b8] sm:$0xff] %v473
      %501 = vst [vmem:[#allocation2 + $0x200] sm:$0xff] %v485
      %v502 = vld [vmem:[%s210] sm:$0xe]
      %v503 = vld [vmem:[%s210 + $0x4] sm:$0xf]
      %v504 = vld [vmem:[%s210 + $0x8] sm:$0x1]
      %v505 = vld [vmem:[%s210 + $0xc] sm:$0xe]
      %v506 = vld [vmem:[%s210 + $0x10] sm:$0xf]
      %v507 = vld [vmem:[%s210 + $0x14] sm:$0x1]
      %v508 = vld [vmem:[%s210 + $0x18] sm:$0xe]
      %v509 = vld [vmem:[%s210 + $0x1c] sm:$0xf]
      %v510 = vld [vmem:[%s210 + $0x20] sm:$0x1]
      %v511 = vld [vmem:[%s210 + $0x24] sm:$0xe]
      %v512 = vld [vmem:[%s210 + $0x28] sm:$0xf]
      %v513 = vld [vmem:[%s210 + $0x2c] sm:$0x1]
      %v514 = vld [vmem:[%s210 + $0x30] sm:$0xe]
      %v515 = vld [vmem:[%s210 + $0x34] sm:$0xf]
      %v516 = vld [vmem:[%s210 + $0x38] sm:$0x1]
      %v517 = vld [vmem:[%s210 + $0x3c] sm:$0xe]
      %v518 = vld [vmem:[%s210 + $0x40] sm:$0xf]
      %v519 = vld [vmem:[%s210 + $0x44] sm:$0x1]
      %v520 = vld [vmem:[%s210 + $0x48] sm:$0xe]
      %v521 = vld [vmem:[%s210 + $0x4c] sm:$0xf]
      %v522 = vld [vmem:[%s210 + $0x50] sm:$0x1]
      %v523 = vld [vmem:[%s210 + $0x54] sm:$0xe]
      %v524 = vld [vmem:[%s210 + $0x58] sm:$0xf]
      %v525 = vld [vmem:[%s210 + $0x5c] sm:$0x1]
      %v550 = vunpack.c.l.b16 %v502
      %v551 = vunpack.c.l.b16 %v503
      %v552 = vunpack.c.l.b16 %v504
      %v553 = vunpack.c.l.b16 %v505
      %v554 = vunpack.c.l.b16 %v506
      %v555 = vunpack.c.l.b16 %v507
      %v556 = vunpack.c.l.b16 %v508
      %v557 = vunpack.c.l.b16 %v509
      %v558 = vunpack.c.l.b16 %v510
      %v559 = vunpack.c.l.b16 %v511
      %v560 = vunpack.c.l.b16 %v512
      %v561 = vunpack.c.l.b16 %v513
      %v562 = vunpack.c.l.b16 %v514
      %v563 = vunpack.c.l.b16 %v515
      %v564 = vunpack.c.l.b16 %v516
      %v565 = vunpack.c.l.b16 %v517
      %v566 = vunpack.c.l.b16 %v518
      %v567 = vunpack.c.l.b16 %v519
      %v568 = vunpack.c.l.b16 %v520
      %v569 = vunpack.c.l.b16 %v521
      %v570 = vunpack.c.l.b16 %v522
      %v571 = vunpack.c.l.b16 %v523
      %v572 = vunpack.c.l.b16 %v524
      %v573 = vunpack.c.l.b16 %v525
      %v574 = vpack.c.b16 %v551, %v550
      %v575 = vpack.c.b16 %v552, %v552
      %v576 = vpack.c.b16 %v554, %v553
      %v577 = vpack.c.b16 %v555, %v555
      %v578 = vpack.c.b16 %v557, %v556
      %v579 = vpack.c.b16 %v558, %v558
      %v580 = vpack.c.b16 %v560, %v559
      %v581 = vpack.c.b16 %v561, %v561
      %v582 = vpack.c.b16 %v563, %v562
      %v583 = vpack.c.b16 %v564, %v564
      %v584 = vpack.c.b16 %v566, %v565
      %v585 = vpack.c.b16 %v567, %v567
      %v586 = vpack.c.b16 %v569, %v568
      %v587 = vpack.c.b16 %v570, %v570
      %v588 = vpack.c.b16 %v572, %v571
      %v589 = vpack.c.b16 %v573, %v573
      %vm590 = vcmask 1046528
      %v591 = vrot.slane %v574, 1
      %v592 = vrot.slane %v575, 1
      %v593 = vsel %vm590, %v591, %v592
      %v594 = vrot.slane %v576, 1
      %v595 = vrot.slane %v577, 1
      %v596 = vsel %vm590, %v594, %v595
      %v597 = vrot.slane %v578, 1
      %v598 = vrot.slane %v579, 1
      %v599 = vsel %vm590, %v597, %v598
      %v600 = vrot.slane %v580, 1
      %v601 = vrot.slane %v581, 1
      %v602 = vsel %vm590, %v600, %v601
      %v603 = vrot.slane %v582, 1
      %v604 = vrot.slane %v583, 1
      %v605 = vsel %vm590, %v603, %v604
      %v606 = vrot.slane %v584, 1
      %v607 = vrot.slane %v585, 1
      %v608 = vsel %vm590, %v606, %v607
      %v609 = vrot.slane %v586, 1
      %v610 = vrot.slane %v587, 1
      %v611 = vsel %vm590, %v609, %v610
      %v612 = vrot.slane %v588, 1
      %v613 = vrot.slane %v589, 1
      %v614 = vsel %vm590, %v612, %v613
      %623 = vst [vmem:[#allocation2 + $0x10] sm:$0xff] %v593
      %624 = vst [vmem:[#allocation2 + $0x58] sm:$0xff] %v596
      %625 = vst [vmem:[#allocation2 + $0xa0] sm:$0xff] %v599
      %626 = vst [vmem:[#allocation2 + $0xe8] sm:$0xff] %v602
      %627 = vst [vmem:[#allocation2 + $0x130] sm:$0xff] %v605
      %628 = vst [vmem:[#allocation2 + $0x178] sm:$0xff] %v608
      %629 = vst [vmem:[#allocation2 + $0x1c0] sm:$0xff] %v611
      %630 = vst [vmem:[#allocation2 + $0x208] sm:$0xff] %v614
      %s631 = scalar_lea.vmem %s210, 12
      %v632 = vld [vmem:[%s631] sm:$0xf]
      %v633 = vld [vmem:[%s631 + $0x4] sm:$0xf]
      %v634 = vld [vmem:[%s631 + $0xc] sm:$0xf]
      %v635 = vld [vmem:[%s631 + $0x10] sm:$0xf]
      %v636 = vld [vmem:[%s631 + $0x18] sm:$0xf]
      %v637 = vld [vmem:[%s631 + $0x1c] sm:$0xf]
      %v638 = vld [vmem:[%s631 + $0x24] sm:$0xf]
      %v639 = vld [vmem:[%s631 + $0x28] sm:$0xf]
      %v640 = vld [vmem:[%s631 + $0x30] sm:$0xf]
      %v641 = vld [vmem:[%s631 + $0x34] sm:$0xf]
      %v642 = vld [vmem:[%s631 + $0x3c] sm:$0xf]
      %v643 = vld [vmem:[%s631 + $0x40] sm:$0xf]
      %v644 = vld [vmem:[%s631 + $0x48] sm:$0xf]
      %v645 = vld [vmem:[%s631 + $0x4c] sm:$0xf]
      %v646 = vld [vmem:[%s631 + $0x54] sm:$0xf]
      %v647 = vld [vmem:[%s631 + $0x58] sm:$0xf]
      %v664 = vunpack.c.l.b16 %v632
      %v665 = vunpack.c.l.b16 %v633
      %v666 = vunpack.c.l.b16 %v634
      %v667 = vunpack.c.l.b16 %v635
      %v668 = vunpack.c.l.b16 %v636
      %v669 = vunpack.c.l.b16 %v637
      %v670 = vunpack.c.l.b16 %v638
      %v671 = vunpack.c.l.b16 %v639
      %v672 = vunpack.c.l.b16 %v640
      %v673 = vunpack.c.l.b16 %v641
      %v674 = vunpack.c.l.b16 %v642
      %v675 = vunpack.c.l.b16 %v643
      %v676 = vunpack.c.l.b16 %v644
      %v677 = vunpack.c.l.b16 %v645
      %v678 = vunpack.c.l.b16 %v646
      %v679 = vunpack.c.l.b16 %v647
      %v680 = vpack.c.b16 %v665, %v664
      %v681 = vpack.c.b16 %v667, %v666
      %v682 = vpack.c.b16 %v669, %v668
      %v683 = vpack.c.b16 %v671, %v670
      %v684 = vpack.c.b16 %v673, %v672
      %v685 = vpack.c.b16 %v675, %v674
      %v686 = vpack.c.b16 %v677, %v676
      %v687 = vpack.c.b16 %v679, %v678
      %696 = vst [vmem:[#allocation2 + $0x18] sm:$0xff] %v680
      %697 = vst [vmem:[#allocation2 + $0x60] sm:$0xff] %v681
      %698 = vst [vmem:[#allocation2 + $0xa8] sm:$0xff] %v682
      %699 = vst [vmem:[#allocation2 + $0xf0] sm:$0xff] %v683
      %700 = vst [vmem:[#allocation2 + $0x138] sm:$0xff] %v684
      %701 = vst [vmem:[#allocation2 + $0x180] sm:$0xff] %v685
      %702 = vst [vmem:[#allocation2 + $0x1c8] sm:$0xff] %v686
      %703 = vst [vmem:[#allocation2 + $0x210] sm:$0xff] %v687
      %v704 = vld [vmem:[%s631] sm:$0xf]
      %v705 = vld [vmem:[%s631 + $0x4] sm:$0xf]
      %v706 = vld [vmem:[%s631 + $0x8] sm:$0x1]
      %v707 = vld [vmem:[%s631 + $0xc] sm:$0xf]
      %v708 = vld [vmem:[%s631 + $0x10] sm:$0xf]
      %v709 = vld [vmem:[%s631 + $0x14] sm:$0x1]
      %v710 = vld [vmem:[%s631 + $0x18] sm:$0xf]
      %v711 = vld [vmem:[%s631 + $0x1c] sm:$0xf]
      %v712 = vld [vmem:[%s631 + $0x20] sm:$0x1]
      %v713 = vld [vmem:[%s631 + $0x24] sm:$0xf]
      %v714 = vld [vmem:[%s631 + $0x28] sm:$0xf]
      %v715 = vld [vmem:[%s631 + $0x2c] sm:$0x1]
      %v716 = vld [vmem:[%s631 + $0x30] sm:$0xf]
      %v717 = vld [vmem:[%s631 + $0x34] sm:$0xf]
      %v718 = vld [vmem:[%s631 + $0x38] sm:$0x1]
      %v719 = vld [vmem:[%s631 + $0x3c] sm:$0xf]
      %v720 = vld [vmem:[%s631 + $0x40] sm:$0xf]
      %v721 = vld [vmem:[%s631 + $0x44] sm:$0x1]
      %v722 = vld [vmem:[%s631 + $0x48] sm:$0xf]
      %v723 = vld [vmem:[%s631 + $0x4c] sm:$0xf]
      %v724 = vld [vmem:[%s631 + $0x50] sm:$0x1]
      %v725 = vld [vmem:[%s631 + $0x54] sm:$0xf]
      %v726 = vld [vmem:[%s631 + $0x58] sm:$0xf]
      %v727 = vld [vmem:[%s631 + $0x5c] sm:$0x1]
      %v752 = vunpack.c.l.b16 %v704
      %v753 = vunpack.c.l.b16 %v705
      %v754 = vunpack.c.l.b16 %v706
      %v755 = vunpack.c.l.b16 %v707
      %v756 = vunpack.c.l.b16 %v708
      %v757 = vunpack.c.l.b16 %v709
      %v758 = vunpack.c.l.b16 %v710
      %v759 = vunpack.c.l.b16 %v711
      %v760 = vunpack.c.l.b16 %v712
      %v761 = vunpack.c.l.b16 %v713
      %v762 = vunpack.c.l.b16 %v714
      %v763 = vunpack.c.l.b16 %v715
      %v764 = vunpack.c.l.b16 %v716
      %v765 = vunpack.c.l.b16 %v717
      %v766 = vunpack.c.l.b16 %v718
      %v767 = vunpack.c.l.b16 %v719
      %v768 = vunpack.c.l.b16 %v720
      %v769 = vunpack.c.l.b16 %v721
      %v770 = vunpack.c.l.b16 %v722
      %v771 = vunpack.c.l.b16 %v723
      %v772 = vunpack.c.l.b16 %v724
      %v773 = vunpack.c.l.b16 %v725
      %v774 = vunpack.c.l.b16 %v726
      %v775 = vunpack.c.l.b16 %v727
      %v776 = vpack.c.b16 %v753, %v752
      %v777 = vpack.c.b16 %v754, %v754
      %v778 = vpack.c.b16 %v756, %v755
      %v779 = vpack.c.b16 %v757, %v757
      %v780 = vpack.c.b16 %v759, %v758
      %v781 = vpack.c.b16 %v760, %v760
      %v782 = vpack.c.b16 %v762, %v761
      %v783 = vpack.c.b16 %v763, %v763
      %v784 = vpack.c.b16 %v765, %v764
      %v785 = vpack.c.b16 %v766, %v766
      %v786 = vpack.c.b16 %v768, %v767
      %v787 = vpack.c.b16 %v769, %v769
      %v788 = vpack.c.b16 %v771, %v770
      %v789 = vpack.c.b16 %v772, %v772
      %v790 = vpack.c.b16 %v774, %v773
      %v791 = vpack.c.b16 %v775, %v775
      %v793 = vshrl.u32 %v776, 16
      %v795 = vshll.u32 %v776, 16
      %v797 = vrot.slane %v795, 1
      %v798 = vor.u32 %v793, %v797
      %v800 = vshll.u32 %v777, 16
      %v802 = vrot.slane %v800, 1
      %v803 = vsel %vm389, %v798, %v802
      %v805 = vshrl.u32 %v778, 16
      %v807 = vshll.u32 %v778, 16
      %v809 = vrot.slane %v807, 1
      %v810 = vor.u32 %v805, %v809
      %v812 = vshll.u32 %v779, 16
      %v814 = vrot.slane %v812, 1
      %v815 = vsel %vm389, %v810, %v814
      %v817 = vshrl.u32 %v780, 16
      %v819 = vshll.u32 %v780, 16
      %v821 = vrot.slane %v819, 1
      %v822 = vor.u32 %v817, %v821
      %v824 = vshll.u32 %v781, 16
      %v826 = vrot.slane %v824, 1
      %v827 = vsel %vm389, %v822, %v826
      %v829 = vshrl.u32 %v782, 16
      %v831 = vshll.u32 %v782, 16
      %v833 = vrot.slane %v831, 1
      %v834 = vor.u32 %v829, %v833
      %v836 = vshll.u32 %v783, 16
      %v838 = vrot.slane %v836, 1
      %v839 = vsel %vm389, %v834, %v838
      %v841 = vshrl.u32 %v784, 16
      %v843 = vshll.u32 %v784, 16
      %v845 = vrot.slane %v843, 1
      %v846 = vor.u32 %v841, %v845
      %v848 = vshll.u32 %v785, 16
      %v850 = vrot.slane %v848, 1
      %v851 = vsel %vm389, %v846, %v850
      %v853 = vshrl.u32 %v786, 16
      %v855 = vshll.u32 %v786, 16
      %v857 = vrot.slane %v855, 1
      %v858 = vor.u32 %v853, %v857
      %v860 = vshll.u32 %v787, 16
      %v862 = vrot.slane %v860, 1
      %v863 = vsel %vm389, %v858, %v862
      %v865 = vshrl.u32 %v788, 16
      %v867 = vshll.u32 %v788, 16
      %v869 = vrot.slane %v867, 1
      %v870 = vor.u32 %v865, %v869
      %v872 = vshll.u32 %v789, 16
      %v874 = vrot.slane %v872, 1
      %v875 = vsel %vm389, %v870, %v874
      %v877 = vshrl.u32 %v790, 16
      %v879 = vshll.u32 %v790, 16
      %v881 = vrot.slane %v879, 1
      %v882 = vor.u32 %v877, %v881
      %v884 = vshll.u32 %v791, 16
      %v886 = vrot.slane %v884, 1
      %v887 = vsel %vm389, %v882, %v886
      %896 = vst [vmem:[#allocation2 + $0x20] sm:$0xff] %v803
      %897 = vst [vmem:[#allocation2 + $0x68] sm:$0xff] %v815
      %898 = vst [vmem:[#allocation2 + $0xb0] sm:$0xff] %v827
      %899 = vst [vmem:[#allocation2 + $0xf8] sm:$0xff] %v839
      %900 = vst [vmem:[#allocation2 + $0x140] sm:$0xff] %v851
      %901 = vst [vmem:[#allocation2 + $0x188] sm:$0xff] %v863
      %902 = vst [vmem:[#allocation2 + $0x1d0] sm:$0xff] %v875
      %903 = vst [vmem:[#allocation2 + $0x218] sm:$0xff] %v887
      %v904 = vld [vmem:[%s631] sm:$0xe]
      %v905 = vld [vmem:[%s631 + $0x4] sm:$0xf]
      %v906 = vld [vmem:[%s631 + $0x8] sm:$0x1]
      %v907 = vld [vmem:[%s631 + $0xc] sm:$0xe]
      %v908 = vld [vmem:[%s631 + $0x10] sm:$0xf]
      %v909 = vld [vmem:[%s631 + $0x14] sm:$0x1]
      %v910 = vld [vmem:[%s631 + $0x18] sm:$0xe]
      %v911 = vld [vmem:[%s631 + $0x1c] sm:$0xf]
      %v912 = vld [vmem:[%s631 + $0x20] sm:$0x1]
      %v913 = vld [vmem:[%s631 + $0x24] sm:$0xe]
      %v914 = vld [vmem:[%s631 + $0x28] sm:$0xf]
      %v915 = vld [vmem:[%s631 + $0x2c] sm:$0x1]
      %v916 = vld [vmem:[%s631 + $0x30] sm:$0xe]
      %v917 = vld [vmem:[%s631 + $0x34] sm:$0xf]
      %v918 = vld [vmem:[%s631 + $0x38] sm:$0x1]
      %v919 = vld [vmem:[%s631 + $0x3c] sm:$0xe]
      %v920 = vld [vmem:[%s631 + $0x40] sm:$0xf]
      %v921 = vld [vmem:[%s631 + $0x44] sm:$0x1]
      %v922 = vld [vmem:[%s631 + $0x48] sm:$0xe]
      %v923 = vld [vmem:[%s631 + $0x4c] sm:$0xf]
      %v924 = vld [vmem:[%s631 + $0x50] sm:$0x1]
      %v925 = vld [vmem:[%s631 + $0x54] sm:$0xe]
      %v926 = vld [vmem:[%s631 + $0x58] sm:$0xf]
      %v927 = vld [vmem:[%s631 + $0x5c] sm:$0x1]
      %v952 = vunpack.c.l.b16 %v904
      %v953 = vunpack.c.l.b16 %v905
      %v954 = vunpack.c.l.b16 %v906
      %v955 = vunpack.c.l.b16 %v907
      %v956 = vunpack.c.l.b16 %v908
      %v957 = vunpack.c.l.b16 %v909
      %v958 = vunpack.c.l.b16 %v910
      %v959 = vunpack.c.l.b16 %v911
      %v960 = vunpack.c.l.b16 %v912
      %v961 = vunpack.c.l.b16 %v913
      %v962 = vunpack.c.l.b16 %v914
      %v963 = vunpack.c.l.b16 %v915
      %v964 = vunpack.c.l.b16 %v916
      %v965 = vunpack.c.l.b16 %v917
      %v966 = vunpack.c.l.b16 %v918
      %v967 = vunpack.c.l.b16 %v919
      %v968 = vunpack.c.l.b16 %v920
      %v969 = vunpack.c.l.b16 %v921
      %v970 = vunpack.c.l.b16 %v922
      %v971 = vunpack.c.l.b16 %v923
      %v972 = vunpack.c.l.b16 %v924
      %v973 = vunpack.c.l.b16 %v925
      %v974 = vunpack.c.l.b16 %v926
      %v975 = vunpack.c.l.b16 %v927
      %v976 = vpack.c.b16 %v953, %v952
      %v977 = vpack.c.b16 %v954, %v954
      %v978 = vpack.c.b16 %v956, %v955
      %v979 = vpack.c.b16 %v957, %v957
      %v980 = vpack.c.b16 %v959, %v958
      %v981 = vpack.c.b16 %v960, %v960
      %v982 = vpack.c.b16 %v962, %v961
      %v983 = vpack.c.b16 %v963, %v963
      %v984 = vpack.c.b16 %v965, %v964
      %v985 = vpack.c.b16 %v966, %v966
      %v986 = vpack.c.b16 %v968, %v967
      %v987 = vpack.c.b16 %v969, %v969
      %v988 = vpack.c.b16 %v971, %v970
      %v989 = vpack.c.b16 %v972, %v972
      %v990 = vpack.c.b16 %v974, %v973
      %v991 = vpack.c.b16 %v975, %v975
      %v992 = vrot.slane %v976, 1
      %v993 = vrot.slane %v977, 1
      %v994 = vsel %vm590, %v992, %v993
      %v995 = vrot.slane %v978, 1
      %v996 = vrot.slane %v979, 1
      %v997 = vsel %vm590, %v995, %v996
      %v998 = vrot.slane %v980, 1
      %v999 = vrot.slane %v981, 1
      %v1000 = vsel %vm590, %v998, %v999
      %v1001 = vrot.slane %v982, 1
      %v1002 = vrot.slane %v983, 1
      %v1003 = vsel %vm590, %v1001, %v1002
      %v1004 = vrot.slane %v984, 1
      %v1005 = vrot.slane %v985, 1
      %v1006 = vsel %vm590, %v1004, %v1005
      %v1007 = vrot.slane %v986, 1
      %v1008 = vrot.slane %v987, 1
      %v1009 = vsel %vm590, %v1007, %v1008
      %v1010 = vrot.slane %v988, 1
      %v1011 = vrot.slane %v989, 1
      %v1012 = vsel %vm590, %v1010, %v1011
      %v1013 = vrot.slane %v990, 1
      %v1014 = vrot.slane %v991, 1
      %v1015 = vsel %vm590, %v1013, %v1014
      %1024 = vst [vmem:[#allocation2 + $0x28] sm:$0xff] %v994
      %1025 = vst [vmem:[#allocation2 + $0x70] sm:$0xff] %v997
      %1026 = vst [vmem:[#allocation2 + $0xb8] sm:$0xff] %v1000
      %1027 = vst [vmem:[#allocation2 + $0x100] sm:$0xff] %v1003
      %1028 = vst [vmem:[#allocation2 + $0x148] sm:$0xff] %v1006
      %1029 = vst [vmem:[#allocation2 + $0x190] sm:$0xff] %v1009
      %1030 = vst [vmem:[#allocation2 + $0x1d8] sm:$0xff] %v1012
      %1031 = vst [vmem:[#allocation2 + $0x220] sm:$0xff] %v1015
      %s1032 = scalar_lea.vmem %s210, 24
      %v1033 = vld [vmem:[%s1032] sm:$0xf]
      %v1034 = vld [vmem:[%s1032 + $0x4] sm:$0xf]
      %v1035 = vld [vmem:[%s1032 + $0xc] sm:$0xf]
      %v1036 = vld [vmem:[%s1032 + $0x10] sm:$0xf]
      %v1037 = vld [vmem:[%s1032 + $0x18] sm:$0xf]
      %v1038 = vld [vmem:[%s1032 + $0x1c] sm:$0xf]
      %v1039 = vld [vmem:[%s1032 + $0x24] sm:$0xf]
      %v1040 = vld [vmem:[%s1032 + $0x28] sm:$0xf]
      %v1041 = vld [vmem:[%s1032 + $0x30] sm:$0xf]
      %v1042 = vld [vmem:[%s1032 + $0x34] sm:$0xf]
      %v1043 = vld [vmem:[%s1032 + $0x3c] sm:$0xf]
      %v1044 = vld [vmem:[%s1032 + $0x40] sm:$0xf]
      %v1045 = vld [vmem:[%s1032 + $0x48] sm:$0xf]
      %v1046 = vld [vmem:[%s1032 + $0x4c] sm:$0xf]
      %v1047 = vld [vmem:[%s1032 + $0x54] sm:$0xf]
      %v1048 = vld [vmem:[%s1032 + $0x58] sm:$0xf]
      %v1065 = vunpack.c.l.b16 %v1033
      %v1066 = vunpack.c.l.b16 %v1034
      %v1067 = vunpack.c.l.b16 %v1035
      %v1068 = vunpack.c.l.b16 %v1036
      %v1069 = vunpack.c.l.b16 %v1037
      %v1070 = vunpack.c.l.b16 %v1038
      %v1071 = vunpack.c.l.b16 %v1039
      %v1072 = vunpack.c.l.b16 %v1040
      %v1073 = vunpack.c.l.b16 %v1041
      %v1074 = vunpack.c.l.b16 %v1042
      %v1075 = vunpack.c.l.b16 %v1043
      %v1076 = vunpack.c.l.b16 %v1044
      %v1077 = vunpack.c.l.b16 %v1045
      %v1078 = vunpack.c.l.b16 %v1046
      %v1079 = vunpack.c.l.b16 %v1047
      %v1080 = vunpack.c.l.b16 %v1048
      %v1081 = vpack.c.b16 %v1066, %v1065
      %v1082 = vpack.c.b16 %v1068, %v1067
      %v1083 = vpack.c.b16 %v1070, %v1069
      %v1084 = vpack.c.b16 %v1072, %v1071
      %v1085 = vpack.c.b16 %v1074, %v1073
      %v1086 = vpack.c.b16 %v1076, %v1075
      %v1087 = vpack.c.b16 %v1078, %v1077
      %v1088 = vpack.c.b16 %v1080, %v1079
      %1097 = vst [vmem:[#allocation2 + $0x30] sm:$0xff] %v1081
      %1098 = vst [vmem:[#allocation2 + $0x78] sm:$0xff] %v1082
      %1099 = vst [vmem:[#allocation2 + $0xc0] sm:$0xff] %v1083
      %1100 = vst [vmem:[#allocation2 + $0x108] sm:$0xff] %v1084
      %1101 = vst [vmem:[#allocation2 + $0x150] sm:$0xff] %v1085
      %1102 = vst [vmem:[#allocation2 + $0x198] sm:$0xff] %v1086
      %1103 = vst [vmem:[#allocation2 + $0x1e0] sm:$0xff] %v1087
      %1104 = vst [vmem:[#allocation2 + $0x228] sm:$0xff] %v1088
      %v1105 = vld [vmem:[%s1032] sm:$0xf]
      %v1106 = vld [vmem:[%s1032 + $0x4] sm:$0xf]
      %v1107 = vld [vmem:[%s1032 + $0x8] sm:$0x1]
      %v1108 = vld [vmem:[%s1032 + $0xc] sm:$0xf]
      %v1109 = vld [vmem:[%s1032 + $0x10] sm:$0xf]
      %v1110 = vld [vmem:[%s1032 + $0x14] sm:$0x1]
      %v1111 = vld [vmem:[%s1032 + $0x18] sm:$0xf]
      %v1112 = vld [vmem:[%s1032 + $0x1c] sm:$0xf]
      %v1113 = vld [vmem:[%s1032 + $0x20] sm:$0x1]
      %v1114 = vld [vmem:[%s1032 + $0x24] sm:$0xf]
      %v1115 = vld [vmem:[%s1032 + $0x28] sm:$0xf]
      %v1116 = vld [vmem:[%s1032 + $0x2c] sm:$0x1]
      %v1117 = vld [vmem:[%s1032 + $0x30] sm:$0xf]
      %v1118 = vld [vmem:[%s1032 + $0x34] sm:$0xf]
      %v1119 = vld [vmem:[%s1032 + $0x38] sm:$0x1]
      %v1120 = vld [vmem:[%s1032 + $0x3c] sm:$0xf]
      %v1121 = vld [vmem:[%s1032 + $0x40] sm:$0xf]
      %v1122 = vld [vmem:[%s1032 + $0x44] sm:$0x1]
      %v1123 = vld [vmem:[%s1032 + $0x48] sm:$0xf]
      %v1124 = vld [vmem:[%s1032 + $0x4c] sm:$0xf]
      %v1125 = vld [vmem:[%s1032 + $0x50] sm:$0x1]
      %v1126 = vld [vmem:[%s1032 + $0x54] sm:$0xf]
      %v1127 = vld [vmem:[%s1032 + $0x58] sm:$0xf]
      %v1128 = vld [vmem:[%s1032 + $0x5c] sm:$0x1]
      %v1153 = vunpack.c.l.b16 %v1105
      %v1154 = vunpack.c.l.b16 %v1106
      %v1155 = vunpack.c.l.b16 %v1107
      %v1156 = vunpack.c.l.b16 %v1108
      %v1157 = vunpack.c.l.b16 %v1109
      %v1158 = vunpack.c.l.b16 %v1110
      %v1159 = vunpack.c.l.b16 %v1111
      %v1160 = vunpack.c.l.b16 %v1112
      %v1161 = vunpack.c.l.b16 %v1113
      %v1162 = vunpack.c.l.b16 %v1114
      %v1163 = vunpack.c.l.b16 %v1115
      %v1164 = vunpack.c.l.b16 %v1116
      %v1165 = vunpack.c.l.b16 %v1117
      %v1166 = vunpack.c.l.b16 %v1118
      %v1167 = vunpack.c.l.b16 %v1119
      %v1168 = vunpack.c.l.b16 %v1120
      %v1169 = vunpack.c.l.b16 %v1121
      %v1170 = vunpack.c.l.b16 %v1122
      %v1171 = vunpack.c.l.b16 %v1123
      %v1172 = vunpack.c.l.b16 %v1124
      %v1173 = vunpack.c.l.b16 %v1125
      %v1174 = vunpack.c.l.b16 %v1126
      %v1175 = vunpack.c.l.b16 %v1127
      %v1176 = vunpack.c.l.b16 %v1128
      %v1177 = vpack.c.b16 %v1154, %v1153
      %v1178 = vpack.c.b16 %v1155, %v1155
      %v1179 = vpack.c.b16 %v1157, %v1156
      %v1180 = vpack.c.b16 %v1158, %v1158
      %v1181 = vpack.c.b16 %v1160, %v1159
      %v1182 = vpack.c.b16 %v1161, %v1161
      %v1183 = vpack.c.b16 %v1163, %v1162
      %v1184 = vpack.c.b16 %v1164, %v1164
      %v1185 = vpack.c.b16 %v1166, %v1165
      %v1186 = vpack.c.b16 %v1167, %v1167
      %v1187 = vpack.c.b16 %v1169, %v1168
      %v1188 = vpack.c.b16 %v1170, %v1170
      %v1189 = vpack.c.b16 %v1172, %v1171
      %v1190 = vpack.c.b16 %v1173, %v1173
      %v1191 = vpack.c.b16 %v1175, %v1174
      %v1192 = vpack.c.b16 %v1176, %v1176
      %v1194 = vshrl.u32 %v1177, 16
      %v1196 = vshll.u32 %v1177, 16
      %v1198 = vrot.slane %v1196, 1
      %v1199 = vor.u32 %v1194, %v1198
      %v1201 = vshll.u32 %v1178, 16
      %v1203 = vrot.slane %v1201, 1
      %v1204 = vsel %vm389, %v1199, %v1203
      %v1206 = vshrl.u32 %v1179, 16
      %v1208 = vshll.u32 %v1179, 16
      %v1210 = vrot.slane %v1208, 1
      %v1211 = vor.u32 %v1206, %v1210
      %v1213 = vshll.u32 %v1180, 16
      %v1215 = vrot.slane %v1213, 1
      %v1216 = vsel %vm389, %v1211, %v1215
      %v1218 = vshrl.u32 %v1181, 16
      %v1220 = vshll.u32 %v1181, 16
      %v1222 = vrot.slane %v1220, 1
      %v1223 = vor.u32 %v1218, %v1222
      %v1225 = vshll.u32 %v1182, 16
      %v1227 = vrot.slane %v1225, 1
      %v1228 = vsel %vm389, %v1223, %v1227
      %v1230 = vshrl.u32 %v1183, 16
      %v1232 = vshll.u32 %v1183, 16
      %v1234 = vrot.slane %v1232, 1
      %v1235 = vor.u32 %v1230, %v1234
      %v1237 = vshll.u32 %v1184, 16
      %v1239 = vrot.slane %v1237, 1
      %v1240 = vsel %vm389, %v1235, %v1239
      %v1242 = vshrl.u32 %v1185, 16
      %v1244 = vshll.u32 %v1185, 16
      %v1246 = vrot.slane %v1244, 1
      %v1247 = vor.u32 %v1242, %v1246
      %v1249 = vshll.u32 %v1186, 16
      %v1251 = vrot.slane %v1249, 1
      %v1252 = vsel %vm389, %v1247, %v1251
      %v1254 = vshrl.u32 %v1187, 16
      %v1256 = vshll.u32 %v1187, 16
      %v1258 = vrot.slane %v1256, 1
      %v1259 = vor.u32 %v1254, %v1258
      %v1261 = vshll.u32 %v1188, 16
      %v1263 = vrot.slane %v1261, 1
      %v1264 = vsel %vm389, %v1259, %v1263
      %v1266 = vshrl.u32 %v1189, 16
      %v1268 = vshll.u32 %v1189, 16
      %v1270 = vrot.slane %v1268, 1
      %v1271 = vor.u32 %v1266, %v1270
      %v1273 = vshll.u32 %v1190, 16
      %v1275 = vrot.slane %v1273, 1
      %v1276 = vsel %vm389, %v1271, %v1275
      %v1278 = vshrl.u32 %v1191, 16
      %v1280 = vshll.u32 %v1191, 16
      %v1282 = vrot.slane %v1280, 1
      %v1283 = vor.u32 %v1278, %v1282
      %v1285 = vshll.u32 %v1192, 16
      %v1287 = vrot.slane %v1285, 1
      %v1288 = vsel %vm389, %v1283, %v1287
      %1297 = vst [vmem:[#allocation2 + $0x38] sm:$0xff] %v1204
      %1298 = vst [vmem:[#allocation2 + $0x80] sm:$0xff] %v1216
      %1299 = vst [vmem:[#allocation2 + $0xc8] sm:$0xff] %v1228
      %1300 = vst [vmem:[#allocation2 + $0x110] sm:$0xff] %v1240
      %1301 = vst [vmem:[#allocation2 + $0x158] sm:$0xff] %v1252
      %1302 = vst [vmem:[#allocation2 + $0x1a0] sm:$0xff] %v1264
      %1303 = vst [vmem:[#allocation2 + $0x1e8] sm:$0xff] %v1276
      %1304 = vst [vmem:[#allocation2 + $0x230] sm:$0xff] %v1288
      %v1305 = vld [vmem:[%s1032] sm:$0xe]
      %v1306 = vld [vmem:[%s1032 + $0x4] sm:$0xf]
      %v1307 = vld [vmem:[%s1032 + $0x8] sm:$0x1]
      %v1308 = vld [vmem:[%s1032 + $0xc] sm:$0xe]
      %v1309 = vld [vmem:[%s1032 + $0x10] sm:$0xf]
      %v1310 = vld [vmem:[%s1032 + $0x14] sm:$0x1]
      %v1311 = vld [vmem:[%s1032 + $0x18] sm:$0xe]
      %v1312 = vld [vmem:[%s1032 + $0x1c] sm:$0xf]
      %v1313 = vld [vmem:[%s1032 + $0x20] sm:$0x1]
      %v1314 = vld [vmem:[%s1032 + $0x24] sm:$0xe]
      %v1315 = vld [vmem:[%s1032 + $0x28] sm:$0xf]
      %v1316 = vld [vmem:[%s1032 + $0x2c] sm:$0x1]
      %v1317 = vld [vmem:[%s1032 + $0x30] sm:$0xe]
      %v1318 = vld [vmem:[%s1032 + $0x34] sm:$0xf]
      %v1319 = vld [vmem:[%s1032 + $0x38] sm:$0x1]
      %v1320 = vld [vmem:[%s1032 + $0x3c] sm:$0xe]
      %v1321 = vld [vmem:[%s1032 + $0x40] sm:$0xf]
      %v1322 = vld [vmem:[%s1032 + $0x44] sm:$0x1]
      %v1323 = vld [vmem:[%s1032 + $0x48] sm:$0xe]
      %v1324 = vld [vmem:[%s1032 + $0x4c] sm:$0xf]
      %v1325 = vld [vmem:[%s1032 + $0x50] sm:$0x1]
      %v1326 = vld [vmem:[%s1032 + $0x54] sm:$0xe]
      %v1327 = vld [vmem:[%s1032 + $0x58] sm:$0xf]
      %v1328 = vld [vmem:[%s1032 + $0x5c] sm:$0x1]
      %v1353 = vunpack.c.l.b16 %v1305
      %v1354 = vunpack.c.l.b16 %v1306
      %v1355 = vunpack.c.l.b16 %v1307
      %v1356 = vunpack.c.l.b16 %v1308
      %v1357 = vunpack.c.l.b16 %v1309
      %v1358 = vunpack.c.l.b16 %v1310
      %v1359 = vunpack.c.l.b16 %v1311
      %v1360 = vunpack.c.l.b16 %v1312
      %v1361 = vunpack.c.l.b16 %v1313
      %v1362 = vunpack.c.l.b16 %v1314
      %v1363 = vunpack.c.l.b16 %v1315
      %v1364 = vunpack.c.l.b16 %v1316
      %v1365 = vunpack.c.l.b16 %v1317
      %v1366 = vunpack.c.l.b16 %v1318
      %v1367 = vunpack.c.l.b16 %v1319
      %v1368 = vunpack.c.l.b16 %v1320
      %v1369 = vunpack.c.l.b16 %v1321
      %v1370 = vunpack.c.l.b16 %v1322
      %v1371 = vunpack.c.l.b16 %v1323
      %v1372 = vunpack.c.l.b16 %v1324
      %v1373 = vunpack.c.l.b16 %v1325
      %v1374 = vunpack.c.l.b16 %v1326
      %v1375 = vunpack.c.l.b16 %v1327
      %v1376 = vunpack.c.l.b16 %v1328
      %v1377 = vpack.c.b16 %v1354, %v1353
      %v1378 = vpack.c.b16 %v1355, %v1355
      %v1379 = vpack.c.b16 %v1357, %v1356
      %v1380 = vpack.c.b16 %v1358, %v1358
      %v1381 = vpack.c.b16 %v1360, %v1359
      %v1382 = vpack.c.b16 %v1361, %v1361
      %v1383 = vpack.c.b16 %v1363, %v1362
      %v1384 = vpack.c.b16 %v1364, %v1364
      %v1385 = vpack.c.b16 %v1366, %v1365
      %v1386 = vpack.c.b16 %v1367, %v1367
      %v1387 = vpack.c.b16 %v1369, %v1368
      %v1388 = vpack.c.b16 %v1370, %v1370
      %v1389 = vpack.c.b16 %v1372, %v1371
      %v1390 = vpack.c.b16 %v1373, %v1373
      %v1391 = vpack.c.b16 %v1375, %v1374
      %v1392 = vpack.c.b16 %v1376, %v1376
      %v1393 = vrot.slane %v1377, 1
      %v1394 = vrot.slane %v1378, 1
      %v1395 = vsel %vm590, %v1393, %v1394
      %v1396 = vrot.slane %v1379, 1
      %v1397 = vrot.slane %v1380, 1
      %v1398 = vsel %vm590, %v1396, %v1397
      %v1399 = vrot.slane %v1381, 1
      %v1400 = vrot.slane %v1382, 1
      %v1401 = vsel %vm590, %v1399, %v1400
      %v1402 = vrot.slane %v1383, 1
      %v1403 = vrot.slane %v1384, 1
      %v1404 = vsel %vm590, %v1402, %v1403
      %v1405 = vrot.slane %v1385, 1
      %v1406 = vrot.slane %v1386, 1
      %v1407 = vsel %vm590, %v1405, %v1406
      %v1408 = vrot.slane %v1387, 1
      %v1409 = vrot.slane %v1388, 1
      %v1410 = vsel %vm590, %v1408, %v1409
      %v1411 = vrot.slane %v1389, 1
      %v1412 = vrot.slane %v1390, 1
      %v1413 = vsel %vm590, %v1411, %v1412
      %v1414 = vrot.slane %v1391, 1
      %v1415 = vrot.slane %v1392, 1
      %v1416 = vsel %vm590, %v1414, %v1415
      %1425 = vst [vmem:[#allocation2 + $0x40] sm:$0xff] %v1395
      %1426 = vst [vmem:[#allocation2 + $0x88] sm:$0xff] %v1398
      %1427 = vst [vmem:[#allocation2 + $0xd0] sm:$0xff] %v1401
      %1428 = vst [vmem:[#allocation2 + $0x118] sm:$0xff] %v1404
      %1429 = vst [vmem:[#allocation2 + $0x160] sm:$0xff] %v1407
      %1430 = vst [vmem:[#allocation2 + $0x1a8] sm:$0xff] %v1410
      %1431 = vst [vmem:[#allocation2 + $0x1f0] sm:$0xff] %v1413
      %1432 = vst [vmem:[#allocation2 + $0x238] sm:$0xff] %v1416
      %v1433 = vld [vmem:[#allocation2] sm:$0xff]
      %v1434 = vld [vmem:[#allocation2 + $0x8] sm:$0xff]
      %v1435 = vld [vmem:[#allocation2 + $0x10] sm:$0xff]
      %v1436 = vld [vmem:[#allocation2 + $0x18] sm:$0xff]
      %v1437 = vld [vmem:[#allocation2 + $0x20] sm:$0xff]
      %v1438 = vld [vmem:[#allocation2 + $0x28] sm:$0xff]
      %v1439 = vld [vmem:[#allocation2 + $0x30] sm:$0xff]
      %v1440 = vld [vmem:[#allocation2 + $0x38] sm:$0xff]
      %v1441 = vld [vmem:[#allocation2 + $0x40] sm:$0xff]
      %v1442 = vld [vmem:[#allocation2 + $0x48] sm:$0xff]
      %v1443 = vld [vmem:[#allocation2 + $0x50] sm:$0xff]
      %v1444 = vld [vmem:[#allocation2 + $0x58] sm:$0xff]
      %v1445 = vld [vmem:[#allocation2 + $0x60] sm:$0xff]
      %v1446 = vld [vmem:[#allocation2 + $0x68] sm:$0xff]
      %v1447 = vld [vmem:[#allocation2 + $0x70] sm:$0xff]
      %v1448 = vld [vmem:[#allocation2 + $0x78] sm:$0xff]
      %v1449 = vld [vmem:[#allocation2 + $0x80] sm:$0xff]
      %v1450 = vld [vmem:[#allocation2 + $0x88] sm:$0xff]
      %v1451 = vld [vmem:[#allocation2 + $0x90] sm:$0xff]
      %v1452 = vld [vmem:[#allocation2 + $0x98] sm:$0xff]
      %v1453 = vld [vmem:[#allocation2 + $0xa0] sm:$0xff]
      %v1454 = vld [vmem:[#allocation2 + $0xa8] sm:$0xff]
      %v1455 = vld [vmem:[#allocation2 + $0xb0] sm:$0xff]
      %v1456 = vld [vmem:[#allocation2 + $0xb8] sm:$0xff]
      %v1457 = vld [vmem:[#allocation2 + $0xc0] sm:$0xff]
      %v1458 = vld [vmem:[#allocation2 + $0xc8] sm:$0xff]
      %v1459 = vld [vmem:[#allocation2 + $0xd0] sm:$0xff]
      %v1460 = vld [vmem:[#allocation2 + $0xd8] sm:$0xff]
      %v1461 = vld [vmem:[#allocation2 + $0xe0] sm:$0xff]
      %v1462 = vld [vmem:[#allocation2 + $0xe8] sm:$0xff]
      %v1463 = vld [vmem:[#allocation2 + $0xf0] sm:$0xff]
      %v1464 = vld [vmem:[#allocation2 + $0xf8] sm:$0xff]
      %v1465 = vld [vmem:[#allocation2 + $0x100] sm:$0xff]
      %v1466 = vld [vmem:[#allocation2 + $0x108] sm:$0xff]
      %v1467 = vld [vmem:[#allocation2 + $0x110] sm:$0xff]
      %v1468 = vld [vmem:[#allocation2 + $0x118] sm:$0xff]
      %v1469 = vld [vmem:[#allocation2 + $0x120] sm:$0xff]
      %v1470 = vld [vmem:[#allocation2 + $0x128] sm:$0xff]
      %v1471 = vld [vmem:[#allocation2 + $0x130] sm:$0xff]
      %v1472 = vld [vmem:[#allocation2 + $0x138] sm:$0xff]
      %v1473 = vld [vmem:[#allocation2 + $0x140] sm:$0xff]
      %v1474 = vld [vmem:[#allocation2 + $0x148] sm:$0xff]
      %v1475 = vld [vmem:[#allocation2 + $0x150] sm:$0xff]
      %v1476 = vld [vmem:[#allocation2 + $0x158] sm:$0xff]
      %v1477 = vld [vmem:[#allocation2 + $0x160] sm:$0xff]
      %v1478 = vld [vmem:[#allocation2 + $0x168] sm:$0xff]
      %v1479 = vld [vmem:[#allocation2 + $0x170] sm:$0xff]
      %v1480 = vld [vmem:[#allocation2 + $0x178] sm:$0xff]
      %v1481 = vld [vmem:[#allocation2 + $0x180] sm:$0xff]
      %v1482 = vld [vmem:[#allocation2 + $0x188] sm:$0xff]
      %v1483 = vld [vmem:[#allocation2 + $0x190] sm:$0xff]
      %v1484 = vld [vmem:[#allocation2 + $0x198] sm:$0xff]
      %v1485 = vld [vmem:[#allocation2 + $0x1a0] sm:$0xff]
      %v1486 = vld [vmem:[#allocation2 + $0x1a8] sm:$0xff]
      %v1487 = vld [vmem:[#allocation2 + $0x1b0] sm:$0xff]
      %v1488 = vld [vmem:[#allocation2 + $0x1b8] sm:$0xff]
      %v1489 = vld [vmem:[#allocation2 + $0x1c0] sm:$0xff]
      %v1490 = vld [vmem:[#allocation2 + $0x1c8] sm:$0xff]
      %v1491 = vld [vmem:[#allocation2 + $0x1d0] sm:$0xff]
      %v1492 = vld [vmem:[#allocation2 + $0x1d8] sm:$0xff]
      %v1493 = vld [vmem:[#allocation2 + $0x1e0] sm:$0xff]
      %v1494 = vld [vmem:[#allocation2 + $0x1e8] sm:$0xff]
      %v1495 = vld [vmem:[#allocation2 + $0x1f0] sm:$0xff]
      %v1496 = vld [vmem:[#allocation2 + $0x1f8] sm:$0xff]
      %v1497 = vld [vmem:[#allocation2 + $0x200] sm:$0xff]
      %v1498 = vld [vmem:[#allocation2 + $0x208] sm:$0xff]
      %v1499 = vld [vmem:[#allocation2 + $0x210] sm:$0xff]
      %v1500 = vld [vmem:[#allocation2 + $0x218] sm:$0xff]
      %v1501 = vld [vmem:[#allocation2 + $0x220] sm:$0xff]
      %v1502 = vld [vmem:[#allocation2 + $0x228] sm:$0xff]
      %v1503 = vld [vmem:[#allocation2 + $0x230] sm:$0xff]
      %v1504 = vld [vmem:[#allocation2 + $0x238] sm:$0xff]
      %v1505 = vld [vmem:[%s1] sm:$0xf]
      %v1506 = vld [vmem:[%s1 + $0x4] sm:$0xf]
      %v1507 = vld [vmem:[%s1 + $0x8] sm:$0xf]
      %v1508 = vld [vmem:[%s1 + $0xc] sm:$0xf]
      %v1509 = vld [vmem:[%s1 + $0x10] sm:$0xf]
      %v1510 = vld [vmem:[%s1 + $0x14] sm:$0xf]
      %v1511 = vld [vmem:[%s1 + $0x18] sm:$0xf]
      %v1512 = vld [vmem:[%s1 + $0x1c] sm:$0xf]
      %v1513 = vld [vmem:[%s1 + $0x20] sm:$0xf]
      %v1514 = vld [vmem:[%s1 + $0x24] sm:$0xf]
      %v1515 = vld [vmem:[%s1 + $0x28] sm:$0xf]
      %v1516 = vld [vmem:[%s1 + $0x2c] sm:$0xf]
      %v1517 = vld [vmem:[%s1 + $0x30] sm:$0xf]
      %v1518 = vld [vmem:[%s1 + $0x34] sm:$0xf]
      %v1519 = vld [vmem:[%s1 + $0x38] sm:$0xf]
      %v1520 = vld [vmem:[%s1 + $0x3c] sm:$0xf]
      %v1521 = vld [vmem:[%s1 + $0x40] sm:$0xf]
      %v1522 = vld [vmem:[%s1 + $0x44] sm:$0xf]
      %v1523 = vld [vmem:[%s1 + $0x48] sm:$0xf]
      %v1524 = vld [vmem:[%s1 + $0x4c] sm:$0xf]
      %v1525 = vld [vmem:[%s1 + $0x50] sm:$0xf]
      %v1526 = vld [vmem:[%s1 + $0x54] sm:$0xf]
      %v1527 = vld [vmem:[%s1 + $0x58] sm:$0xf]
      %v1528 = vld [vmem:[%s1 + $0x5c] sm:$0xf]
      %v1529 = vld [vmem:[%s1 + $0x60] sm:$0xf]
      %v1530 = vld [vmem:[%s1 + $0x64] sm:$0xf]
      %v1531 = vld [vmem:[%s1 + $0x68] sm:$0xf]
      %v1532 = vld [vmem:[%s1 + $0x6c] sm:$0xf]
      %v1533 = vld [vmem:[%s1 + $0x70] sm:$0xf]
      %v1534 = vld [vmem:[%s1 + $0x74] sm:$0xf]
      %v1535 = vld [vmem:[%s1 + $0x78] sm:$0xf]
      %v1536 = vld [vmem:[%s1 + $0x7c] sm:$0xf]
      %v1537 = vld [vmem:[%s1 + $0x80] sm:$0xf]
      %v1538 = vld [vmem:[%s1 + $0x84] sm:$0xf]
      %v1539 = vld [vmem:[%s1 + $0x88] sm:$0xf]
      %v1540 = vld [vmem:[%s1 + $0x8c] sm:$0xf]
      %v1541 = vld [vmem:[%s1 + $0x90] sm:$0xf]
      %v1542 = vld [vmem:[%s1 + $0x94] sm:$0xf]
      %v1543 = vld [vmem:[%s1 + $0x98] sm:$0xf]
      %v1544 = vld [vmem:[%s1 + $0x9c] sm:$0xf]
      %v1545 = vld [vmem:[%s1 + $0xa0] sm:$0xf]
      %v1546 = vld [vmem:[%s1 + $0xa4] sm:$0xf]
      %v1547 = vld [vmem:[%s1 + $0xa8] sm:$0xf]
      %v1548 = vld [vmem:[%s1 + $0xac] sm:$0xf]
      %v1549 = vld [vmem:[%s1 + $0xb0] sm:$0xf]
      %v1550 = vld [vmem:[%s1 + $0xb4] sm:$0xf]
      %v1551 = vld [vmem:[%s1 + $0xb8] sm:$0xf]
      %v1552 = vld [vmem:[%s1 + $0xbc] sm:$0xf]
      %v1553 = vld [vmem:[%s1 + $0xc0] sm:$0xf]
      %v1554 = vld [vmem:[%s1 + $0xc4] sm:$0xf]
      %v1555 = vld [vmem:[%s1 + $0xc8] sm:$0xf]
      %v1556 = vld [vmem:[%s1 + $0xcc] sm:$0xf]
      %v1557 = vld [vmem:[%s1 + $0xd0] sm:$0xf]
      %v1558 = vld [vmem:[%s1 + $0xd4] sm:$0xf]
      %v1559 = vld [vmem:[%s1 + $0xd8] sm:$0xf]
      %v1560 = vld [vmem:[%s1 + $0xdc] sm:$0xf]
      %v1561 = vld [vmem:[%s1 + $0xe0] sm:$0xf]
      %v1562 = vld [vmem:[%s1 + $0xe4] sm:$0xf]
      %v1563 = vld [vmem:[%s1 + $0xe8] sm:$0xf]
      %v1564 = vld [vmem:[%s1 + $0xec] sm:$0xf]
      %v1565 = vld [vmem:[%s1 + $0xf0] sm:$0xf]
      %v1566 = vld [vmem:[%s1 + $0xf4] sm:$0xf]
      %v1567 = vld [vmem:[%s1 + $0xf8] sm:$0xf]
      %v1568 = vld [vmem:[%s1 + $0xfc] sm:$0xf]
      %v1569 = vld [vmem:[%s1 + $0x100] sm:$0xf]
      %v1570 = vld [vmem:[%s1 + $0x104] sm:$0xf]
      %v1571 = vld [vmem:[%s1 + $0x108] sm:$0xf]
      %v1572 = vld [vmem:[%s1 + $0x10c] sm:$0xf]
      %v1573 = vld [vmem:[%s1 + $0x110] sm:$0xf]
      %v1574 = vld [vmem:[%s1 + $0x114] sm:$0xf]
      %v1575 = vld [vmem:[%s1 + $0x118] sm:$0xf]
      %v1576 = vld [vmem:[%s1 + $0x11c] sm:$0xf]
      %v1577 = vld [vmem:[%s1 + $0x120] sm:$0xf]
      %v1578 = vld [vmem:[%s1 + $0x124] sm:$0xf]
      %v1579 = vld [vmem:[%s1 + $0x128] sm:$0xf]
      %v1580 = vld [vmem:[%s1 + $0x12c] sm:$0xf]
      %v1581 = vld [vmem:[%s1 + $0x130] sm:$0xf]
      %v1582 = vld [vmem:[%s1 + $0x134] sm:$0xf]
      %v1583 = vld [vmem:[%s1 + $0x138] sm:$0xf]
      %v1584 = vld [vmem:[%s1 + $0x13c] sm:$0xf]
      %v1585 = vld [vmem:[%s1 + $0x140] sm:$0xf]
      %v1586 = vld [vmem:[%s1 + $0x144] sm:$0xf]
      %v1587 = vld [vmem:[%s1 + $0x148] sm:$0xf]
      %v1588 = vld [vmem:[%s1 + $0x14c] sm:$0xf]
      %v1589 = vld [vmem:[%s1 + $0x150] sm:$0xf]
      %v1590 = vld [vmem:[%s1 + $0x154] sm:$0xf]
      %v1591 = vld [vmem:[%s1 + $0x158] sm:$0xf]
      %v1592 = vld [vmem:[%s1 + $0x15c] sm:$0xf]
      %v1593 = vld [vmem:[%s1 + $0x160] sm:$0xf]
      %v1594 = vld [vmem:[%s1 + $0x164] sm:$0xf]
      %v1595 = vld [vmem:[%s1 + $0x168] sm:$0xf]
      %v1596 = vld [vmem:[%s1 + $0x16c] sm:$0xf]
      %v1597 = vld [vmem:[%s1 + $0x170] sm:$0xf]
      %v1598 = vld [vmem:[%s1 + $0x174] sm:$0xf]
      %v1599 = vld [vmem:[%s1 + $0x178] sm:$0xf]
      %v1600 = vld [vmem:[%s1 + $0x17c] sm:$0xf]
      %v1601 = vld [vmem:[%s1 + $0x180] sm:$0xf]
      %v1602 = vld [vmem:[%s1 + $0x184] sm:$0xf]
      %v1603 = vld [vmem:[%s1 + $0x188] sm:$0xf]
      %v1604 = vld [vmem:[%s1 + $0x18c] sm:$0xf]
      %v1605 = vld [vmem:[%s1 + $0x190] sm:$0xf]
      %v1606 = vld [vmem:[%s1 + $0x194] sm:$0xf]
      %v1607 = vld [vmem:[%s1 + $0x198] sm:$0xf]
      %v1608 = vld [vmem:[%s1 + $0x19c] sm:$0xf]
      %v1609 = vld [vmem:[%s1 + $0x1a0] sm:$0xf]
      %v1610 = vld [vmem:[%s1 + $0x1a4] sm:$0xf]
      %v1611 = vld [vmem:[%s1 + $0x1a8] sm:$0xf]
      %v1612 = vld [vmem:[%s1 + $0x1ac] sm:$0xf]
      %v1613 = vld [vmem:[%s1 + $0x1b0] sm:$0xf]
      %v1614 = vld [vmem:[%s1 + $0x1b4] sm:$0xf]
      %v1615 = vld [vmem:[%s1 + $0x1b8] sm:$0xf]
      %v1616 = vld [vmem:[%s1 + $0x1bc] sm:$0xf]
      %v1617 = vld [vmem:[%s1 + $0x1c0] sm:$0xf]
      %v1618 = vld [vmem:[%s1 + $0x1c4] sm:$0xf]
      %v1619 = vld [vmem:[%s1 + $0x1c8] sm:$0xf]
      %v1620 = vld [vmem:[%s1 + $0x1cc] sm:$0xf]
      %v1621 = vld [vmem:[%s1 + $0x1d0] sm:$0xf]
      %v1622 = vld [vmem:[%s1 + $0x1d4] sm:$0xf]
      %v1623 = vld [vmem:[%s1 + $0x1d8] sm:$0xf]
      %v1624 = vld [vmem:[%s1 + $0x1dc] sm:$0xf]
      %v1625 = vld [vmem:[%s1 + $0x1e0] sm:$0xf]
      %v1626 = vld [vmem:[%s1 + $0x1e4] sm:$0xf]
      %v1627 = vld [vmem:[%s1 + $0x1e8] sm:$0xf]
      %v1628 = vld [vmem:[%s1 + $0x1ec] sm:$0xf]
      %v1629 = vld [vmem:[%s1 + $0x1f0] sm:$0xf]
      %v1630 = vld [vmem:[%s1 + $0x1f4] sm:$0xf]
      %v1631 = vld [vmem:[%s1 + $0x1f8] sm:$0xf]
      %v1632 = vld [vmem:[%s1 + $0x1fc] sm:$0xf]
      %v1633 = vld [vmem:[%s1 + $0x200] sm:$0xf]
      %v1634 = vld [vmem:[%s1 + $0x204] sm:$0xf]
      %v1635 = vld [vmem:[%s1 + $0x208] sm:$0xf]
      %v1636 = vld [vmem:[%s1 + $0x20c] sm:$0xf]
      %v1637 = vld [vmem:[%s1 + $0x210] sm:$0xf]
      %v1638 = vld [vmem:[%s1 + $0x214] sm:$0xf]
      %v1639 = vld [vmem:[%s1 + $0x218] sm:$0xf]
      %v1640 = vld [vmem:[%s1 + $0x21c] sm:$0xf]
      %v1641 = vld [vmem:[%s1 + $0x220] sm:$0xf]
      %v1642 = vld [vmem:[%s1 + $0x224] sm:$0xf]
      %v1643 = vld [vmem:[%s1 + $0x228] sm:$0xf]
      %v1644 = vld [vmem:[%s1 + $0x22c] sm:$0xf]
      %v1645 = vld [vmem:[%s1 + $0x230] sm:$0xf]
      %v1646 = vld [vmem:[%s1 + $0x234] sm:$0xf]
      %v1647 = vld [vmem:[%s1 + $0x238] sm:$0xf]
      %v1648 = vld [vmem:[%s1 + $0x23c] sm:$0xf]
      %v1793 = vunpack.c.l.b16 %v1505
      %v1794 = vunpack.c.l.b16 %v1506
      %v1795 = vunpack.c.l.b16 %v1507
      %v1796 = vunpack.c.l.b16 %v1508
      %v1797 = vunpack.c.l.b16 %v1509
      %v1798 = vunpack.c.l.b16 %v1510
      %v1799 = vunpack.c.l.b16 %v1511
      %v1800 = vunpack.c.l.b16 %v1512
      %v1801 = vunpack.c.l.b16 %v1513
      %v1802 = vunpack.c.l.b16 %v1514
      %v1803 = vunpack.c.l.b16 %v1515
      %v1804 = vunpack.c.l.b16 %v1516
      %v1805 = vunpack.c.l.b16 %v1517
      %v1806 = vunpack.c.l.b16 %v1518
      %v1807 = vunpack.c.l.b16 %v1519
      %v1808 = vunpack.c.l.b16 %v1520
      %v1809 = vunpack.c.l.b16 %v1521
      %v1810 = vunpack.c.l.b16 %v1522
      %v1811 = vunpack.c.l.b16 %v1523
      %v1812 = vunpack.c.l.b16 %v1524
      %v1813 = vunpack.c.l.b16 %v1525
      %v1814 = vunpack.c.l.b16 %v1526
      %v1815 = vunpack.c.l.b16 %v1527
      %v1816 = vunpack.c.l.b16 %v1528
      %v1817 = vunpack.c.l.b16 %v1529
      %v1818 = vunpack.c.l.b16 %v1530
      %v1819 = vunpack.c.l.b16 %v1531
      %v1820 = vunpack.c.l.b16 %v1532
      %v1821 = vunpack.c.l.b16 %v1533
      %v1822 = vunpack.c.l.b16 %v1534
      %v1823 = vunpack.c.l.b16 %v1535
      %v1824 = vunpack.c.l.b16 %v1536
      %v1825 = vunpack.c.l.b16 %v1537
      %v1826 = vunpack.c.l.b16 %v1538
      %v1827 = vunpack.c.l.b16 %v1539
      %v1828 = vunpack.c.l.b16 %v1540
      %v1829 = vunpack.c.l.b16 %v1541
      %v1830 = vunpack.c.l.b16 %v1542
      %v1831 = vunpack.c.l.b16 %v1543
      %v1832 = vunpack.c.l.b16 %v1544
      %v1833 = vunpack.c.l.b16 %v1545
      %v1834 = vunpack.c.l.b16 %v1546
      %v1835 = vunpack.c.l.b16 %v1547
      %v1836 = vunpack.c.l.b16 %v1548
      %v1837 = vunpack.c.l.b16 %v1549
      %v1838 = vunpack.c.l.b16 %v1550
      %v1839 = vunpack.c.l.b16 %v1551
      %v1840 = vunpack.c.l.b16 %v1552
      %v1841 = vunpack.c.l.b16 %v1553
      %v1842 = vunpack.c.l.b16 %v1554
      %v1843 = vunpack.c.l.b16 %v1555
      %v1844 = vunpack.c.l.b16 %v1556
      %v1845 = vunpack.c.l.b16 %v1557
      %v1846 = vunpack.c.l.b16 %v1558
      %v1847 = vunpack.c.l.b16 %v1559
      %v1848 = vunpack.c.l.b16 %v1560
      %v1849 = vunpack.c.l.b16 %v1561
      %v1850 = vunpack.c.l.b16 %v1562
      %v1851 = vunpack.c.l.b16 %v1563
      %v1852 = vunpack.c.l.b16 %v1564
      %v1853 = vunpack.c.l.b16 %v1565
      %v1854 = vunpack.c.l.b16 %v1566
      %v1855 = vunpack.c.l.b16 %v1567
      %v1856 = vunpack.c.l.b16 %v1568
      %v1857 = vunpack.c.l.b16 %v1569
      %v1858 = vunpack.c.l.b16 %v1570
      %v1859 = vunpack.c.l.b16 %v1571
      %v1860 = vunpack.c.l.b16 %v1572
      %v1861 = vunpack.c.l.b16 %v1573
      %v1862 = vunpack.c.l.b16 %v1574
      %v1863 = vunpack.c.l.b16 %v1575
      %v1864 = vunpack.c.l.b16 %v1576
      %v1865 = vunpack.c.l.b16 %v1577
      %v1866 = vunpack.c.l.b16 %v1578
      %v1867 = vunpack.c.l.b16 %v1579
      %v1868 = vunpack.c.l.b16 %v1580
      %v1869 = vunpack.c.l.b16 %v1581
      %v1870 = vunpack.c.l.b16 %v1582
      %v1871 = vunpack.c.l.b16 %v1583
      %v1872 = vunpack.c.l.b16 %v1584
      %v1873 = vunpack.c.l.b16 %v1585
      %v1874 = vunpack.c.l.b16 %v1586
      %v1875 = vunpack.c.l.b16 %v1587
      %v1876 = vunpack.c.l.b16 %v1588
      %v1877 = vunpack.c.l.b16 %v1589
      %v1878 = vunpack.c.l.b16 %v1590
      %v1879 = vunpack.c.l.b16 %v1591
      %v1880 = vunpack.c.l.b16 %v1592
      %v1881 = vunpack.c.l.b16 %v1593
      %v1882 = vunpack.c.l.b16 %v1594
      %v1883 = vunpack.c.l.b16 %v1595
      %v1884 = vunpack.c.l.b16 %v1596
      %v1885 = vunpack.c.l.b16 %v1597
      %v1886 = vunpack.c.l.b16 %v1598
      %v1887 = vunpack.c.l.b16 %v1599
      %v1888 = vunpack.c.l.b16 %v1600
      %v1889 = vunpack.c.l.b16 %v1601
      %v1890 = vunpack.c.l.b16 %v1602
      %v1891 = vunpack.c.l.b16 %v1603
      %v1892 = vunpack.c.l.b16 %v1604
      %v1893 = vunpack.c.l.b16 %v1605
      %v1894 = vunpack.c.l.b16 %v1606
      %v1895 = vunpack.c.l.b16 %v1607
      %v1896 = vunpack.c.l.b16 %v1608
      %v1897 = vunpack.c.l.b16 %v1609
      %v1898 = vunpack.c.l.b16 %v1610
      %v1899 = vunpack.c.l.b16 %v1611
      %v1900 = vunpack.c.l.b16 %v1612
      %v1901 = vunpack.c.l.b16 %v1613
      %v1902 = vunpack.c.l.b16 %v1614
      %v1903 = vunpack.c.l.b16 %v1615
      %v1904 = vunpack.c.l.b16 %v1616
      %v1905 = vunpack.c.l.b16 %v1617
      %v1906 = vunpack.c.l.b16 %v1618
      %v1907 = vunpack.c.l.b16 %v1619
      %v1908 = vunpack.c.l.b16 %v1620
      %v1909 = vunpack.c.l.b16 %v1621
      %v1910 = vunpack.c.l.b16 %v1622
      %v1911 = vunpack.c.l.b16 %v1623
      %v1912 = vunpack.c.l.b16 %v1624
      %v1913 = vunpack.c.l.b16 %v1625
      %v1914 = vunpack.c.l.b16 %v1626
      %v1915 = vunpack.c.l.b16 %v1627
      %v1916 = vunpack.c.l.b16 %v1628
      %v1917 = vunpack.c.l.b16 %v1629
      %v1918 = vunpack.c.l.b16 %v1630
      %v1919 = vunpack.c.l.b16 %v1631
      %v1920 = vunpack.c.l.b16 %v1632
      %v1921 = vunpack.c.l.b16 %v1633
      %v1922 = vunpack.c.l.b16 %v1634
      %v1923 = vunpack.c.l.b16 %v1635
      %v1924 = vunpack.c.l.b16 %v1636
      %v1925 = vunpack.c.l.b16 %v1637
      %v1926 = vunpack.c.l.b16 %v1638
      %v1927 = vunpack.c.l.b16 %v1639
      %v1928 = vunpack.c.l.b16 %v1640
      %v1929 = vunpack.c.l.b16 %v1641
      %v1930 = vunpack.c.l.b16 %v1642
      %v1931 = vunpack.c.l.b16 %v1643
      %v1932 = vunpack.c.l.b16 %v1644
      %v1933 = vunpack.c.l.b16 %v1645
      %v1934 = vunpack.c.l.b16 %v1646
      %v1935 = vunpack.c.l.b16 %v1647
      %v1936 = vunpack.c.l.b16 %v1648
      %v1937 = vpack.c.b16 %v1794, %v1793
      %v1938 = vpack.c.b16 %v1796, %v1795
      %v1939 = vpack.c.b16 %v1798, %v1797
      %v1940 = vpack.c.b16 %v1800, %v1799
      %v1941 = vpack.c.b16 %v1802, %v1801
      %v1942 = vpack.c.b16 %v1804, %v1803
      %v1943 = vpack.c.b16 %v1806, %v1805
      %v1944 = vpack.c.b16 %v1808, %v1807
      %v1945 = vpack.c.b16 %v1810, %v1809
      %v1946 = vpack.c.b16 %v1812, %v1811
      %v1947 = vpack.c.b16 %v1814, %v1813
      %v1948 = vpack.c.b16 %v1816, %v1815
      %v1949 = vpack.c.b16 %v1818, %v1817
      %v1950 = vpack.c.b16 %v1820, %v1819
      %v1951 = vpack.c.b16 %v1822, %v1821
      %v1952 = vpack.c.b16 %v1824, %v1823
      %v1953 = vpack.c.b16 %v1826, %v1825
      %v1954 = vpack.c.b16 %v1828, %v1827
      %v1955 = vpack.c.b16 %v1830, %v1829
      %v1956 = vpack.c.b16 %v1832, %v1831
      %v1957 = vpack.c.b16 %v1834, %v1833
      %v1958 = vpack.c.b16 %v1836, %v1835
      %v1959 = vpack.c.b16 %v1838, %v1837
      %v1960 = vpack.c.b16 %v1840, %v1839
      %v1961 = vpack.c.b16 %v1842, %v1841
      %v1962 = vpack.c.b16 %v1844, %v1843
      %v1963 = vpack.c.b16 %v1846, %v1845
      %v1964 = vpack.c.b16 %v1848, %v1847
      %v1965 = vpack.c.b16 %v1850, %v1849
      %v1966 = vpack.c.b16 %v1852, %v1851
      %v1967 = vpack.c.b16 %v1854, %v1853
      %v1968 = vpack.c.b16 %v1856, %v1855
      %v1969 = vpack.c.b16 %v1858, %v1857
      %v1970 = vpack.c.b16 %v1860, %v1859
      %v1971 = vpack.c.b16 %v1862, %v1861
      %v1972 = vpack.c.b16 %v1864, %v1863
      %v1973 = vpack.c.b16 %v1866, %v1865
      %v1974 = vpack.c.b16 %v1868, %v1867
      %v1975 = vpack.c.b16 %v1870, %v1869
      %v1976 = vpack.c.b16 %v1872, %v1871
      %v1977 = vpack.c.b16 %v1874, %v1873
      %v1978 = vpack.c.b16 %v1876, %v1875
      %v1979 = vpack.c.b16 %v1878, %v1877
      %v1980 = vpack.c.b16 %v1880, %v1879
      %v1981 = vpack.c.b16 %v1882, %v1881
      %v1982 = vpack.c.b16 %v1884, %v1883
      %v1983 = vpack.c.b16 %v1886, %v1885
      %v1984 = vpack.c.b16 %v1888, %v1887
      %v1985 = vpack.c.b16 %v1890, %v1889
      %v1986 = vpack.c.b16 %v1892, %v1891
      %v1987 = vpack.c.b16 %v1894, %v1893
      %v1988 = vpack.c.b16 %v1896, %v1895
      %v1989 = vpack.c.b16 %v1898, %v1897
      %v1990 = vpack.c.b16 %v1900, %v1899
      %v1991 = vpack.c.b16 %v1902, %v1901
      %v1992 = vpack.c.b16 %v1904, %v1903
      %v1993 = vpack.c.b16 %v1906, %v1905
      %v1994 = vpack.c.b16 %v1908, %v1907
      %v1995 = vpack.c.b16 %v1910, %v1909
      %v1996 = vpack.c.b16 %v1912, %v1911
      %v1997 = vpack.c.b16 %v1914, %v1913
      %v1998 = vpack.c.b16 %v1916, %v1915
      %v1999 = vpack.c.b16 %v1918, %v1917
      %v2000 = vpack.c.b16 %v1920, %v1919
      %v2001 = vpack.c.b16 %v1922, %v1921
      %v2002 = vpack.c.b16 %v1924, %v1923
      %v2003 = vpack.c.b16 %v1926, %v1925
      %v2004 = vpack.c.b16 %v1928, %v1927
      %v2005 = vpack.c.b16 %v1930, %v1929
      %v2006 = vpack.c.b16 %v1932, %v1931
      %v2007 = vpack.c.b16 %v1934, %v1933
      %v2008 = vpack.c.b16 %v1936, %v1935
      %2081 = vmatprep.subr.bf16.mxu0 0
      %2082 = vmatpush1.bf16.msra.mxu0 %v1937
      %2083 = vmatprep.subr.bf16.mxu0 0
      %2084 = vmatpush1.bf16.msra.mxu0 %v1938
      %2085 = vmatprep.subr.bf16.mxu0 0
      %2086 = vmatpush1.bf16.msra.mxu0 %v1939
      %2087 = vmatprep.subr.bf16.mxu0 0
      %2088 = vmatpush1.bf16.msra.mxu0 %v1940
      %2089 = vmatprep.subr.bf16.mxu0 0
      %2090 = vmatpush1.bf16.msra.mxu0 %v1941
      %2091 = vmatprep.subr.bf16.mxu0 0
      %2092 = vmatpush1.bf16.msra.mxu0 %v1942
      %2093 = vmatprep.subr.bf16.mxu0 0
      %2094 = vmatpush1.bf16.msra.mxu0 %v1943
      %2095 = vmatprep.subr.bf16.mxu0 0
      %2096 = vmatpush1.bf16.msra.mxu0 %v1944
      %2097 = vmatprep.subr.bf16.mxu0 0
      %2098 = vmatpush1.bf16.msra.mxu0 %v1945
      %2099 = vmatprep.subr.bf16.mxu0 0
      %2100 = vmatpush1.bf16.msra.mxu0 %v1946
      %2101 = vmatprep.subr.bf16.mxu0 0
      %2102 = vmatpush1.bf16.msra.mxu0 %v1947
      %2103 = vmatprep.subr.bf16.mxu0 0
      %2104 = vmatpush1.bf16.msra.mxu0 %v1948
      %2105 = vmatprep.subr.bf16.mxu0 0
      %2106 = vmatpush1.bf16.msra.mxu0 %v1949
      %2107 = vmatprep.subr.bf16.mxu0 0
      %2108 = vmatpush1.bf16.msra.mxu0 %v1950
      %2109 = vmatprep.subr.bf16.mxu0 0
      %2110 = vmatpush1.bf16.msra.mxu0 %v1951
      %2111 = vmatprep.subr.bf16.mxu0 0
      %2112 = vmatpush1.bf16.msra.mxu0 %v1952
      %2113 = vmatprep.mubr.bf16.mxu0 %v1434
      %2114 = vmatmul.mubr.bf16.gmra.mrb[0].mxu0 %v1433
      %v2115 = vpop.f32.mrb[0].mxu0
      %v2116 = vadd.f32 0.0, %v2115
      %v2117 = vpop.f32.mrb[0].mxu0
      %v2118 = vpop.f32.mrb[0].mxu0
      %v2119 = vadd.f32 0.0, %v2118
      %v2120 = vpop.f32.mrb[0].mxu0
      %2121 = vmatprep.mubr.bf16.mxu0 %v1443
      %2122 = vmatmul.mubr.bf16.gmra.mrb[0].mxu0 %v1442
      %v2123 = vpop.f32.mrb[0].mxu0
      %v2124 = vadd.f32 0.0, %v2123
      %v2125 = vpop.f32.mrb[0].mxu0
      %v2126 = vpop.f32.mrb[0].mxu0
      %v2127 = vadd.f32 0.0, %v2126
      %v2128 = vpop.f32.mrb[0].mxu0
      %2129 = vmatprep.mubr.bf16.mxu0 %v1452
      %2130 = vmatmul.mubr.bf16.gmra.mrb[0].mxu0 %v1451
      %v2131 = vpop.f32.mrb[0].mxu0
      %v2132 = vadd.f32 0.0, %v2131
      %v2133 = vpop.f32.mrb[0].mxu0
      %v2134 = vpop.f32.mrb[0].mxu0
      %v2135 = vadd.f32 0.0, %v2134
      %v2136 = vpop.f32.mrb[0].mxu0
      %2137 = vmatprep.mubr.bf16.mxu0 %v1461
      %2138 = vmatmul.mubr.bf16.gmra.mrb[0].mxu0 %v1460
      %v2139 = vpop.f32.mrb[0].mxu0
      %v2140 = vadd.f32 0.0, %v2139
      %v2141 = vpop.f32.mrb[0].mxu0
      %v2142 = vpop.f32.mrb[0].mxu0
      %v2143 = vadd.f32 0.0, %v2142
      %v2144 = vpop.f32.mrb[0].mxu0
      %2145 = vmatprep.mubr.bf16.mxu0 %v1470
      %2146 = vmatmul.mubr.bf16.gmra.mrb[0].mxu0 %v1469
      %v2147 = vpop.f32.mrb[0].mxu0
      %v2148 = vadd.f32 0.0, %v2147
      %v2149 = vpop.f32.mrb[0].mxu0
      %v2150 = vpop.f32.mrb[0].mxu0
      %v2151 = vadd.f32 0.0, %v2150
      %v2152 = vpop.f32.mrb[0].mxu0
      %2153 = vmatprep.mubr.bf16.mxu0 %v1479
      %2154 = vmatmul.mubr.bf16.gmra.mrb[0].mxu0 %v1478
      %v2155 = vpop.f32.mrb[0].mxu0
      %v2156 = vadd.f32 0.0, %v2155
      %v2157 = vpop.f32.mrb[0].mxu0
      %v2158 = vpop.f32.mrb[0].mxu0
      %v2159 = vadd.f32 0.0, %v2158
      %v2160 = vpop.f32.mrb[0].mxu0
      %2161 = vmatprep.mubr.bf16.mxu0 %v1488
      %2162 = vmatmul.mubr.bf16.gmra.mrb[0].mxu0 %v1487
      %v2163 = vpop.f32.mrb[0].mxu0
      %v2164 = vadd.f32 0.0, %v2163
      %v2165 = vpop.f32.mrb[0].mxu0
      %v2166 = vpop.f32.mrb[0].mxu0
      %v2167 = vadd.f32 0.0, %v2166
      %v2168 = vpop.f32.mrb[0].mxu0
      %2169 = vmatprep.mubr.bf16.mxu0 %v1497
      %2170 = vmatmul.mubr.bf16.gmra.mrb[0].mxu0 %v1496
      %v2171 = vpop.f32.mrb[0].mxu0
      %v2172 = vadd.f32 0.0, %v2171
      %v2173 = vpop.f32.mrb[0].mxu0
      %v2174 = vpop.f32.mrb[0].mxu0
      %v2175 = vadd.f32 0.0, %v2174
      %v2176 = vpop.f32.mrb[0].mxu0
      %2177 = vdwg.mxu0
      %2178 = vmatprep.subr.bf16.mxu0 0
      %2179 = vmatpush1.bf16.msra.mxu0 %v1953
      %2180 = vmatprep.subr.bf16.mxu0 0
      %2181 = vmatpush1.bf16.msra.mxu0 %v1954
      %2182 = vmatprep.subr.bf16.mxu0 0
      %2183 = vmatpush1.bf16.msra.mxu0 %v1955
      %2184 = vmatprep.subr.bf16.mxu0 0
      %2185 = vmatpush1.bf16.msra.mxu0 %v1956
      %2186 = vmatprep.subr.bf16.mxu0 0
      %2187 = vmatpush1.bf16.msra.mxu0 %v1957
      %2188 = vmatprep.subr.bf16.mxu0 0
      %2189 = vmatpush1.bf16.msra.mxu0 %v1958
      %2190 = vmatprep.subr.bf16.mxu0 0
      %2191 = vmatpush1.bf16.msra.mxu0 %v1959
      %2192 = vmatprep.subr.bf16.mxu0 0
      %2193 = vmatpush1.bf16.msra.mxu0 %v1960
      %2194 = vmatprep.subr.bf16.mxu0 0
      %2195 = vmatpush1.bf16.msra.mxu0 %v1961
      %2196 = vmatprep.subr.bf16.mxu0 0
      %2197 = vmatpush1.bf16.msra.mxu0 %v1962
      %2198 = vmatprep.subr.bf16.mxu0 0
      %2199 = vmatpush1.bf16.msra.mxu0 %v1963
      %2200 = vmatprep.subr.bf16.mxu0 0
      %2201 = vmatpush1.bf16.msra.mxu0 %v1964
      %2202 = vmatprep.subr.bf16.mxu0 0
      %2203 = vmatpush1.bf16.msra.mxu0 %v1965
      %2204 = vmatprep.subr.bf16.mxu0 0
      %2205 = vmatpush1.bf16.msra.mxu0 %v1966
      %2206 = vmatprep.subr.bf16.mxu0 0
      %2207 = vmatpush1.bf16.msra.mxu0 %v1967
      %2208 = vmatprep.subr.bf16.mxu0 0
      %2209 = vmatpush1.bf16.msra.mxu0 %v1968
      %2210 = vmatprep.mubr.bf16.mxu0 %v1436
      %2211 = vmatmul.mubr.bf16.gmra.mrb[0].mxu0 %v1435
      %v2212 = vpop.f32.mrb[0].mxu0
      %v2213 = vadd.f32 %v2116, %v2212
      %v2214 = vpop.f32.mrb[0].mxu0
      %v2215 = vpop.f32.mrb[0].mxu0
      %v2216 = vadd.f32 %v2119, %v2215
      %v2217 = vpop.f32.mrb[0].mxu0
      %2218 = vmatprep.mubr.bf16.mxu0 %v1445
      %2219 = vmatmul.mubr.bf16.gmra.mrb[0].mxu0 %v1444
      %v2220 = vpop.f32.mrb[0].mxu0
      %v2221 = vadd.f32 %v2124, %v2220
      %v2222 = vpop.f32.mrb[0].mxu0
      %v2223 = vpop.f32.mrb[0].mxu0
      %v2224 = vadd.f32 %v2127, %v2223
      %v2225 = vpop.f32.mrb[0].mxu0
      %2226 = vmatprep.mubr.bf16.mxu0 %v1454
      %2227 = vmatmul.mubr.bf16.gmra.mrb[0].mxu0 %v1453
      %v2228 = vpop.f32.mrb[0].mxu0
      %v2229 = vadd.f32 %v2132, %v2228
      %v2230 = vpop.f32.mrb[0].mxu0
      %v2231 = vpop.f32.mrb[0].mxu0
      %v2232 = vadd.f32 %v2135, %v2231
      %v2233 = vpop.f32.mrb[0].mxu0
      %2234 = vmatprep.mubr.bf16.mxu0 %v1463
      %2235 = vmatmul.mubr.bf16.gmra.mrb[0].mxu0 %v1462
      %v2236 = vpop.f32.mrb[0].mxu0
      %v2237 = vadd.f32 %v2140, %v2236
      %v2238 = vpop.f32.mrb[0].mxu0
      %v2239 = vpop.f32.mrb[0].mxu0
      %v2240 = vadd.f32 %v2143, %v2239
      %v2241 = vpop.f32.mrb[0].mxu0
      %2242 = vmatprep.mubr.bf16.mxu0 %v1472
      %2243 = vmatmul.mubr.bf16.gmra.mrb[0].mxu0 %v1471
      %v2244 = vpop.f32.mrb[0].mxu0
      %v2245 = vadd.f32 %v2148, %v2244
      %v2246 = vpop.f32.mrb[0].mxu0
      %v2247 = vpop.f32.mrb[0].mxu0
      %v2248 = vadd.f32 %v2151, %v2247
      %v2249 = vpop.f32.mrb[0].mxu0
      %2250 = vmatprep.mubr.bf16.mxu0 %v1481
      %2251 = vmatmul.mubr.bf16.gmra.mrb[0].mxu0 %v1480
      %v2252 = vpop.f32.mrb[0].mxu0
      %v2253 = vadd.f32 %v2156, %v2252
      %v2254 = vpop.f32.mrb[0].mxu0
      %v2255 = vpop.f32.mrb[0].mxu0
      %v2256 = vadd.f32 %v2159, %v2255
      %v2257 = vpop.f32.mrb[0].mxu0
      %2258 = vmatprep.mubr.bf16.mxu0 %v1490
      %2259 = vmatmul.mubr.bf16.gmra.mrb[0].mxu0 %v1489
      %v2260 = vpop.f32.mrb[0].mxu0
      %v2261 = vadd.f32 %v2164, %v2260
      %v2262 = vpop.f32.mrb[0].mxu0
      %v2263 = vpop.f32.mrb[0].mxu0
      %v2264 = vadd.f32 %v2167, %v2263
      %v2265 = vpop.f32.mrb[0].mxu0
      %2266 = vmatprep.mubr.bf16.mxu0 %v1499
      %2267 = vmatmul.mubr.bf16.gmra.mrb[0].mxu0 %v1498
      %v2268 = vpop.f32.mrb[0].mxu0
      %v2269 = vadd.f32 %v2172, %v2268
      %v2270 = vpop.f32.mrb[0].mxu0
      %v2271 = vpop.f32.mrb[0].mxu0
      %v2272 = vadd.f32 %v2175, %v2271
      %v2273 = vpop.f32.mrb[0].mxu0
      %2274 = vdwg.mxu0
      %2275 = vmatprep.subr.bf16.mxu0 0
      %2276 = vmatpush1.bf16.msra.mxu0 %v1969
      %2277 = vmatprep.subr.bf16.mxu0 0
      %2278 = vmatpush1.bf16.msra.mxu0 %v1970
      %2279 = vmatprep.subr.bf16.mxu0 0
      %2280 = vmatpush1.bf16.msra.mxu0 %v1971
      %2281 = vmatprep.subr.bf16.mxu0 0
      %2282 = vmatpush1.bf16.msra.mxu0 %v1972
      %2283 = vmatprep.subr.bf16.mxu0 0
      %2284 = vmatpush1.bf16.msra.mxu0 %v1973
      %2285 = vmatprep.subr.bf16.mxu0 0
      %2286 = vmatpush1.bf16.msra.mxu0 %v1974
      %2287 = vmatprep.subr.bf16.mxu0 0
      %2288 = vmatpush1.bf16.msra.mxu0 %v1975
      %2289 = vmatprep.subr.bf16.mxu0 0
      %2290 = vmatpush1.bf16.msra.mxu0 %v1976
      %2291 = vmatprep.subr.bf16.mxu0 0
      %2292 = vmatpush1.bf16.msra.mxu0 %v1977
      %2293 = vmatprep.subr.bf16.mxu0 0
      %2294 = vmatpush1.bf16.msra.mxu0 %v1978
      %2295 = vmatprep.subr.bf16.mxu0 0
      %2296 = vmatpush1.bf16.msra.mxu0 %v1979
      %2297 = vmatprep.subr.bf16.mxu0 0
      %2298 = vmatpush1.bf16.msra.mxu0 %v1980
      %2299 = vmatprep.subr.bf16.mxu0 0
      %2300 = vmatpush1.bf16.msra.mxu0 %v1981
      %2301 = vmatprep.subr.bf16.mxu0 0
      %2302 = vmatpush1.bf16.msra.mxu0 %v1982
      %2303 = vmatprep.subr.bf16.mxu0 0
      %2304 = vmatpush1.bf16.msra.mxu0 %v1983
      %2305 = vmatprep.subr.bf16.mxu0 0
      %2306 = vmatpush1.bf16.msra.mxu0 %v1984
      %2307 = vmatprep.mubr.bf16.mxu0 %v1438
      %2308 = vmatmul.mubr.bf16.gmra.mrb[0].mxu0 %v1437
      %v2309 = vpop.f32.mrb[0].mxu0
      %v2310 = vadd.f32 %v2213, %v2309
      %v2311 = vpop.f32.mrb[0].mxu0
      %v2312 = vpop.f32.mrb[0].mxu0
      %v2313 = vadd.f32 %v2216, %v2312
      %v2314 = vpop.f32.mrb[0].mxu0
      %2315 = vmatprep.mubr.bf16.mxu0 %v1447
      %2316 = vmatmul.mubr.bf16.gmra.mrb[0].mxu0 %v1446
      %v2317 = vpop.f32.mrb[0].mxu0
      %v2318 = vadd.f32 %v2221, %v2317
      %v2319 = vpop.f32.mrb[0].mxu0
      %v2320 = vpop.f32.mrb[0].mxu0
      %v2321 = vadd.f32 %v2224, %v2320
      %v2322 = vpop.f32.mrb[0].mxu0
      %2323 = vmatprep.mubr.bf16.mxu0 %v1456
      %2324 = vmatmul.mubr.bf16.gmra.mrb[0].mxu0 %v1455
      %v2325 = vpop.f32.mrb[0].mxu0
      %v2326 = vadd.f32 %v2229, %v2325
      %v2327 = vpop.f32.mrb[0].mxu0
      %v2328 = vpop.f32.mrb[0].mxu0
      %v2329 = vadd.f32 %v2232, %v2328
      %v2330 = vpop.f32.mrb[0].mxu0
      %2331 = vmatprep.mubr.bf16.mxu0 %v1465
      %2332 = vmatmul.mubr.bf16.gmra.mrb[0].mxu0 %v1464
      %v2333 = vpop.f32.mrb[0].mxu0
      %v2334 = vadd.f32 %v2237, %v2333
      %v2335 = vpop.f32.mrb[0].mxu0
      %v2336 = vpop.f32.mrb[0].mxu0
      %v2337 = vadd.f32 %v2240, %v2336
      %v2338 = vpop.f32.mrb[0].mxu0
      %2339 = vmatprep.mubr.bf16.mxu0 %v1474
      %2340 = vmatmul.mubr.bf16.gmra.mrb[0].mxu0 %v1473
      %v2341 = vpop.f32.mrb[0].mxu0
      %v2342 = vadd.f32 %v2245, %v2341
      %v2343 = vpop.f32.mrb[0].mxu0
      %v2344 = vpop.f32.mrb[0].mxu0
      %v2345 = vadd.f32 %v2248, %v2344
      %v2346 = vpop.f32.mrb[0].mxu0
      %2347 = vmatprep.mubr.bf16.mxu0 %v1483
      %2348 = vmatmul.mubr.bf16.gmra.mrb[0].mxu0 %v1482
      %v2349 = vpop.f32.mrb[0].mxu0
      %v2350 = vadd.f32 %v2253, %v2349
      %v2351 = vpop.f32.mrb[0].mxu0
      %v2352 = vpop.f32.mrb[0].mxu0
      %v2353 = vadd.f32 %v2256, %v2352
      %v2354 = vpop.f32.mrb[0].mxu0
      %2355 = vmatprep.mubr.bf16.mxu0 %v1492
      %2356 = vmatmul.mubr.bf16.gmra.mrb[0].mxu0 %v1491
      %v2357 = vpop.f32.mrb[0].mxu0
      %v2358 = vadd.f32 %v2261, %v2357
      %v2359 = vpop.f32.mrb[0].mxu0
      %v2360 = vpop.f32.mrb[0].mxu0
      %v2361 = vadd.f32 %v2264, %v2360
      %v2362 = vpop.f32.mrb[0].mxu0
      %2363 = vmatprep.mubr.bf16.mxu0 %v1501
      %2364 = vmatmul.mubr.bf16.gmra.mrb[0].mxu0 %v1500
      %v2365 = vpop.f32.mrb[0].mxu0
      %v2366 = vadd.f32 %v2269, %v2365
      %v2367 = vpop.f32.mrb[0].mxu0
      %v2368 = vpop.f32.mrb[0].mxu0
      %v2369 = vadd.f32 %v2272, %v2368
      %v2370 = vpop.f32.mrb[0].mxu0
      %2371 = vdwg.mxu0
      %2372 = vmatprep.subr.bf16.mxu0 0
      %2373 = vmatpush1.bf16.msra.mxu0 %v1985
      %2374 = vmatprep.subr.bf16.mxu0 0
      %2375 = vmatpush1.bf16.msra.mxu0 %v1986
      %2376 = vmatprep.subr.bf16.mxu0 0
      %2377 = vmatpush1.bf16.msra.mxu0 %v1987
      %2378 = vmatprep.subr.bf16.mxu0 0
      %2379 = vmatpush1.bf16.msra.mxu0 %v1988
      %2380 = vmatprep.subr.bf16.mxu0 0
      %2381 = vmatpush1.bf16.msra.mxu0 %v1989
      %2382 = vmatprep.subr.bf16.mxu0 0
      %2383 = vmatpush1.bf16.msra.mxu0 %v1990
      %2384 = vmatprep.subr.bf16.mxu0 0
      %2385 = vmatpush1.bf16.msra.mxu0 %v1991
      %2386 = vmatprep.subr.bf16.mxu0 0
      %2387 = vmatpush1.bf16.msra.mxu0 %v1992
      %2388 = vmatprep.subr.bf16.mxu0 0
      %2389 = vmatpush1.bf16.msra.mxu0 %v1993
      %2390 = vmatprep.subr.bf16.mxu0 0
      %2391 = vmatpush1.bf16.msra.mxu0 %v1994
      %2392 = vmatprep.subr.bf16.mxu0 0
      %2393 = vmatpush1.bf16.msra.mxu0 %v1995
      %2394 = vmatprep.subr.bf16.mxu0 0
      %2395 = vmatpush1.bf16.msra.mxu0 %v1996
      %2396 = vmatprep.subr.bf16.mxu0 0
      %2397 = vmatpush1.bf16.msra.mxu0 %v1997
      %2398 = vmatprep.subr.bf16.mxu0 0
      %2399 = vmatpush1.bf16.msra.mxu0 %v1998
      %2400 = vmatprep.subr.bf16.mxu0 0
      %2401 = vmatpush1.bf16.msra.mxu0 %v1999
      %2402 = vmatprep.subr.bf16.mxu0 0
      %2403 = vmatpush1.bf16.msra.mxu0 %v2000
      %2404 = vmatprep.mubr.bf16.mxu0 %v1440
      %2405 = vmatmul.mubr.bf16.gmra.mrb[0].mxu0 %v1439
      %v2406 = vpop.f32.mrb[0].mxu0
      %v2407 = vadd.f32 %v2310, %v2406
      %v2408 = vpop.f32.mrb[0].mxu0
      %v2409 = vpop.f32.mrb[0].mxu0
      %v2410 = vadd.f32 %v2313, %v2409
      %v2411 = vpop.f32.mrb[0].mxu0
      %2412 = vmatprep.mubr.bf16.mxu0 %v1449
      %2413 = vmatmul.mubr.bf16.gmra.mrb[0].mxu0 %v1448
      %v2414 = vpop.f32.mrb[0].mxu0
      %v2415 = vadd.f32 %v2318, %v2414
      %v2416 = vpop.f32.mrb[0].mxu0
      %v2417 = vpop.f32.mrb[0].mxu0
      %v2418 = vadd.f32 %v2321, %v2417
      %v2419 = vpop.f32.mrb[0].mxu0
      %2420 = vmatprep.mubr.bf16.mxu0 %v1458
      %2421 = vmatmul.mubr.bf16.gmra.mrb[0].mxu0 %v1457
      %v2422 = vpop.f32.mrb[0].mxu0
      %v2423 = vadd.f32 %v2326, %v2422
      %v2424 = vpop.f32.mrb[0].mxu0
      %v2425 = vpop.f32.mrb[0].mxu0
      %v2426 = vadd.f32 %v2329, %v2425
      %v2427 = vpop.f32.mrb[0].mxu0
      %2428 = vmatprep.mubr.bf16.mxu0 %v1467
      %2429 = vmatmul.mubr.bf16.gmra.mrb[0].mxu0 %v1466
      %v2430 = vpop.f32.mrb[0].mxu0
      %v2431 = vadd.f32 %v2334, %v2430
      %v2432 = vpop.f32.mrb[0].mxu0
      %v2433 = vpop.f32.mrb[0].mxu0
      %v2434 = vadd.f32 %v2337, %v2433
      %v2435 = vpop.f32.mrb[0].mxu0
      %2436 = vmatprep.mubr.bf16.mxu0 %v1476
      %2437 = vmatmul.mubr.bf16.gmra.mrb[0].mxu0 %v1475
      %v2438 = vpop.f32.mrb[0].mxu0
      %v2439 = vadd.f32 %v2342, %v2438
      %v2440 = vpop.f32.mrb[0].mxu0
      %v2441 = vpop.f32.mrb[0].mxu0
      %v2442 = vadd.f32 %v2345, %v2441
      %v2443 = vpop.f32.mrb[0].mxu0
      %2444 = vmatprep.mubr.bf16.mxu0 %v1485
      %2445 = vmatmul.mubr.bf16.gmra.mrb[0].mxu0 %v1484
      %v2446 = vpop.f32.mrb[0].mxu0
      %v2447 = vadd.f32 %v2350, %v2446
      %v2448 = vpop.f32.mrb[0].mxu0
      %v2449 = vpop.f32.mrb[0].mxu0
      %v2450 = vadd.f32 %v2353, %v2449
      %v2451 = vpop.f32.mrb[0].mxu0
      %2452 = vmatprep.mubr.bf16.mxu0 %v1494
      %2453 = vmatmul.mubr.bf16.gmra.mrb[0].mxu0 %v1493
      %v2454 = vpop.f32.mrb[0].mxu0
      %v2455 = vadd.f32 %v2358, %v2454
      %v2456 = vpop.f32.mrb[0].mxu0
      %v2457 = vpop.f32.mrb[0].mxu0
      %v2458 = vadd.f32 %v2361, %v2457
      %v2459 = vpop.f32.mrb[0].mxu0
      %2460 = vmatprep.mubr.bf16.mxu0 %v1503
      %2461 = vmatmul.mubr.bf16.gmra.mrb[0].mxu0 %v1502
      %v2462 = vpop.f32.mrb[0].mxu0
      %v2463 = vadd.f32 %v2366, %v2462
      %v2464 = vpop.f32.mrb[0].mxu0
      %v2465 = vpop.f32.mrb[0].mxu0
      %v2466 = vadd.f32 %v2369, %v2465
      %v2467 = vpop.f32.mrb[0].mxu0
      %2468 = vdwg.mxu0
      %2469 = vmatprep.subr.bf16.mxu0 0
      %2470 = vmatpush1.bf16.msra.mxu0 %v2001
      %2471 = vmatprep.subr.bf16.mxu0 0
      %2472 = vmatpush1.bf16.msra.mxu0 %v2002
      %2473 = vmatprep.subr.bf16.mxu0 0
      %2474 = vmatpush1.bf16.msra.mxu0 %v2003
      %2475 = vmatprep.subr.bf16.mxu0 0
      %2476 = vmatpush1.bf16.msra.mxu0 %v2004
      %2477 = vmatprep.subr.bf16.mxu0 0
      %2478 = vmatpush1.bf16.msra.mxu0 %v2005
      %2479 = vmatprep.subr.bf16.mxu0 0
      %2480 = vmatpush1.bf16.msra.mxu0 %v2006
      %2481 = vmatprep.subr.bf16.mxu0 0
      %2482 = vmatpush1.bf16.msra.mxu0 %v2007
      %2483 = vmatprep.subr.bf16.mxu0 0
      %2484 = vmatpush1.bf16.msra.mxu0 %v2008
      %2485 = vmatprep.subr.bf16.mxu0 0
      %2486 = vmatpush1.bf16.msra.mxu0 0
      %2487 = vmatprep.subr.bf16.mxu0 0
      %2488 = vmatpush1.bf16.msra.mxu0 0
      %2489 = vmatprep.subr.bf16.mxu0 0
      %2490 = vmatpush1.bf16.msra.mxu0 0
      %2491 = vmatprep.subr.bf16.mxu0 0
      %2492 = vmatpush1.bf16.msra.mxu0 0
      %2493 = vmatprep.subr.bf16.mxu0 0
      %2494 = vmatpush1.bf16.msra.mxu0 0
      %2495 = vmatprep.subr.bf16.mxu0 0
      %2496 = vmatpush1.bf16.msra.mxu0 0
      %2497 = vmatprep.subr.bf16.mxu0 0
      %2498 = vmatpush1.bf16.msra.mxu0 0
      %2499 = vmatprep.subr.bf16.mxu0 0
      %2500 = vmatpush1.bf16.msra.mxu0 0
      %2501 = vmatprep.mubr.bf16.mxu0 0
      %2502 = vmatmul.mubr.bf16.gmra.mrb[0].mxu0 %v1441
      %v2503 = vpop.f32.mrb[0].mxu0
      %v2504 = vadd.f32 %v2407, %v2503
      %v2505 = vpop.f32.mrb[0].mxu0
      %v2506 = vpop.f32.mrb[0].mxu0
      %v2507 = vadd.f32 %v2410, %v2506
      %v2508 = vpop.f32.mrb[0].mxu0
      %2509 = vmatprep.mubr.bf16.mxu0 0
      %2510 = vmatmul.mubr.bf16.gmra.mrb[0].mxu0 %v1450
      %v2511 = vpop.f32.mrb[0].mxu0
      %v2512 = vadd.f32 %v2415, %v2511
      %v2513 = vpop.f32.mrb[0].mxu0
      %v2514 = vpop.f32.mrb[0].mxu0
      %v2515 = vadd.f32 %v2418, %v2514
      %v2516 = vpop.f32.mrb[0].mxu0
      %2517 = vmatprep.mubr.bf16.mxu0 0
      %2518 = vmatmul.mubr.bf16.gmra.mrb[0].mxu0 %v1459
      %v2519 = vpop.f32.mrb[0].mxu0
      %v2520 = vadd.f32 %v2423, %v2519
      %v2521 = vpop.f32.mrb[0].mxu0
      %v2522 = vpop.f32.mrb[0].mxu0
      %v2523 = vadd.f32 %v2426, %v2522
      %v2524 = vpop.f32.mrb[0].mxu0
      %2525 = vmatprep.mubr.bf16.mxu0 0
      %2526 = vmatmul.mubr.bf16.gmra.mrb[0].mxu0 %v1468
      %v2527 = vpop.f32.mrb[0].mxu0
      %v2528 = vadd.f32 %v2431, %v2527
      %v2529 = vpop.f32.mrb[0].mxu0
      %v2530 = vpop.f32.mrb[0].mxu0
      %v2531 = vadd.f32 %v2434, %v2530
      %v2532 = vpop.f32.mrb[0].mxu0
      %2533 = vmatprep.mubr.bf16.mxu0 0
      %2534 = vmatmul.mubr.bf16.gmra.mrb[0].mxu0 %v1477
      %v2535 = vpop.f32.mrb[0].mxu0
      %v2536 = vadd.f32 %v2439, %v2535
      %v2537 = vpop.f32.mrb[0].mxu0
      %v2538 = vpop.f32.mrb[0].mxu0
      %v2539 = vadd.f32 %v2442, %v2538
      %v2540 = vpop.f32.mrb[0].mxu0
      %2541 = vmatprep.mubr.bf16.mxu0 0
      %2542 = vmatmul.mubr.bf16.gmra.mrb[0].mxu0 %v1486
      %v2543 = vpop.f32.mrb[0].mxu0
      %v2544 = vadd.f32 %v2447, %v2543
      %v2545 = vpop.f32.mrb[0].mxu0
      %v2546 = vpop.f32.mrb[0].mxu0
      %v2547 = vadd.f32 %v2450, %v2546
      %v2548 = vpop.f32.mrb[0].mxu0
      %2549 = vmatprep.mubr.bf16.mxu0 0
      %2550 = vmatmul.mubr.bf16.gmra.mrb[0].mxu0 %v1495
      %v2551 = vpop.f32.mrb[0].mxu0
      %v2552 = vadd.f32 %v2455, %v2551
      %v2553 = vpop.f32.mrb[0].mxu0
      %v2554 = vpop.f32.mrb[0].mxu0
      %v2555 = vadd.f32 %v2458, %v2554
      %v2556 = vpop.f32.mrb[0].mxu0
      %2557 = vmatprep.mubr.bf16.mxu0 0
      %2558 = vmatmul.mubr.bf16.gmra.mrb[0].mxu0 %v1504
      %v2559 = vpop.f32.mrb[0].mxu0
      %v2560 = vadd.f32 %v2463, %v2559
      %v2561 = vpop.f32.mrb[0].mxu0
      %v2562 = vpop.f32.mrb[0].mxu0
      %v2563 = vadd.f32 %v2466, %v2562
      %v2564 = vpop.f32.mrb[0].mxu0
      %2565 = vdwg.mxu0
      %v2566 = vadd.f32 %v2504, %v2507
      %v2567 = vadd.f32 %v2566, %v2512
      %v2568 = vadd.f32 %v2567, %v2515
      %v2569 = vadd.f32 %v2568, %v2520
      %v2570 = vadd.f32 %v2569, %v2523
      %v2571 = vadd.f32 %v2570, %v2528
      %v2572 = vadd.f32 %v2571, %v2531
      %v2573 = vadd.f32 %v2572, %v2536
      %v2574 = vadd.f32 %v2573, %v2539
      %v2575 = vadd.f32 %v2574, %v2544
      %v2576 = vadd.f32 %v2575, %v2547
      %v2577 = vadd.f32 %v2576, %v2552
      %v2578 = vadd.f32 %v2577, %v2555
      %v2579 = vadd.f32 %v2578, %v2560
      %v2580 = vadd.f32 %v2579, %v2563
      %v2581 = vrot.slane %v2580, 4
      %v2582 = vadd.f32 %v2580, %v2581
      %v2583 = vrot.slane %v2582, 2
      %v2584 = vadd.f32 %v2582, %v2583
      %v2585 = vrot.slane %v2584, 1
      %v2586 = vadd.f32 %v2584, %v2585
      %2587 = vst [vmem:[%s227] sm:$0x1] %v2586
      %v2588 = vmul.f32 %v2504, %v2504
      %v2589 = vmul.f32 %v2507, %v2507
      %v2590 = vmul.f32 %v2512, %v2512
      %v2591 = vmul.f32 %v2515, %v2515
      %v2592 = vmul.f32 %v2520, %v2520
      %v2593 = vmul.f32 %v2523, %v2523
      %v2594 = vmul.f32 %v2528, %v2528
      %v2595 = vmul.f32 %v2531, %v2531
      %v2596 = vmul.f32 %v2536, %v2536
      %v2597 = vmul.f32 %v2539, %v2539
      %v2598 = vmul.f32 %v2544, %v2544
      %v2599 = vmul.f32 %v2547, %v2547
      %v2600 = vmul.f32 %v2552, %v2552
      %v2601 = vmul.f32 %v2555, %v2555
      %v2602 = vmul.f32 %v2560, %v2560
      %v2603 = vmul.f32 %v2563, %v2563
      %v2604 = vadd.f32 %v2588, %v2589
      %v2605 = vadd.f32 %v2604, %v2590
      %v2606 = vadd.f32 %v2605, %v2591
      %v2607 = vadd.f32 %v2606, %v2592
      %v2608 = vadd.f32 %v2607, %v2593
      %v2609 = vadd.f32 %v2608, %v2594
      %v2610 = vadd.f32 %v2609, %v2595
      %v2611 = vadd.f32 %v2610, %v2596
      %v2612 = vadd.f32 %v2611, %v2597
      %v2613 = vadd.f32 %v2612, %v2598
      %v2614 = vadd.f32 %v2613, %v2599
      %v2615 = vadd.f32 %v2614, %v2600
      %v2616 = vadd.f32 %v2615, %v2601
      %v2617 = vadd.f32 %v2616, %v2602
      %v2618 = vadd.f32 %v2617, %v2603
      %v2619 = vrot.slane %v2618, 4
      %v2620 = vadd.f32 %v2618, %v2619
      %v2621 = vrot.slane %v2620, 2
      %v2622 = vadd.f32 %v2620, %v2621
      %v2623 = vrot.slane %v2622, 1
      %v2624 = vadd.f32 %v2622, %v2623
      %2625 = vst [vmem:[%s227 + $0x1] sm:$0x1] %v2624
      %v2626 = vpack.c.bf16 %v2507, %v2504
      %v2627 = vpack.c.bf16 %v2515, %v2512
      %v2628 = vpack.c.bf16 %v2523, %v2520
      %v2629 = vpack.c.bf16 %v2531, %v2528
      %v2630 = vpack.c.bf16 %v2539, %v2536
      %v2631 = vpack.c.bf16 %v2547, %v2544
      %v2632 = vpack.c.bf16 %v2555, %v2552
      %v2633 = vpack.c.bf16 %v2563, %v2560
      %v2642 = vunpack.c.l.b16 %v2626
      %v2643 = vunpack.c.h.b16 %v2626
      %v2644 = vunpack.c.l.b16 %v2627
      %v2645 = vunpack.c.h.b16 %v2627
      %v2646 = vunpack.c.l.b16 %v2628
      %v2647 = vunpack.c.h.b16 %v2628
      %v2648 = vunpack.c.l.b16 %v2629
      %v2649 = vunpack.c.h.b16 %v2629
      %v2650 = vunpack.c.l.b16 %v2630
      %v2651 = vunpack.c.h.b16 %v2630
      %v2652 = vunpack.c.l.b16 %v2631
      %v2653 = vunpack.c.h.b16 %v2631
      %v2654 = vunpack.c.l.b16 %v2632
      %v2655 = vunpack.c.h.b16 %v2632
      %v2656 = vunpack.c.l.b16 %v2633
      %v2657 = vunpack.c.h.b16 %v2633
      %v2658 = vpack.c.b16 %v2642, %v2642
      %v2659 = vpack.c.b16 %v2643, %v2643
      %v2660 = vpack.c.b16 %v2644, %v2644
      %v2661 = vpack.c.b16 %v2645, %v2645
      %v2662 = vpack.c.b16 %v2646, %v2646
      %v2663 = vpack.c.b16 %v2647, %v2647
      %v2664 = vpack.c.b16 %v2648, %v2648
      %v2665 = vpack.c.b16 %v2649, %v2649
      %v2666 = vpack.c.b16 %v2650, %v2650
      %v2667 = vpack.c.b16 %v2651, %v2651
      %v2668 = vpack.c.b16 %v2652, %v2652
      %v2669 = vpack.c.b16 %v2653, %v2653
      %v2670 = vpack.c.b16 %v2654, %v2654
      %v2671 = vpack.c.b16 %v2655, %v2655
      %v2672 = vpack.c.b16 %v2656, %v2656
      %v2673 = vpack.c.b16 %v2657, %v2657
      %2690 = vst [vmem:[%s219] sm:$0xf] %v2658
      %2691 = vst [vmem:[%s219 + $0x4] sm:$0xf] %v2659
      %2692 = vst [vmem:[%s219 + $0x8] sm:$0xf] %v2660
      %2693 = vst [vmem:[%s219 + $0xc] sm:$0xf] %v2661
      %2694 = vst [vmem:[%s219 + $0x10] sm:$0xf] %v2662
      %2695 = vst [vmem:[%s219 + $0x14] sm:$0xf] %v2663
      %2696 = vst [vmem:[%s219 + $0x18] sm:$0xf] %v2664
      %2697 = vst [vmem:[%s219 + $0x1c] sm:$0xf] %v2665
      %2698 = vst [vmem:[%s219 + $0x20] sm:$0xf] %v2666
      %2699 = vst [vmem:[%s219 + $0x24] sm:$0xf] %v2667
      %2700 = vst [vmem:[%s219 + $0x28] sm:$0xf] %v2668
      %2701 = vst [vmem:[%s219 + $0x2c] sm:$0xf] %v2669
      %2702 = vst [vmem:[%s219 + $0x30] sm:$0xf] %v2670
      %2703 = vst [vmem:[%s219 + $0x34] sm:$0xf] %v2671
      %2704 = vst [vmem:[%s219 + $0x38] sm:$0xf] %v2672
      %2705 = vst [vmem:[%s219 + $0x3c] sm:$0xf] %v2673
      %p2706 = scmp.lt.s32.totalorder %s19, 1
      %s2707 = scalar_select %p2706, %s19, 1
      %p2708 = scmp.lt.s32.totalorder %s20, 1
      %s2709 = scalar_select %p2708, %s20, 1
      %s2710 = smul.addr %s2709, 16
      %s2711 = smul.addr %s2707, 32
      %s2712 = sadd.s32 %s2710, %s2711
      %s2713 = smul.addr %s2712, 4
      %s2714 = scalar_lea.vmem %s2, %s2713
      %p2715 = scmp.lt.s32.totalorder %s19, 1
      %s2716 = scalar_select %p2715, %s19, 1
      %p2717 = scmp.lt.s32.totalorder %s20, 1
      %s2718 = scalar_select %p2717, %s20, 1
      %s2719 = smul.addr %s2716, 2
      %s2720 = sadd.s32 %s2718, %s2719
      %s2721 = smul.addr %s2720, 2
      %s2722 = scalar_lea.vmem %s3, %s2721
      // Predicated region
      $region29: #{unet_block.3} parent=27 // pred_check
        %p2723 = pneg %p96
      $region30: #{unet_block.3} parent=27 // pred_check_branch
        %2725 = sbr.rel (%p2723) target = $region32
      $region31: #{unet_block.3} parent=27 // pred_region
        _
      $region32: #{unet_block.3} parent=27 // pred_fallthru
        _
      // Predicated region
      $region33: #{unet_block.3} parent=27 // pred_check
        %p2726 = pneg %p124
      $region34: #{unet_block.3} parent=27 // pred_check_branch
        %2728 = sbr.rel (%p2726) target = $region36
      $region35: #{unet_block.3} parent=27 // pred_region
        _
      $region36: #{unet_block.3} parent=27 // pred_fallthru
        _
    $region28: #{unet_block.3} parent=5 // pred_fallthru
      _
    %p2729 = scmp.le.s32.totalorder 2, %s10
    // Predicated region
    $region37: #{unet_block.3} parent=5 // pred_check
      %p2730 = pneg %p2729
    $region38: #{unet_block.3} parent=5 // pred_check_branch
      %2732 = sbr.rel (%p2730) target = $region40
    $region39: #{unet_block.3} parent=5 // pred_region
      %s2733 = ssub.s32 %s10, 2
      // Predicated region
      $region41: #{unet_block.3} parent=39 // pred_check
        %p2734 = pneg %p102
      $region42: #{unet_block.3} parent=39 // pred_check_branch
        %2736 = sbr.rel (%p2734) target = $region44
      $region43: #{unet_block.3} parent=39 // pred_region
        %p2737 = scmp.lt.s32.totalorder %s21, 1
        %s2738 = scalar_select %p2737, %s21, 1
        %p2739 = scmp.lt.s32.totalorder %s22, 1
        %s2740 = scalar_select %p2739, %s22, 1
        %s2741 = smul.addr %s2740, 16
        %s2742 = smul.addr %s2738, 32
        %s2743 = sadd.s32 %s2741, %s2742
        %s2744 = smul.addr %s2743, 4
        %s2745 = scalar_lea.vmem %s2, %s2744
      $region44: #{unet_block.3} parent=39 // pred_fallthru
        _
      // Predicated region
      $region45: #{unet_block.3} parent=39 // pred_check
        %p2746 = pneg %p130
      $region46: #{unet_block.3} parent=39 // pred_check_branch
        %2748 = sbr.rel (%p2746) target = $region48
      $region47: #{unet_block.3} parent=39 // pred_region
        %p2749 = scmp.lt.s32.totalorder %s21, 1
        %s2750 = scalar_select %p2749, %s21, 1
        %p2751 = scmp.lt.s32.totalorder %s22, 1
        %s2752 = scalar_select %p2751, %s22, 1
        %s2753 = smul.addr %s2750, 2
        %s2754 = sadd.s32 %s2752, %s2753
        %s2755 = smul.addr %s2754, 2
        %s2756 = scalar_lea.vmem %s3, %s2755
      $region48: #{unet_block.3} parent=39 // pred_fallthru
        _
    $region40: #{unet_block.3} parent=5 // pred_fallthru
      _
  $region6: #{unet_block.3} parent=0 // loop_footer
    %s14 = sadd.s32 1, %s10
  $region7: #{unet_block.3} parent=0 // loop_footer_branch
    %9 = sbr.rel target = $region3
  $region8: #{unet_block.3} parent=0 // loop_exit
    _

// kernel: unet_block.4
$region0: #{unet_block.4}
  #allocation0 [shape = 'u32[]', space=smem, size = 0x4, offset = 0x4, fixed_abs, tag = 'smem constant byte address 0x4 - core index']
  #allocation1 [shape = 'u32[144,128]{1,0:T(1,128)}', space=vmem, size = 0x12000, scoped, tag = 'internal scratch']
  #allocation2 [shape = 'bf16[8,16,1152]{2,1,0:T(16,128)(2,1)}', space=vmem, size = 0x48000, scoped, tag = 'scratch operand']
  #allocation3 [shape = 'bf16[10,18,128]{2,1,0:T(8,128)(2,1)}', space=vmem, size = 0xf000, scoped, tag = 'scratch operand']
  %s0 = inlined_call_operand.vmem [shape: bf16[2,2,10,18,128], index: 0, kind: input, shape index: {}]
  %s1 = inlined_call_operand.vmem [shape: bf16[1152,128], index: 1, kind: input, shape index: {}]
  %s2 = inlined_call_operand.vmem [shape: f32[1,128], index: 2, kind: input, shape index: {}]
  %s3 = inlined_call_operand.vmem [shape: f32[1,128], index: 3, kind: input, shape index: {}]
  %s4 = inlined_call_operand.vmem [shape: bf16[2,2,8,16,128], index: 4, kind: output, shape index: {0}]
  %s5 = inlined_call_operand.vmem [shape: f32[2,2,2,128], index: 5, kind: output, shape index: {1}]
  %6 = xla_tuple %s4, %s5
  %s7 = sld [smem:[#allocation0]]
  $region57: #{unet_block.4} parent=0
    _
  %s9 = ssub.s32 1, %s7
  %s10 = scalar_select 0, %s9, %s7
  loop: start=0, step=1, limit=6
  $region2: #{unet_block.4} parent=0 // loop_pre_header
    _
  $region3: #{unet_block.4} parent=0 // loop_header
    %s12 = sphi 0, %s16
    %p13 = scmp.ge.s32.totalorder %s12, 6
    %s19 = sphi 0, %s31
    %s20 = sphi 0, %s27
    %s21 = sphi 0, %s19
    %s22 = sphi 0, %s20
    %s23 = sphi 0, %s21
    %s24 = sphi 0, %s22
    %s36 = sphi 0, %s38
    %s39 = sphi 0, %s36
    %s40 = sphi 0, %s39
    %s56 = sphi 0, %s40
    %s60 = sphi 0, %s60
    %s62 = sphi 0, %s60
    %s63 = sphi 0, %s62
    %s77 = sphi 0, %s63
    %s81 = sphi 0, %s81
    %s83 = sphi 0, %s81
    %s84 = sphi 0, %s83
    %s98 = sphi 0, %s84
    %s102 = sphi 0, %s102
    %s104 = sphi 0, %s102
    %s105 = sphi 0, %s104
    %s119 = sphi 0, %s105
    %s127 = sphi 0, %s129
    %s130 = sphi 0, %s127
    %s131 = sphi 0, %s130
    %s147 = sphi 0, %s131
    %s155 = sphi 0, %s157
    %s158 = sphi 0, %s155
    %s159 = sphi 0, %s158
    %s175 = sphi 0, %s159
  $region4: #{unet_block.4} parent=0 // loop_header_branch
    %15 = sbr.rel (%p13) target = $region8
  $region5: #{unet_block.4} parent=0 // loop_body
    %s17 = ssub.s32 %s12, 1
    %s18 = ssub.s32 %s12, 2
    %s25 = sadd.s32 1, %s20
    %p26 = scmp.ge.s32.totalorder %s25, 2
    %s27 = scalar_select %p26, 0, %s25
    %s28 = sadd.s32 1, %s19
    %s29 = scalar_select %p26, %s28, %s19
    %p30 = scmp.ge.s32.totalorder %s29, 2
    %s31 = scalar_select %p30, 0, %s29
    %s32 = ssub.s32 %s19, %s31
    %s33 = ssub.s32 %s20, %s27
    %s34 = sor.u32 %s32, %s33
    %p35 = scmp.eq.s32.totalorder %s34, 0
    %s37 = sadd.s32 %s36, 1
    %s38 = scalar_select %p35, %s36, %s37
    %p41 = pneg %p35
    %p42 = scmp.eq.s32.totalorder %s12, 3
    %p43 = por %p41, %p42
    %p44 = scmp.ne.s32.totalorder %s36, %s39
    %p45 = scmp.eq.s32.totalorder %s12, 0
    %p46 = por %p44, %p45
    %p47 = scmp.ne.s32.totalorder %s36, %s39
    %p48 = scmp.eq.s32.totalorder %s17, 3
    %p49 = por %p47, %p48
    %p50 = scmp.ne.s32.totalorder %s39, %s40
    %p51 = scmp.eq.s32.totalorder %s17, 0
    %p52 = por %p50, %p51
    %p53 = scmp.ne.s32.totalorder %s39, %s40
    %p54 = scmp.eq.s32.totalorder %s18, 3
    %p55 = por %p53, %p54
    %p57 = scmp.ne.s32.totalorder %s40, %s56
    %p58 = scmp.eq.s32.totalorder %s18, 0
    %p59 = por %p57, %p58
    %s61 = sadd.s32 %s60, 1
    %p64 = scmp.eq.s32.totalorder %s12, 3
    %p65 = scmp.ne.s32.totalorder %s60, %s62
    %p66 = scmp.eq.s32.totalorder %s12, 0
    %p67 = por %p65, %p66
    %p68 = scmp.ne.s32.totalorder %s60, %s62
    %p69 = scmp.eq.s32.totalorder %s17, 3
    %p70 = por %p68, %p69
    %p71 = scmp.ne.s32.totalorder %s62, %s63
    %p72 = scmp.eq.s32.totalorder %s17, 0
    %p73 = por %p71, %p72
    %p74 = scmp.ne.s32.totalorder %s62, %s63
    %p75 = scmp.eq.s32.totalorder %s18, 3
    %p76 = por %p74, %p75
    %p78 = scmp.ne.s32.totalorder %s63, %s77
    %p79 = scmp.eq.s32.totalorder %s18, 0
    %p80 = por %p78, %p79
    %s82 = sadd.s32 %s81, 1
    %p85 = scmp.eq.s32.totalorder %s12, 3
    %p86 = scmp.ne.s32.totalorder %s81, %s83
    %p87 = scmp.eq.s32.totalorder %s12, 0
    %p88 = por %p86, %p87
    %p89 = scmp.ne.s32.totalorder %s81, %s83
    %p90 = scmp.eq.s32.totalorder %s17, 3
    %p91 = por %p89, %p90
    %p92 = scmp.ne.s32.totalorder %s83, %s84
    %p93 = scmp.eq.s32.totalorder %s17, 0
    %p94 = por %p92, %p93
    %p95 = scmp.ne.s32.totalorder %s83, %s84
    %p96 = scmp.eq.s32.totalorder %s18, 3
    %p97 = por %p95, %p96
    %p99 = scmp.ne.s32.totalorder %s84, %s98
    %p100 = scmp.eq.s32.totalorder %s18, 0
    %p101 = por %p99, %p100
    %s103 = sadd.s32 %s102, 1
    %p106 = scmp.eq.s32.totalorder %s12, 3
    %p107 = scmp.ne.s32.totalorder %s102, %s104
    %p108 = scmp.eq.s32.totalorder %s12, 0
    %p109 = por %p107, %p108
    %p110 = scmp.ne.s32.totalorder %s102, %s104
    %p111 = scmp.eq.s32.totalorder %s17, 3
    %p112 = por %p110, %p111
    %p113 = scmp.ne.s32.totalorder %s104, %s105
    %p114 = scmp.eq.s32.totalorder %s17, 0
    %p115 = por %p113, %p114
    %p116 = scmp.ne.s32.totalorder %s104, %s105
    %p117 = scmp.eq.s32.totalorder %s18, 3
    %p118 = por %p116, %p117
    %p120 = scmp.ne.s32.totalorder %s105, %s119
    %p121 = scmp.eq.s32.totalorder %s18, 0
    %p122 = por %p120, %p121
    %s123 = ssub.s32 %s19, %s31
    %s124 = ssub.s32 %s20, %s27
    %s125 = sor.u32 %s123, %s124
    %p126 = scmp.eq.s32.totalorder %s125, 0
    %s128 = sadd.s32 %s127, 1
    %s129 = scalar_select %p126, %s127, %s128
    %p132 = pneg %p126
    %p133 = scmp.eq.s32.totalorder %s12, 3
    %p134 = por %p132, %p133
    %p135 = scmp.ne.s32.totalorder %s127, %s130
    %p136 = scmp.eq.s32.totalorder %s12, 0
    %p137 = por %p135, %p136
    %p138 = scmp.ne.s32.totalorder %s127, %s130
    %p139 = scmp.eq.s32.totalorder %s17, 3
    %p140 = por %p138, %p139
    %p141 = scmp.ne.s32.totalorder %s130, %s131
    %p142 = scmp.eq.s32.totalorder %s17, 0
    %p143 = por %p141, %p142
    %p144 = scmp.ne.s32.totalorder %s130, %s131
    %p145 = scmp.eq.s32.totalorder %s18, 3
    %p146 = por %p144, %p145
    %p148 = scmp.ne.s32.totalorder %s131, %s147
    %p149 = scmp.eq.s32.totalorder %s18, 0
    %p150 = por %p148, %p149
    %s151 = ssub.s32 %s19, %s31
    %s152 = ssub.s32 %s20, %s27
    %s153 = sor.u32 %s151, %s152
    %p154 = scmp.eq.s32.totalorder %s153, 0
    %s156 = sadd.s32 %s155, 1
    %s157 = scalar_select %p154, %s155, %s156
    %p160 = pneg %p154
    %p161 = scmp.eq.s32.totalorder %s12, 3
    %p162 = por %p160, %p161
    %p163 = scmp.ne.s32.totalorder %s155, %s158
    %p164 = scmp.eq.s32.totalorder %s12, 0
    %p165 = por %p163, %p164
    %p166 = scmp.ne.s32.totalorder %s155, %s158
    %p167 = scmp.eq.s32.totalorder %s17, 3
    %p168 = por %p166, %p167
    %p169 = scmp.ne.s32.totalorder %s158, %s159
    %p170 = scmp.eq.s32.totalorder %s17, 0
    %p171 = por %p169, %p170
    %p172 = scmp.ne.s32.totalorder %s158, %s159
    %p173 = scmp.eq.s32.totalorder %s18, 3
    %p174 = por %p172, %p173
    %p176 = scmp.ne.s32.totalorder %s159, %s175
    %p177 = scmp.eq.s32.totalorder %s18, 0
    %p178 = por %p176, %p177
    %p179 = scmp.le.s32.totalorder 1, %s12
    %p180 = scmp.lt.s32.totalorder %s12, 5
    %p181 = pnand %p179, %p180
    %p182 = pneg %p181
    // Predicated region
    $region9: #{unet_block.4} parent=5 // pred_check
      _
    $region10: #{unet_block.4} parent=5 // pred_check_branch
      %184 = sbr.rel (%p181) target = $region12
    $region11: #{unet_block.4} parent=5 // pred_region
      %s185 = ssub.s32 %s12, 1
      // Predicated region
      $region13: #{unet_block.4} parent=11 // pred_check
        %p186 = pneg %p73
      $region14: #{unet_block.4} parent=11 // pred_check_branch
        %188 = sbr.rel (%p186) target = $region16
      $region15: #{unet_block.4} parent=11 // pred_region
        _
      $region16: #{unet_block.4} parent=11 // pred_fallthru
        _
      // Predicated region
      $region17: #{unet_block.4} parent=11 // pred_check
        %p189 = pneg %p94
      $region18: #{unet_block.4} parent=11 // pred_check_branch
        %191 = sbr.rel (%p189) target = $region20
      $region19: #{unet_block.4} parent=11 // pred_region
        _
      $region20: #{unet_block.4} parent=11 // pred_fallthru
        _
      // Predicated region
      $region21: #{unet_block.4} parent=11 // pred_check
        %p192 = pneg %p115
      $region22: #{unet_block.4} parent=11 // pred_check_branch
        %194 = sbr.rel (%p192) target = $region24
      $region23: #{unet_block.4} parent=11 // pred_region
        _
      $region24: #{unet_block.4} parent=11 // pred_fallthru
        _
    $region12: #{unet_block.4} parent=5 // pred_fallthru
      _
    %p195 = scmp.lt.s32.totalorder %s12, 4
    // Predicated region
    $region25: #{unet_block.4} parent=5 // pred_check
      %p196 = pneg %p195
    $region26: #{unet_block.4} parent=5 // pred_check_branch
      %198 = sbr.rel (%p196) target = $region28
    $region27: #{unet_block.4} parent=5 // pred_region
      // Predicated region
      $region29: #{unet_block.4} parent=27 // pred_check
        %p199 = pneg %p46
      $region30: #{unet_block.4} parent=27 // pred_check_branch
        %201 = sbr.rel (%p199) target = $region32
      $region31: #{unet_block.4} parent=27 // pred_region
        %p202 = scmp.lt.s32.totalorder %s19, 1
        %s203 = scalar_select %p202, %s19, 1
        %p204 = scmp.lt.s32.totalorder %s20, 1
        %s205 = scalar_select %p204, %s20, 1
        %s206 = smul.addr %s205, 30
        %s207 = smul.addr %s203, 60
        %s208 = sadd.s32 %s206, %s207
        %s209 = smul.addr %s208, 4
        %s210 = scalar_lea.vmem %s0, %s209
      $region32: #{unet_block.4} parent=27 // pred_fallthru
        _
    $region28: #{unet_block.4} parent=5 // pred_fallthru
      _
    %p211 = scmp.le.s32.totalorder 1, %s12
    %p212 = scmp.lt.s32.totalorder %s12, 5
    %p213 = pnand %p211, %p212
    %p214 = pneg %p213
    // Predicated region
    $region33: #{unet_block.4} parent=5 // pred_check
      _
    $region34: #{unet_block.4} parent=5 // pred_check_branch
      %216 = sbr.rel (%p213) target = $region36
    $region35: #{unet_block.4} parent=5 // pred_region
      %s217 = ssub.s32 %s12, 1
      %p218 = scmp.lt.s32.totalorder %s21, 1
      %s219 = scalar_select %p218, %s21, 1
      %p220 = scmp.lt.s32.totalorder %s22, 1
      %s221 = scalar_select %p220, %s22, 1
      %s222 = smul.addr %s221, 30
      %s223 = smul.addr %s219, 60
      %s224 = sadd.s32 %s222, %s223
      %s225 = smul.addr %s224, 4
      %s226 = scalar_lea.vmem %s0, %s225
      %p227 = pneg %p52
      %p228 = pneg %p49
      %p229 = pneg %p73
      %p230 = pneg %p70
      %p231 = pneg %p94
      %p232 = pneg %p91
      %p233 = pneg %p115
      %p234 = pneg %p112
      %p235 = pneg %p143
      %p236 = pneg %p140
      %p237 = scmp.lt.s32.totalorder %s21, 1
      %s238 = scalar_select %p237, %s21, 1
      %p239 = scmp.lt.s32.totalorder %s22, 1
      %s240 = scalar_select %p239, %s22, 1
      %s241 = smul.addr %s240, 16
      %s242 = smul.addr %s238, 32
      %s243 = sadd.s32 %s241, %s242
      %s244 = smul.addr %s243, 4
      %s245 = scalar_lea.vmem %s4, %s244
      %p246 = pneg %p171
      %p247 = pneg %p168
      %p248 = scmp.lt.s32.totalorder %s21, 1
      %s249 = scalar_select %p248, %s21, 1
      %p250 = scmp.lt.s32.totalorder %s22, 1
      %s251 = scalar_select %p250, %s22, 1
      %s252 = smul.addr %s249, 2
      %s253 = sadd.s32 %s251, %s252
      %s254 = smul.addr %s253, 2
      %s255 = scalar_lea.vmem %s5, %s254
      %p256 = scmp.lt.s32.totalorder %s21, 1
      %s257 = scalar_select %p256, %s21, 1
      %p258 = scmp.lt.s32.totalorder %s22, 1
      %s259 = scalar_select %p258, %s22, 1
      %s260 = smul.addr %s259, 30
      %s261 = smul.addr %s257, 60
      %s262 = sadd.s32 %s260, %s261
      %s263 = smul.addr %s262, 4
      %s264 = scalar_lea.vmem %s0, %s263
      %p265 = scmp.lt.s32.totalorder %s21, 1
      %s266 = scalar_select %p265, %s21, 1
      %p267 = scmp.lt.s32.totalorder %s22, 1
      %s268 = scalar_select %p267, %s22, 1
      %s269 = smul.addr %s268, 16
      %s270 = smul.addr %s266, 32
      %s271 = sadd.s32 %s269, %s270
      %s272 = smul.addr %s271, 4
      %s273 = scalar_lea.vmem %s4, %s272
      %p274 = scmp.lt.s32.totalorder %s21, 1
      %s275 = scalar_select %p274, %s21, 1
      %p276 = scmp.lt.s32.totalorder %s22, 1
      %s277 = scalar_select %p276, %s22, 1
      %s278 = smul.addr %s275, 2
      %s279 = sadd.s32 %s277, %s278
      %s280 = smul.addr %s279, 2
      %s281 = scalar_lea.vmem %s5, %s280
      %v283 = vld [vmem:[%s264] sm:$0xf]
      %v284 = vld [vmem:[%s264 + $0x4] sm:$0xf]
      %v285 = vld [vmem:[%s264 + $0x8] sm:$0x1]
      %v286 = vld [vmem:[%s264 + $0xc] sm:$0xf]
      %v287 = vld [vmem:[%s264 + $0x10] sm:$0xf]
      %v288 = vld [vmem:[%s264 + $0x14] sm:$0x1]
      %v289 = vld [vmem:[%s264 + $0x18] sm:$0xf]
      %v290 = vld [vmem:[%s264 + $0x1c] sm:$0xf]
      %v291 = vld [vmem:[%s264 + $0x20] sm:$0x1]
      %v292 = vld [vmem:[%s264 + $0x24] sm:$0xf]
      %v293 = vld [vmem:[%s264 + $0x28] sm:$0xf]
      %v294 = vld [vmem:[%s264 + $0x2c] sm:$0x1]
      %v295 = vld [vmem:[%s264 + $0x30] sm:$0xf]
      %v296 = vld [vmem:[%s264 + $0x34] sm:$0xf]
      %v297 = vld [vmem:[%s264 + $0x38] sm:$0x1]
      %v298 = vld [vmem:[%s264 + $0x3c] sm:$0xf]
      %v299 = vld [vmem:[%s264 + $0x40] sm:$0xf]
      %v300 = vld [vmem:[%s264 + $0x44] sm:$0x1]
      %v301 = vld [vmem:[%s264 + $0x48] sm:$0xf]
      %v302 = vld [vmem:[%s264 + $0x4c] sm:$0xf]
      %v303 = vld [vmem:[%s264 + $0x50] sm:$0x1]
      %v304 = vld [vmem:[%s264 + $0x54] sm:$0xf]
      %v305 = vld [vmem:[%s264 + $0x58] sm:$0xf]
      %v306 = vld [vmem:[%s264 + $0x5c] sm:$0x1]
      %v307 = vld [vmem:[%s264 + $0x60] sm:$0xf]
      %v308 = vld [vmem:[%s264 + $0x64] sm:$0xf]
      %v309 = vld [vmem:[%s264 + $0x68] sm:$0x1]
      %v310 = vld [vmem:[%s264 + $0x6c] sm:$0xf]
      %v311 = vld [vmem:[%s264 + $0x70] sm:$0xf]
      %v312 = vld [vmem:[%s264 + $0x74] sm:$0x1]
      %v313 = vunpack.c.l.bf16 %v283
      %v314 = vunpack.c.l.bf16 %v284
      %v315 = vunpack.c.l.bf16 %v285
      %v316 = vunpack.c.l.bf16 %v286
      %v317 = vunpack.c.l.bf16 %v287
      %v318 = vunpack.c.l.bf16 %v288
      %v319 = vunpack.c.l.bf16 %v289
      %v320 = vunpack.c.l.bf16 %v290
      %v321 = vunpack.c.l.bf16 %v291
      %v322 = vunpack.c.l.bf16 %v292
      %v323 = vunpack.c.l.bf16 %v293
      %v324 = vunpack.c.l.bf16 %v294
      %v325 = vunpack.c.l.bf16 %v295
      %v326 = vunpack.c.l.bf16 %v296
      %v327 = vunpack.c.l.bf16 %v297
      %v328 = vunpack.c.l.bf16 %v298
      %v329 = vunpack.c.l.bf16 %v299
      %v330 = vunpack.c.l.bf16 %v300
      %v331 = vunpack.c.l.bf16 %v301
      %v332 = vunpack.c.l.bf16 %v302
      %v333 = vunpack.c.l.bf16 %v303
      %v334 = vunpack.c.l.bf16 %v304
      %v335 = vunpack.c.l.bf16 %v305
      %v336 = vunpack.c.l.bf16 %v306
      %v337 = vunpack.c.l.bf16 %v307
      %v338 = vunpack.c.l.bf16 %v308
      %v339 = vunpack.c.l.bf16 %v309
      %v340 = vunpack.c.l.bf16 %v310
      %v341 = vunpack.c.l.bf16 %v311
      %v342 = vunpack.c.l.bf16 %v312
      %v343 = vld [vmem:[%s2] sm:$0x1]
      %v345 = vlaneseq
      %v346 = vshrl.u32 %v345, 7
      %v347 = vsub.s32 0, %v346
      %v348 = vrot.slane %v343, %v347
      %v350 = vmul.f32 %v313, %v348
      %v351 = vmul.f32 %v314, %v348
      %v352 = vmul.f32 %v315, %v348
      %v353 = vmul.f32 %v316, %v348
      %v354 = vmul.f32 %v317, %v348
      %v355 = vmul.f32 %v318, %v348
      %v356 = vmul.f32 %v319, %v348
      %v357 = vmul.f32 %v320, %v348
      %v358 = vmul.f32 %v321, %v348
      %v359 = vmul.f32 %v322, %v348
      %v360 = vmul.f32 %v323, %v348
      %v361 = vmul.f32 %v324, %v348
      %v362 = vmul.f32 %v325, %v348
      %v363 = vmul.f32 %v326, %v348
      %v364 = vmul.f32 %v327, %v348
      %v365 = vmul.f32 %v328, %v348
      %v366 = vmul.f32 %v329, %v348
      %v367 = vmul.f32 %v330, %v348
      %v368 = vmul.f32 %v331, %v348
      %v369 = vmul.f32 %v332, %v348
      %v370 = vmul.f32 %v333, %v348
      %v371 = vmul.f32 %v334, %v348
      %v372 = vmul.f32 %v335, %v348
      %v373 = vmul.f32 %v336, %v348
      %v374 = vmul.f32 %v337, %v348
      %v375 = vmul.f32 %v338, %v348
      %v376 = vmul.f32 %v339, %v348
      %v377 = vmul.f32 %v340, %v348
      %v378 = vmul.f32 %v341, %v348
      %v379 = vmul.f32 %v342, %v348
      %v380 = vld [vmem:[%s3] sm:$0x1]
      %v382 = vlaneseq
      %v383 = vshrl.u32 %v382, 7
      %v384 = vsub.s32 0, %v383
      %v385 = vrot.slane %v380, %v384
      %v387 = vadd.f32 %v350, %v385
      %v388 = vadd.f32 %v351, %v385
      %v389 = vadd.f32 %v352, %v385
      %v390 = vadd.f32 %v353, %v385
      %v391 = vadd.f32 %v354, %v385
      %v392 = vadd.f32 %v355, %v385
      %v393 = vadd.f32 %v356, %v385
      %v394 = vadd.f32 %v357, %v385
      %v395 = vadd.f32 %v358, %v385
      %v396 = vadd.f32 %v359, %v385
      %v397 = vadd.f32 %v360, %v385
      %v398 = vadd.f32 %v361, %v385
      %v399 = vadd.f32 %v362, %v385
      %v400 = vadd.f32 %v363, %v385
      %v401 = vadd.f32 %v364, %v385
      %v402 = vadd.f32 %v365, %v385
      %v403 = vadd.f32 %v366, %v385
      %v404 = vadd.f32 %v367, %v385
      %v405 = vadd.f32 %v368, %v385
      %v406 = vadd.f32 %v369, %v385
      %v407 = vadd.f32 %v370, %v385
      %v408 = vadd.f32 %v371, %v385
      %v409 = vadd.f32 %v372, %v385
      %v410 = vadd.f32 %v373, %v385
      %v411 = vadd.f32 %v374, %v385
      %v412 = vadd.f32 %v375, %v385
      %v413 = vadd.f32 %v376, %v385
      %v414 = vadd.f32 %v377, %v385
      %v415 = vadd.f32 %v378, %v385
      %v416 = vadd.f32 %v379, %v385
      %v417 = vmax.f32 %v387, 0.0
      %v418 = vmax.f32 %v388, 0.0
      %v419 = vmax.f32 %v389, 0.0
      %v420 = vmax.f32 %v390, 0.0
      %v421 = vmax.f32 %v391, 0.0
      %v422 = vmax.f32 %v392, 0.0
      %v423 = vmax.f32 %v393, 0.0
      %v424 = vmax.f32 %v394, 0.0
      %v425 = vmax.f32 %v395, 0.0
      %v426 = vmax.f32 %v396, 0.0
      %v427 = vmax.f32 %v397, 0.0
      %v428 = vmax.f32 %v398, 0.0
      %v429 = vmax.f32 %v399, 0.0
      %v430 = vmax.f32 %v400, 0.0
      %v431 = vmax.f32 %v401, 0.0
      %v432 = vmax.f32 %v402, 0.0
      %v433 = vmax.f32 %v403, 0.0
      %v434 = vmax.f32 %v404, 0.0
      %v435 = vmax.f32 %v405, 0.0
      %v436 = vmax.f32 %v406, 0.0
      %v437 = vmax.f32 %v407, 0.0
      %v438 = vmax.f32 %v408, 0.0
      %v439 = vmax.f32 %v409, 0.0
      %v440 = vmax.f32 %v410, 0.0
      %v441 = vmax.f32 %v411, 0.0
      %v442 = vmax.f32 %v412, 0.0
      %v443 = vmax.f32 %v413, 0.0
      %v444 = vmax.f32 %v414, 0.0
      %v445 = vmax.f32 %v415, 0.0
      %v446 = vmax.f32 %v416, 0.0
      %v447 = vpack.c.bf16 %v418, %v417
      %v448 = vpack.c.bf16 %v419, %v419
      %v449 = vpack.c.bf16 %v421, %v420
      %v450 = vpack.c.bf16 %v422, %v422
      %v451 = vpack.c.bf16 %v424, %v423
      %v452 = vpack.c.bf16 %v425, %v425
      %v453 = vpack.c.bf16 %v427, %v426
      %v454 = vpack.c.bf16 %v428, %v428
      %v455 = vpack.c.bf16 %v430, %v429
      %v456 = vpack.c.bf16 %v431, %v431
      %v457 = vpack.c.bf16 %v433, %v432
      %v458 = vpack.c.bf16 %v434, %v434
      %v459 = vpack.c.bf16 %v436, %v435
      %v460 = vpack.c.bf16 %v437, %v437
      %v461 = vpack.c.bf16 %v439, %v438
      %v462 = vpack.c.bf16 %v440, %v440
      %v463 = vpack.c.bf16 %v442, %v441
      %v464 = vpack.c.bf16 %v443, %v443
      %v465 = vpack.c.bf16 %v445, %v444
      %v466 = vpack.c.bf16 %v446, %v446
      %v487 = vunpack.c.l.b16 %v447
      %v488 = vunpack.c.h.b16 %v447
      %v489 = vunpack.c.l.b16 %v448
      %v490 = vunpack.c.l.b16 %v449
      %v491 = vunpack.c.h.b16 %v449
      %v492 = vunpack.c.l.b16 %v450
      %v493 = vunpack.c.l.b16 %v451
      %v494 = vunpack.c.h.b16 %v451
      %v495 = vunpack.c.l.b16 %v452
      %v496 = vunpack.c.l.b16 %v453
      %v497 = vunpack.c.h.b16 %v453
      %v498 = vunpack.c.l.b16 %v454
      %v499 = vunpack.c.l.b16 %v455
      %v500 = vunpack.c.h.b16 %v455
      %v501 = vunpack.c.l.b16 %v456
      %v502 = vunpack.c.l.b16 %v457
      %v503 = vunpack.c.h.b16 %v457
      %v504 = vunpack.c.l.b16 %v458
      %v505 = vunpack.c.l.b16 %v459
      %v506 = vunpack.c.h.b16 %v459
      %v507 = vunpack.c.l.b16 %v460
      %v508 = vunpack.c.l.b16 %v461
      %v509 = vunpack.c.h.b16 %v461
      %v510 = vunpack.c.l.b16 %v462
      %v511 = vunpack.c.l.b16 %v463
      %v512 = vunpack.c.h.b16 %v463
      %v513 = vunpack.c.l.b16 %v464
      %v514 = vunpack.c.l.b16 %v465
      %v515 = vunpack.c.h.b16 %v465
      %v516 = vunpack.c.l.b16 %v466
      %v517 = vpack.c.b16 %v487, %v487
      %v518 = vpack.c.b16 %v488, %v488
      %v519 = vpack.c.b16 %v489, %v489
      %v520 = vpack.c.b16 %v490, %v490
      %v521 = vpack.c.b16 %v491, %v491
      %v522 = vpack.c.b16 %v492, %v492
      %v523 = vpack.c.b16 %v493, %v493
      %v524 = vpack.c.b16 %v494, %v494
      %v525 = vpack.c.b16 %v495, %v495
      %v526 = vpack.c.b16 %v496, %v496
      %v527 = vpack.c.b16 %v497, %v497
      %v528 = vpack.c.b16 %v498, %v498
      %v529 = vpack.c.b16 %v499, %v499
      %v530 = vpack.c.b16 %v500, %v500
      %v531 = vpack.c.b16 %v501, %v501
      %v532 = vpack.c.b16 %v502, %v502
      %v533 = vpack.c.b16 %v503, %v503
      %v534 = vpack.c.b16 %v504, %v504
      %v535 = vpack.c.b16 %v505, %v505
      %v536 = vpack.c.b16 %v506, %v506
      %v537 = vpack.c.b16 %v507, %v507
      %v538 = vpack.c.b16 %v508, %v508
      %v539 = vpack.c.b16 %v509, %v509
      %v540 = vpack.c.b16 %v510, %v510
      %v541 = vpack.c.b16 %v511, %v511
      %v542 = vpack.c.b16 %v512, %v512
      %v543 = vpack.c.b16 %v513, %v513
      %v544 = vpack.c.b16 %v514, %v514
      %v545 = vpack.c.b16 %v515, %v515
      %v546 = vpack.c.b16 %v516, %v516
      %577 = vst [vmem:[#allocation3] sm:$0xf] %v517
      %578 = vst [vmem:[#allocation3 + $0x4] sm:$0xf] %v518
      %579 = vst [vmem:[#allocation3 + $0x8] sm:$0x1] %v519
      %580 = vst [vmem:[#allocation3 + $0xc] sm:$0xf] %v520
      %581 = vst [vmem:[#allocation3 + $0x10] sm:$0xf] %v521
      %582 = vst [vmem:[#allocation3 + $0x14] sm:$0x1] %v522
      %583 = vst [vmem:[#allocation3 + $0x18] sm:$0xf] %v523
      %584 = vst [vmem:[#allocation3 + $0x1c] sm:$0xf] %v524
      %585 = vst [vmem:[#allocation3 + $0x20] sm:$0x1] %v525
      %586 = vst [vmem:[#allocation3 + $0x24] sm:$0xf] %v526
      %587 = vst [vmem:[#allocation3 + $0x28] sm:$0xf] %v527
      %588 = vst [vmem:[#allocation3 + $0x2c] sm:$0x1] %v528
      %589 = vst [vmem:[#allocation3 + $0x30] sm:$0xf] %v529
      %590 = vst [vmem:[#allocation3 + $0x34] sm:$0xf] %v530
      %591 = vst [vmem:[#allocation3 + $0x38] sm:$0x1] %v531
      %592 = vst [vmem:[#allocation3 + $0x3c] sm:$0xf] %v532
      %593 = vst [vmem:[#allocation3 + $0x40] sm:$0xf] %v533
      %594 = vst [vmem:[#allocation3 + $0x44] sm:$0x1] %v534
      %595 = vst [vmem:[#allocation3 + $0x48] sm:$0xf] %v535
      %596 = vst [vmem:[#allocation3 + $0x4c] sm:$0xf] %v536
      %597 = vst [vmem:[#allocation3 + $0x50] sm:$0x1] %v537
      %598 = vst [vmem:[#allocation3 + $0x54] sm:$0xf] %v538
      %599 = vst [vmem:[#allocation3 + $0x58] sm:$0xf] %v539
      %600 = vst [vmem:[#allocation3 + $0x5c] sm:$0x1] %v540
      %601 = vst [vmem:[#allocation3 + $0x60] sm:$0xf] %v541
      %602 = vst [vmem:[#allocation3 + $0x64] sm:$0xf] %v542
      %603 = vst [vmem:[#allocation3 + $0x68] sm:$0x1] %v543
      %604 = vst [vmem:[#allocation3 + $0x6c] sm:$0xf] %v544
      %605 = vst [vmem:[#allocation3 + $0x70] sm:$0xf] %v545
      %606 = vst [vmem:[#allocation3 + $0x74] sm:$0x1] %v546
      %v607 = vld [vmem:[#allocation3] sm:$0xf]
      %v608 = vld [vmem:[#allocation3 + $0x4] sm:$0xf]
      %v609 = vld [vmem:[#allocation3 + $0xc] sm:$0xf]
      %v610 = vld [vmem:[#allocation3 + $0x10] sm:$0xf]
      %v611 = vld [vmem:[#allocation3 + $0x18] sm:$0xf]
      %v612 = vld [vmem:[#allocation3 + $0x1c] sm:$0xf]
      %v613 = vld [vmem:[#allocation3 + $0x24] sm:$0xf]
      %v614 = vld [vmem:[#allocation3 + $0x28] sm:$0xf]
      %v615 = vld [vmem:[#allocation3 + $0x30] sm:$0xf]
      %v616 = vld [vmem:[#allocation3 + $0x34] sm:$0xf]
      %v617 = vld [vmem:[#allocation3 + $0x3c] sm:$0xf]
      %v618 = vld [vmem:[#allocation3 + $0x40] sm:$0xf]
      %v619 = vld [vmem:[#allocation3 + $0x48] sm:$0xf]
      %v620 = vld [vmem:[#allocation3 + $0x4c] sm:$0xf]
      %v621 = vld [vmem:[#allocation3 + $0x54] sm:$0xf]
      %v622 = vld [vmem:[#allocation3 + $0x58] sm:$0xf]
      %v639 = vunpack.c.l.b16 %v607
      %v640 = vunpack.c.l.b16 %v608
      %v641 = vunpack.c.l.b16 %v609
      %v642 = vunpack.c.l.b16 %v610
      %v643 = vunpack.c.l.b16 %v611
      %v644 = vunpack.c.l.b16 %v612
      %v645 = vunpack.c.l.b16 %v613
      %v646 = vunpack.c.l.b16 %v614
      %v647 = vunpack.c.l.b16 %v615
      %v648 = vunpack.c.l.b16 %v616
      %v649 = vunpack.c.l.b16 %v617
      %v650 = vunpack.c.l.b16 %v618
      %v651 = vunpack.c.l.b16 %v619
      %v652 = vunpack.c.l.b16 %v620
      %v653 = vunpack.c.l.b16 %v621
      %v654 = vunpack.c.l.b16 %v622
      %v655 = vpack.c.b16 %v640, %v639
      %v656 = vpack.c.b16 %v642, %v641
      %v657 = vpack.c.b16 %v644, %v643
      %v658 = vpack.c.b16 %v646, %v645
      %v659 = vpack.c.b16 %v648, %v647
      %v660 = vpack.c.b16 %v650, %v649
      %v661 = vpack.c.b16 %v652, %v651
      %v662 = vpack.c.b16 %v654, %v653
      %671 = vst [vmem:[#allocation2] sm:$0xff] %v655
      %672 = vst [vmem:[#allocation2 + $0x48] sm:$0xff] %v656
      %673 = vst [vmem:[#allocation2 + $0x90] sm:$0xff] %v657
      %674 = vst [vmem:[#allocation2 + $0xd8] sm:$0xff] %v658
      %675 = vst [vmem:[#allocation2 + $0x120] sm:$0xff] %v659
      %676 = vst [vmem:[#allocation2 + $0x168] sm:$0xff] %v660
      %677 = vst [vmem:[#allocation2 + $0x1b0] sm:$0xff] %v661
      %678 = vst [vmem:[#allocation2 + $0x1f8] sm:$0xff] %v662
      %v679 = vld [vmem:[#allocation3] sm:$0xf]
      %v680 = vld [vmem:[#allocation3 + $0x4] sm:$0xf]
      %v681 = vld [vmem:[#allocation3 + $0x8] sm:$0x1]
      %v682 = vld [vmem:[#allocation3 + $0xc] sm:$0xf]
      %v683 = vld [vmem:[#allocation3 + $0x10] sm:$0xf]
      %v684 = vld [vmem:[#allocation3 + $0x14] sm:$0x1]
      %v685 = vld [vmem:[#allocation3 + $0x18] sm:$0xf]
      %v686 = vld [vmem:[#allocation3 + $0x1c] sm:$0xf]
      %v687 = vld [vmem:[#allocation3 + $0x20] sm:$0x1]
      %v688 = vld [vmem:[#allocation3 + $0x24] sm:$0xf]
      %v689 = vld [vmem:[#allocation3 + $0x28] sm:$0xf]
      %v690 = vld [vmem:[#allocation3 + $0x2c] sm:$0x1]
      %v691 = vld [vmem:[#allocation3 + $0x30] sm:$0xf]
      %v692 = vld [vmem:[#allocation3 + $0x34] sm:$0xf]
      %v693 = vld [vmem:[#allocation3 + $0x38] sm:$0x1]
      %v694 = vld [vmem:[#allocation3 + $0x3c] sm:$0xf]
      %v695 = vld [vmem:[#allocation3 + $0x40] sm:$0xf]
      %v696 = vld [vmem:[#allocation3 + $0x44] sm:$0x1]
      %v697 = vld [vmem:[#allocation3 + $0x48] sm:$0xf]
      %v698 = vld [vmem:[#allocation3 + $0x4c] sm:$0xf]
      %v699 = vld [vmem:[#allocation3 + $0x50] sm:$0x1]
      %v700 = vld [vmem:[#allocation3 + $0x54] sm:$0xf]
      %v701 = vld [vmem:[#allocation3 + $0x58] sm:$0xf]
      %v702 = vld [vmem:[#allocation3 + $0x5c] sm:$0x1]
      %v727 = vunpack.c.l.b16 %v679
      %v728 = vunpack.c.l.b16 %v680
      %v729 = vunpack.c.l.b16 %v681
      %v730 = vunpack.c.l.b16 %v682
      %v731 = vunpack.c.l.b16 %v683
      %v732 = vunpack.c.l.b16 %v684
      %v733 = vunpack.c.l.b16 %v685
      %v734 = vunpack.c.l.b16 %v686
      %v735 = vunpack.c.l.b16 %v687
      %v736 = vunpack.c.l.b16 %v688
      %v737 = vunpack.c.l.b16 %v689
      %v738 = vunpack.c.l.b16 %v690
      %v739 = vunpack.c.l.b16 %v691
      %v740 = vunpack.c.l.b16 %v692
      %v741 = vunpack.c.l.b16 %v693
      %v742 = vunpack.c.l.b16 %v694
      %v743 = vunpack.c.l.b16 %v695
      %v744 = vunpack.c.l.b16 %v696
      %v745 = vunpack.c.l.b16 %v697
      %v746 = vunpack.c.l.b16 %v698
      %v747 = vunpack.c.l.b16 %v699
      %v748 = vunpack.c.l.b16 %v700
      %v749 = vunpack.c.l.b16 %v701
      %v750 = vunpack.c.l.b16 %v702
      %v751 = vpack.c.b16 %v728, %v727
      %v752 = vpack.c.b16 %v729, %v729
      %v753 = vpack.c.b16 %v731, %v730
      %v754 = vpack.c.b16 %v732, %v732
      %v755 = vpack.c.b16 %v734, %v733
      %v756 = vpack.c.b16 %v735, %v735
      %v757 = vpack.c.b16 %v737, %v736
      %v758 = vpack.c.b16 %v738, %v738
      %v759 = vpack.c.b16 %v740, %v739
      %v760 = vpack.c.b16 %v741, %v741
      %v761 = vpack.c.b16 %v743, %v742
      %v762 = vpack.c.b16 %v744, %v744
      %v763 = vpack.c.b16 %v746, %v745
      %v764 = vpack.c.b16 %v747, %v747
      %v765 = vpack.c.b16 %v749, %v748
      %v766 = vpack.c.b16 %v750, %v750
      %vm767 = vsmask.f32 7424
      %v769 = vshrl.u32 %v751, 16
      %v771 = vshll.u32 %v751, 16
      %v773 = vrot.slane %v771, 1
      %v774 = vor.u32 %v769, %v773
      %v776 = vshll.u32 %v752, 16
      %v778 = vrot.slane %v776, 1
      %v779 = vsel %vm767, %v774, %v778
      %v781 = vshrl.u32 %v753, 16
      %v783 = vshll.u32 %v753, 16
      %v785 = vrot.slane %v783, 1
      %v786 = vor.u32 %v781, %v785
      %v788 = vshll.u32 %v754, 16
      %v790 = vrot.slane %v788, 1
      %v791 = vsel %vm767, %v786, %v790
      %v793 = vshrl.u32 %v755, 16
      %v795 = vshll.u32 %v755, 16
      %v797 = vrot.slane %v795, 1
      %v798 = vor.u32 %v793, %v797
      %v800 = vshll.u32 %v756, 16
      %v802 = vrot.slane %v800, 1
      %v803 = vsel %vm767, %v798, %v802
      %v805 = vshrl.u32 %v757, 16
      %v807 = vshll.u32 %v757, 16
      %v809 = vrot.slane %v807, 1
      %v810 = vor.u32 %v805, %v809
      %v812 = vshll.u32 %v758, 16
      %v814 = vrot.slane %v812, 1
      %v815 = vsel %vm767, %v810, %v814
      %v817 = vshrl.u32 %v759, 16
      %v819 = vshll.u32 %v759, 16
      %v821 = vrot.slane %v819, 1
      %v822 = vor.u32 %v817, %v821
      %v824 = vshll.u32 %v760, 16
      %v826 = vrot.slane %v824, 1
      %v827 = vsel %vm767, %v822, %v826
      %v829 = vshrl.u32 %v761, 16
      %v831 = vshll.u32 %v761, 16
      %v833 = vrot.slane %v831, 1
      %v834 = vor.u32 %v829, %v833
      %v836 = vshll.u32 %v762, 16
      %v838 = vrot.slane %v836, 1
      %v839 = vsel %vm767, %v834, %v838
      %v841 = vshrl.u32 %v763, 16
      %v843 = vshll.u32 %v763, 16
      %v845 = vrot.slane %v843, 1
      %v846 = vor.u32 %v841, %v845
      %v848 = vshll.u32 %v764, 16
      %v850 = vrot.slane %v848, 1
      %v851 = vsel %vm767, %v846, %v850
      %v853 = vshrl.u32 %v765, 16
      %v855 = vshll.u32 %v765, 16
      %v857 = vrot.slane %v855, 1
      %v858 = vor.u32 %v853, %v857
      %v860 = vshll.u32 %v766, 16
      %v862 = vrot.slane %v860, 1
      %v863 = vsel %vm767, %v858, %v862
      %872 = vst [vmem:[#allocation2 + $0x8] sm:$0xff] %v779
      %873 = vst [vmem:[#allocation2 + $0x50] sm:$0xff] %v791
      %874 = vst [vmem:[#allocation2 + $0x98] sm:$0xff] %v803
      %875 = vst [vmem:[#allocation2 + $0xe0] sm:$0xff] %v815
      %876 = vst [vmem:[#allocation2 + $0x128] sm:$0xff] %v827
      %877 = vst [vmem:[#allocation2 + $0x170] sm:$0xff] %v839
      %878 = vst [vmem:[#allocation2 + $0x1b8] sm:$0xff] %v851
      %879 = vst [vmem:[#allocation2 + $0x200] sm:$0xff] %v863
      %v880 = vld [vmem:[#allocation3] sm:$0xe]
      %v881 = vld [vmem:[#allocation3 + $0x4] sm:$0xf]
      %v882 = vld [vmem:[#allocation3 + $0x8] sm:$0x1]
      %v883 = vld [vmem:[#allocation3 + $0xc] sm:$0xe]
      %v884 = vld [vmem:[#allocation3 + $0x10] sm:$0xf]
      %v885 = vld [vmem:[#allocation3 + $0x14] sm:$0x1]
      %v886 = vld [vmem:[#allocation3 + $0x18] sm:$0xe]
      %v887 = vld [vmem:[#allocation3 + $0x1c] sm:$0xf]
      %v888 = vld [vmem:[#allocation3 + $0x20] sm:$0x1]
      %v889 = vld [vmem:[#allocation3 + $0x24] sm:$0xe]
      %v890 = vld [vmem:[#allocation3 + $0x28] sm:$0xf]
      %v891 = vld [vmem:[#allocation3 + $0x2c] sm:$0x1]
      %v892 = vld [vmem:[#allocation3 + $0x30] sm:$0xe]
      %v893 = vld [vmem:[#allocation3 + $0x34] sm:$0xf]
      %v894 = vld [vmem:[#allocation3 + $0x38] sm:$0x1]
      %v895 = vld [vmem:[#allocation3 + $0x3c] sm:$0xe]
      %v896 = vld [vmem:[#allocation3 + $0x40] sm:$0xf]
      %v897 = vld [vmem:[#allocation3 + $0x44] sm:$0x1]
      %v898 = vld [vmem:[#allocation3 + $0x48] sm:$0xe]
      %v899 = vld [vmem:[#allocation3 + $0x4c] sm:$0xf]
      %v900 = vld [vmem:[#allocation3 + $0x50] sm:$0x1]
      %v901 = vld [vmem:[#allocation3 + $0x54] sm:$0xe]
      %v902 = vld [vmem:[#allocation3 + $0x58] sm:$0xf]
      %v903 = vld [vmem:[#allocation3 + $0x5c] sm:$0x1]
      %v928 = vunpack.c.l.b16 %v880
      %v929 = vunpack.c.l.b16 %v881
      %v930 = vunpack.c.l.b16 %v882
      %v931 = vunpack.c.l.b16 %v883
      %v932 = vunpack.c.l.b16 %v884
      %v933 = vunpack.c.l.b16 %v885
      %v934 = vunpack.c.l.b16 %v886
      %v935 = vunpack.c.l.b16 %v887
      %v936 = vunpack.c.l.b16 %v888
      %v937 = vunpack.c.l.b16 %v889
      %v938 = vunpack.c.l.b16 %v890
      %v939 = vunpack.c.l.b16 %v891
      %v940 = vunpack.c.l.b16 %v892
      %v941 = vunpack.c.l.b16 %v893
      %v942 = vunpack.c.l.b16 %v894
      %v943 = vunpack.c.l.b16 %v895
      %v944 = vunpack.c.l.b16 %v896
      %v945 = vunpack.c.l.b16 %v897
      %v946 = vunpack.c.l.b16 %v898
      %v947 = vunpack.c.l.b16 %v899
      %v948 = vunpack.c.l.b16 %v900
      %v949 = vunpack.c.l.b16 %v901
      %v950 = vunpack.c.l.b16 %v902
      %v951 = vunpack.c.l.b16 %v903
      %v952 = vpack.c.b16 %v929, %v928
      %v953 = vpack.c.b16 %v930, %v930
      %v954 = vpack.c.b16 %v932, %v931
      %v955 = vpack.c.b16 %v933, %v933
      %v956 = vpack.c.b16 %v935, %v934
      %v957 = vpack.c.b16 %v936, %v936
      %v958 = vpack.c.b16 %v938, %v937
      %v959 = vpack.c.b16 %v939, %v939
      %v960 = vpack.c.b16 %v941, %v940
      %v961 = vpack.c.b16 %v942, %v942
      %v962 = vpack.c.b16 %v944, %v943
      %v963 = vpack.c.b16 %v945, %v945
      %v964 = vpack.c.b16 %v947, %v946
      %v965 = vpack.c.b16 %v948, %v948
      %v966 = vpack.c.b16 %v950, %v949
      %v967 = vpack.c.b16 %v951, %v951
      %vm968 = vcmask 1046528
      %v969 = vrot.slane %v952, 1
      %v970 = vrot.slane %v953, 1
      %v971 = vsel %vm968, %v969, %v970
      %v972 = vrot.slane %v954, 1
      %v973 = vrot.slane %v955, 1
      %v974 = vsel %vm968, %v972, %v973
      %v975 = vrot.slane %v956, 1
      %v976 = vrot.slane %v957, 1
      %v977 = vsel %vm968, %v975, %v976
      %v978 = vrot.slane %v958, 1
      %v979 = vrot.slane %v959, 1
      %v980 = vsel %vm968, %v978, %v979
      %v981 = vrot.slane %v960, 1
      %v982 = vrot.slane %v961, 1
      %v983 = vsel %vm968, %v981, %v982
      %v984 = vrot.slane %v962, 1
      %v985 = vrot.slane %v963, 1
      %v986 = vsel %vm968, %v984, %v985
      %v987 = vrot.slane %v964, 1
      %v988 = vrot.slane %v965, 1
      %v989 = vsel %vm968, %v987, %v988
      %v990 = vrot.slane %v966, 1
      %v991 = vrot.slane %v967, 1
      %v992 = vsel %vm968, %v990, %v991
      %1001 = vst [vmem:[#allocation2 + $0x10] sm:$0xff] %v971
      %1002 = vst [vmem:[#allocation2 + $0x58] sm:$0xff] %v974
      %1003 = vst [vmem:[#allocation2 + $0xa0] sm:$0xff] %v977
      %1004 = vst [vmem:[#allocation2 + $0xe8] sm:$0xff] %v980
      %1005 = vst [vmem:[#allocation2 + $0x130] sm:$0xff] %v983
      %1006 = vst [vmem:[#allocation2 + $0x178] sm:$0xff] %v986
      %1007 = vst [vmem:[#allocation2 + $0x1c0] sm:$0xff] %v989
      %1008 = vst [vmem:[#allocation2 + $0x208] sm:$0xff] %v992
      %s1009 = scalar_lea.vmem [#allocation3], 12
      %v1010 = vld [vmem:[%s1009] sm:$0xf]
      %v1011 = vld [vmem:[%s1009 + $0x4] sm:$0xf]
      %v1012 = vld [vmem:[%s1009 + $0xc] sm:$0xf]
      %v1013 = vld [vmem:[%s1009 + $0x10] sm:$0xf]
      %v1014 = vld [vmem:[%s1009 + $0x18] sm:$0xf]
      %v1015 = vld [vmem:[%s1009 + $0x1c] sm:$0xf]
      %v1016 = vld [vmem:[%s1009 + $0x24] sm:$0xf]
      %v1017 = vld [vmem:[%s1009 + $0x28] sm:$0xf]
      %v1018 = vld [vmem:[%s1009 + $0x30] sm:$0xf]
      %v1019 = vld [vmem:[%s1009 + $0x34] sm:$0xf]
      %v1020 = vld [vmem:[%s1009 + $0x3c] sm:$0xf]
      %v1021 = vld [vmem:[%s1009 + $0x40] sm:$0xf]
      %v1022 = vld [vmem:[%s1009 + $0x48] sm:$0xf]
      %v1023 = vld [vmem:[%s1009 + $0x4c] sm:$0xf]
      %v1024 = vld [vmem:[%s1009 + $0x54] sm:$0xf]
      %v1025 = vld [vmem:[%s1009 + $0x58] sm:$0xf]
      %v1042 = vunpack.c.l.b16 %v1010
      %v1043 = vunpack.c.l.b16 %v1011
      %v1044 = vunpack.c.l.b16 %v1012
      %v1045 = vunpack.c.l.b16 %v1013
      %v1046 = vunpack.c.l.b16 %v1014
      %v1047 = vunpack.c.l.b16 %v1015
      %v1048 = vunpack.c.l.b16 %v1016
      %v1049 = vunpack.c.l.b16 %v1017
      %v1050 = vunpack.c.l.b16 %v1018
      %v1051 = vunpack.c.l.b16 %v1019
      %v1052 = vunpack.c.l.b16 %v1020
      %v1053 = vunpack.c.l.b16 %v1021
      %v1054 = vunpack.c.l.b16 %v1022
      %v1055 = vunpack.c.l.b16 %v1023
      %v1056 = vunpack.c.l.b16 %v1024
      %v1057 = vunpack.c.l.b16 %v1025
      %v1058 = vpack.c.b16 %v1043, %v1042
      %v1059 = vpack.c.b16 %v1045, %v1044
      %v1060 = vpack.c.b16 %v1047, %v1046
      %v1061 = vpack.c.b16 %v1049, %v1048
      %v1062 = vpack.c.b16 %v1051, %v1050
      %v1063 = vpack.c.b16 %v1053, %v1052
      %v1064 = vpack.c.b16 %v1055, %v1054
      %v1065 = vpack.c.b16 %v1057, %v1056
      %1074 = vst [vmem:[#allocation2 + $0x18] sm:$0xff] %v1058
      %1075 = vst [vmem:[#allocation2 + $0x60] sm:$0xff] %v1059
      %1076 = vst [vmem:[#allocation2 + $0xa8] sm:$0xff] %v1060
      %1077 = vst [vmem:[#allocation2 + $0xf0] sm:$0xff] %v1061
      %1078 = vst [vmem:[#allocation2 + $0x138] sm:$0xff] %v1062
      %1079 = vst [vmem:[#allocation2 + $0x180] sm:$0xff] %v1063
      %1080 = vst [vmem:[#allocation2 + $0x1c8] sm:$0xff] %v1064
      %1081 = vst [vmem:[#allocation2 + $0x210] sm:$0xff] %v1065
      %v1082 = vld [vmem:[%s1009] sm:$0xf]
      %v1083 = vld [vmem:[%s1009 + $0x4] sm:$0xf]
      %v1084 = vld [vmem:[%s1009 + $0x8] sm:$0x1]
      %v1085 = vld [vmem:[%s1009 + $0xc] sm:$0xf]
      %v1086 = vld [vmem:[%s1009 + $0x10] sm:$0xf]
      %v1087 = vld [vmem:[%s1009 + $0x14] sm:$0x1]
      %v1088 = vld [vmem:[%s1009 + $0x18] sm:$0xf]
      %v1089 = vld [vmem:[%s1009 + $0x1c] sm:$0xf]
      %v1090 = vld [vmem:[%s1009 + $0x20] sm:$0x1]
      %v1091 = vld [vmem:[%s1009 + $0x24] sm:$0xf]
      %v1092 = vld [vmem:[%s1009 + $0x28] sm:$0xf]
      %v1093 = vld [vmem:[%s1009 + $0x2c] sm:$0x1]
      %v1094 = vld [vmem:[%s1009 + $0x30] sm:$0xf]
      %v1095 = vld [vmem:[%s1009 + $0x34] sm:$0xf]
      %v1096 = vld [vmem:[%s1009 + $0x38] sm:$0x1]
      %v1097 = vld [vmem:[%s1009 + $0x3c] sm:$0xf]
      %v1098 = vld [vmem:[%s1009 + $0x40] sm:$0xf]
      %v1099 = vld [vmem:[%s1009 + $0x44] sm:$0x1]
      %v1100 = vld [vmem:[%s1009 + $0x48] sm:$0xf]
      %v1101 = vld [vmem:[%s1009 + $0x4c] sm:$0xf]
      %v1102 = vld [vmem:[%s1009 + $0x50] sm:$0x1]
      %v1103 = vld [vmem:[%s1009 + $0x54] sm:$0xf]
      %v1104 = vld [vmem:[%s1009 + $0x58] sm:$0xf]
      %v1105 = vld [vmem:[%s1009 + $0x5c] sm:$0x1]
      %v1130 = vunpack.c.l.b16 %v1082
      %v1131 = vunpack.c.l.b16 %v1083
      %v1132 = vunpack.c.l.b16 %v1084
      %v1133 = vunpack.c.l.b16 %v1085
      %v1134 = vunpack.c.l.b16 %v1086
      %v1135 = vunpack.c.l.b16 %v1087
      %v1136 = vunpack.c.l.b16 %v1088
      %v1137 = vunpack.c.l.b16 %v1089
      %v1138 = vunpack.c.l.b16 %v1090
      %v1139 = vunpack.c.l.b16 %v1091
      %v1140 = vunpack.c.l.b16 %v1092
      %v1141 = vunpack.c.l.b16 %v1093
      %v1142 = vunpack.c.l.b16 %v1094
      %v1143 = vunpack.c.l.b16 %v1095
      %v1144 = vunpack.c.l.b16 %v1096
      %v1145 = vunpack.c.l.b16 %v1097
      %v1146 = vunpack.c.l.b16 %v1098
      %v1147 = vunpack.c.l.b16 %v1099
      %v1148 = vunpack.c.l.b16 %v1100
      %v1149 = vunpack.c.l.b16 %v1101
      %v1150 = vunpack.c.l.b16 %v1102
      %v1151 = vunpack.c.l.b16 %v1103
      %v1152 = vunpack.c.l.b16 %v1104
      %v1153 = vunpack.c.l.b16 %v1105
      %v1154 = vpack.c.b16 %v1131, %v1130
      %v1155 = vpack.c.b16 %v1132, %v1132
      %v1156 = vpack.c.b16 %v1134, %v1133
      %v1157 = vpack.c.b16 %v1135, %v1135
      %v1158 = vpack.c.b16 %v1137, %v1136
      %v1159 = vpack.c.b16 %v1138, %v1138
      %v1160 = vpack.c.b16 %v1140, %v1139
      %v1161 = vpack.c.b16 %v1141, %v1141
      %v1162 = vpack.c.b16 %v1143, %v1142
      %v1163 = vpack.c.b16 %v1144, %v1144
      %v1164 = vpack.c.b16 %v1146, %v1145
      %v1165 = vpack.c.b16 %v1147, %v1147
      %v1166 = vpack.c.b16 %v1149, %v1148
      %v1167 = vpack.c.b16 %v1150, %v1150
      %v1168 = vpack.c.b16 %v1152, %v1151
      %v1169 = vpack.c.b16 %v1153, %v1153
      %v1171 = vshrl.u32 %v1154, 16
      %v1173 = vshll.u32 %v1154, 16
      %v1175 = vrot.slane %v1173, 1
      %v1176 = vor.u32 %v1171, %v1175
      %v1178 = vshll.u32 %v1155, 16
      %v1180 = vrot.slane %v1178, 1
      %v1181 = vsel %vm767, %v1176, %v1180
      %v1183 = vshrl.u32 %v1156, 16
      %v1185 = vshll.u32 %v1156, 16
      %v1187 = vrot.slane %v1185, 1
      %v1188 = vor.u32 %v1183, %v1187
      %v1190 = vshll.u32 %v1157, 16
      %v1192 = vrot.slane %v1190, 1
      %v1193 = vsel %vm767, %v1188, %v1192
      %v1195 = vshrl.u32 %v1158, 16
      %v1197 = vshll.u32 %v1158, 16
      %v1199 = vrot.slane %v1197, 1
      %v1200 = vor.u32 %v1195, %v1199
      %v1202 = vshll.u32 %v1159, 16
      %v1204 = vrot.slane %v1202, 1
      %v1205 = vsel %vm767, %v1200, %v1204
      %v1207 = vshrl.u32 %v1160, 16
      %v1209 = vshll.u32 %v1160, 16
      %v1211 = vrot.slane %v1209, 1
      %v1212 = vor.u32 %v1207, %v1211
      %v1214 = vshll.u32 %v1161, 16
      %v1216 = vrot.slane %v1214, 1
      %v1217 = vsel %vm767, %v1212, %v1216
      %v1219 = vshrl.u32 %v1162, 16
      %v1221 = vshll.u32 %v1162, 16
      %v1223 = vrot.slane %v1221, 1
      %v1224 = vor.u32 %v1219, %v1223
      %v1226 = vshll.u32 %v1163, 16
      %v1228 = vrot.slane %v1226, 1
      %v1229 = vsel %vm767, %v1224, %v1228
      %v1231 = vshrl.u32 %v1164, 16
      %v1233 = vshll.u32 %v1164, 16
      %v1235 = vrot.slane %v1233, 1
      %v1236 = vor.u32 %v1231, %v1235
      %v1238 = vshll.u32 %v1165, 16
      %v1240 = vrot.slane %v1238, 1
      %v1241 = vsel %vm767, %v1236, %v1240
      %v1243 = vshrl.u32 %v1166, 16
      %v1245 = vshll.u32 %v1166, 16
      %v1247 = vrot.slane %v1245, 1
      %v1248 = vor.u32 %v1243, %v1247
      %v1250 = vshll.u32 %v1167, 16
      %v1252 = vrot.slane %v1250, 1
      %v1253 = vsel %vm767, %v1248, %v1252
      %v1255 = vshrl.u32 %v1168, 16
      %v1257 = vshll.u32 %v1168, 16
      %v1259 = vrot.slane %v1257, 1
      %v1260 = vor.u32 %v1255, %v1259
      %v1262 = vshll.u32 %v1169, 16
      %v1264 = vrot.slane %v1262, 1
      %v1265 = vsel %vm767, %v1260, %v1264
      %1274 = vst [vmem:[#allocation2 + $0x20] sm:$0xff] %v1181
      %1275 = vst [vmem:[#allocation2 + $0x68] sm:$0xff] %v1193
      %1276 = vst [vmem:[#allocation2 + $0xb0] sm:$0xff] %v1205
      %1277 = vst [vmem:[#allocation2 + $0xf8] sm:$0xff] %v1217
      %1278 = vst [vmem:[#allocation2 + $0x140] sm:$0xff] %v1229
      %1279 = vst [vmem:[#allocation2 + $0x188] sm:$0xff] %v1241
      %1280 = vst [vmem:[#allocation2 + $0x1d0] sm:$0xff] %v1253
      %1281 = vst [vmem:[#allocation2 + $0x218] sm:$0xff] %v1265
      %v1282 = vld [vmem:[%s1009] sm:$0xe]
      %v1283 = vld [vmem:[%s1009 + $0x4] sm:$0xf]
      %v1284 = vld [vmem:[%s1009 + $0x8] sm:$0x1]
      %v1285 = vld [vmem:[%s1009 + $0xc] sm:$0xe]
      %v1286 = vld [vmem:[%s1009 + $0x10] sm:$0xf]
      %v1287 = vld [vmem:[%s1009 + $0x14] sm:$0x1]
      %v1288 = vld [vmem:[%s1009 + $0x18] sm:$0xe]
      %v1289 = vld [vmem:[%s1009 + $0x1c] sm:$0xf]
      %v1290 = vld [vmem:[%s1009 + $0x20] sm:$0x1]
      %v1291 = vld [vmem:[%s1009 + $0x24] sm:$0xe]
      %v1292 = vld [vmem:[%s1009 + $0x28] sm:$0xf]
      %v1293 = vld [vmem:[%s1009 + $0x2c] sm:$0x1]
      %v1294 = vld [vmem:[%s1009 + $0x30] sm:$0xe]
      %v1295 = vld [vmem:[%s1009 + $0x34] sm:$0xf]
      %v1296 = vld [vmem:[%s1009 + $0x38] sm:$0x1]
      %v1297 = vld [vmem:[%s1009 + $0x3c] sm:$0xe]
      %v1298 = vld [vmem:[%s1009 + $0x40] sm:$0xf]
      %v1299 = vld [vmem:[%s1009 + $0x44] sm:$0x1]
      %v1300 = vld [vmem:[%s1009 + $0x48] sm:$0xe]
      %v1301 = vld [vmem:[%s1009 + $0x4c] sm:$0xf]
      %v1302 = vld [vmem:[%s1009 + $0x50] sm:$0x1]
      %v1303 = vld [vmem:[%s1009 + $0x54] sm:$0xe]
      %v1304 = vld [vmem:[%s1009 + $0x58] sm:$0xf]
      %v1305 = vld [vmem:[%s1009 + $0x5c] sm:$0x1]
      %v1330 = vunpack.c.l.b16 %v1282
      %v1331 = vunpack.c.l.b16 %v1283
      %v1332 = vunpack.c.l.b16 %v1284
      %v1333 = vunpack.c.l.b16 %v1285
      %v1334 = vunpack.c.l.b16 %v1286
      %v1335 = vunpack.c.l.b16 %v1287
      %v1336 = vunpack.c.l.b16 %v1288
      %v1337 = vunpack.c.l.b16 %v1289
      %v1338 = vunpack.c.l.b16 %v1290
      %v1339 = vunpack.c.l.b16 %v1291
      %v1340 = vunpack.c.l.b16 %v1292
      %v1341 = vunpack.c.l.b16 %v1293
      %v1342 = vunpack.c.l.b16 %v1294
      %v1343 = vunpack.c.l.b16 %v1295
      %v1344 = vunpack.c.l.b16 %v1296
      %v1345 = vunpack.c.l.b16 %v1297
      %v1346 = vunpack.c.l.b16 %v1298
      %v1347 = vunpack.c.l.b16 %v1299
      %v1348 = vunpack.c.l.b16 %v1300
      %v1349 = vunpack.c.l.b16 %v1301
      %v1350 = vunpack.c.l.b16 %v1302
      %v1351 = vunpack.c.l.b16 %v1303
      %v1352 = vunpack.c.l.b16 %v1304
      %v1353 = vunpack.c.l.b16 %v1305
      %v1354 = vpack.c.b16 %v1331, %v1330
      %v1355 = vpack.c.b16 %v1332, %v1332
      %v1356 = vpack.c.b16 %v1334, %v1333
      %v1357 = vpack.c.b16 %v1335, %v1335
      %v1358 = vpack.c.b16 %v1337, %v1336
      %v1359 = vpack.c.b16 %v1338, %v1338
      %v1360 = vpack.c.b16 %v1340, %v1339
      %v1361 = vpack.c.b16 %v1341, %v1341
      %v1362 = vpack.c.b16 %v1343, %v1342
      %v1363 = vpack.c.b16 %v1344, %v1344
      %v1364 = vpack.c.b16 %v1346, %v1345
      %v1365 = vpack.c.b16 %v1347, %v1347
      %v1366 = vpack.c.b16 %v1349, %v1348
      %v1367 = vpack.c.b16 %v1350, %v1350
      %v1368 = vpack.c.b16 %v1352, %v1351
      %v1369 = vpack.c.b16 %v1353, %v1353
      %v1370 = vrot.slane %v1354, 1
      %v1371 = vrot.slane %v1355, 1
      %v1372 = vsel %vm968, %v1370, %v1371
      %v1373 = vrot.slane %v1356, 1
      %v1374 = vrot.slane %v1357, 1
      %v1375 = vsel %vm968, %v1373, %v1374
      %v1376 = vrot.slane %v1358, 1
      %v1377 = vrot.slane %v1359, 1
      %v1378 = vsel %vm968, %v1376, %v1377
      %v1379 = vrot.slane %v1360, 1
      %v1380 = vrot.slane %v1361, 1
      %v1381 = vsel %vm968, %v1379, %v1380
      %v1382 = vrot.slane %v1362, 1
      %v1383 = vrot.slane %v1363, 1
      %v1384 = vsel %vm968, %v1382, %v1383
      %v1385 = vrot.slane %v1364, 1
      %v1386 = vrot.slane %v1365, 1
      %v1387 = vsel %vm968, %v1385, %v1386
      %v1388 = vrot.slane %v1366, 1
      %v1389 = vrot.slane %v1367, 1
      %v1390 = vsel %vm968, %v1388, %v1389
      %v1391 = vrot.slane %v1368, 1
      %v1392 = vrot.slane %v1369, 1
      %v1393 = vsel %vm968, %v1391, %v1392
      %1402 = vst [vmem:[#allocation2 + $0x28] sm:$0xff] %v1372
      %1403 = vst [vmem:[#allocation2 + $0x70] sm:$0xff] %v1375
      %1404 = vst [vmem:[#allocation2 + $0xb8] sm:$0xff] %v1378
      %1405 = vst [vmem:[#allocation2 + $0x100] sm:$0xff] %v1381
      %1406 = vst [vmem:[#allocation2 + $0x148] sm:$0xff] %v1384
      %1407 = vst [vmem:[#allocation2 + $0x190] sm:$0xff] %v1387
      %1408 = vst [vmem:[#allocation2 + $0x1d8] sm:$0xff] %v1390
      %1409 = vst [vmem:[#allocation2 + $0x220] sm:$0xff] %v1393
      %s1410 = scalar_lea.vmem [#allocation3], 24
      %v1411 = vld [vmem:[%s1410] sm:$0xf]
      %v1412 = vld [vmem:[%s1410 + $0x4] sm:$0xf]
      %v1413 = vld [vmem:[%s1410 + $0xc] sm:$0xf]
      %v1414 = vld [vmem:[%s1410 + $0x10] sm:$0xf]
      %v1415 = vld [vmem:[%s1410 + $0x18] sm:$0xf]
      %v1416 = vld [vmem:[%s1410 + $0x1c] sm:$0xf]
      %v1417 = vld [vmem:[%s1410 + $0x24] sm:$0xf]
      %v1418 = vld [vmem:[%s1410 + $0x28] sm:$0xf]
      %v1419 = vld [vmem:[%s1410 + $0x30] sm:$0xf]
      %v1420 = vld [vmem:[%s1410 + $0x34] sm:$0xf]
      %v1421 = vld [vmem:[%s1410 + $0x3c] sm:$0xf]
      %v1422 = vld [vmem:[%s1410 + $0x40] sm:$0xf]
      %v1423 = vld [vmem:[%s1410 + $0x48] sm:$0xf]
      %v1424 = vld [vmem:[%s1410 + $0x4c] sm:$0xf]
      %v1425 = vld [vmem:[%s1410 + $0x54] sm:$0xf]
      %v1426 = vld [vmem:[%s1410 + $0x58] sm:$0xf]
      %v1443 = vunpack.c.l.b16 %v1411
      %v1444 = vunpack.c.l.b16 %v1412
      %v1445 = vunpack.c.l.b16 %v1413
      %v1446 = vunpack.c.l.b16 %v1414
      %v1447 = vunpack.c.l.b16 %v1415
      %v1448 = vunpack.c.l.b16 %v1416
      %v1449 = vunpack.c.l.b16 %v1417
      %v1450 = vunpack.c.l.b16 %v1418
      %v1451 = vunpack.c.l.b16 %v1419
      %v1452 = vunpack.c.l.b16 %v1420
      %v1453 = vunpack.c.l.b16 %v1421
      %v1454 = vunpack.c.l.b16 %v1422
      %v1455 = vunpack.c.l.b16 %v1423
      %v1456 = vunpack.c.l.b16 %v1424
      %v1457 = vunpack.c.l.b16 %v1425
      %v1458 = vunpack.c.l.b16 %v1426
      %v1459 = vpack.c.b16 %v1444, %v1443
      %v1460 = vpack.c.b16 %v1446, %v1445
      %v1461 = vpack.c.b16 %v1448, %v1447
      %v1462 = vpack.c.b16 %v1450, %v1449
      %v1463 = vpack.c.b16 %v1452, %v1451
      %v1464 = vpack.c.b16 %v1454, %v1453
      %v1465 = vpack.c.b16 %v1456, %v1455
      %v1466 = vpack.c.b16 %v1458, %v1457
      %1475 = vst [vmem:[#allocation2 + $0x30] sm:$0xff] %v1459
      %1476 = vst [vmem:[#allocation2 + $0x78] sm:$0xff] %v1460
      %1477 = vst [vmem:[#allocation2 + $0xc0] sm:$0xff] %v1461
      %1478 = vst [vmem:[#allocation2 + $0x108] sm:$0xff] %v1462
      %1479 = vst [vmem:[#allocation2 + $0x150] sm:$0xff] %v1463
      %1480 = vst [vmem:[#allocation2 + $0x198] sm:$0xff] %v1464
      %1481 = vst [vmem:[#allocation2 + $0x1e0] sm:$0xff] %v1465
      %1482 = vst [vmem:[#allocation2 + $0x228] sm:$0xff] %v1466
      %v1483 = vld [vmem:[%s1410] sm:$0xf]
      %v1484 = vld [vmem:[%s1410 + $0x4] sm:$0xf]
      %v1485 = vld [vmem:[%s1410 + $0x8] sm:$0x1]
      %v1486 = vld [vmem:[%s1410 + $0xc] sm:$0xf]
      %v1487 = vld [vmem:[%s1410 + $0x10] sm:$0xf]
      %v1488 = vld [vmem:[%s1410 + $0x14] sm:$0x1]
      %v1489 = vld [vmem:[%s1410 + $0x18] sm:$0xf]
      %v1490 = vld [vmem:[%s1410 + $0x1c] sm:$0xf]
      %v1491 = vld [vmem:[%s1410 + $0x20] sm:$0x1]
      %v1492 = vld [vmem:[%s1410 + $0x24] sm:$0xf]
      %v1493 = vld [vmem:[%s1410 + $0x28] sm:$0xf]
      %v1494 = vld [vmem:[%s1410 + $0x2c] sm:$0x1]
      %v1495 = vld [vmem:[%s1410 + $0x30] sm:$0xf]
      %v1496 = vld [vmem:[%s1410 + $0x34] sm:$0xf]
      %v1497 = vld [vmem:[%s1410 + $0x38] sm:$0x1]
      %v1498 = vld [vmem:[%s1410 + $0x3c] sm:$0xf]
      %v1499 = vld [vmem:[%s1410 + $0x40] sm:$0xf]
      %v1500 = vld [vmem:[%s1410 + $0x44] sm:$0x1]
      %v1501 = vld [vmem:[%s1410 + $0x48] sm:$0xf]
      %v1502 = vld [vmem:[%s1410 + $0x4c] sm:$0xf]
      %v1503 = vld [vmem:[%s1410 + $0x50] sm:$0x1]
      %v1504 = vld [vmem:[%s1410 + $0x54] sm:$0xf]
      %v1505 = vld [vmem:[%s1410 + $0x58] sm:$0xf]
      %v1506 = vld [vmem:[%s1410 + $0x5c] sm:$0x1]
      %v1531 = vunpack.c.l.b16 %v1483
      %v1532 = vunpack.c.l.b16 %v1484
      %v1533 = vunpack.c.l.b16 %v1485
      %v1534 = vunpack.c.l.b16 %v1486
      %v1535 = vunpack.c.l.b16 %v1487
      %v1536 = vunpack.c.l.b16 %v1488
      %v1537 = vunpack.c.l.b16 %v1489
      %v1538 = vunpack.c.l.b16 %v1490
      %v1539 = vunpack.c.l.b16 %v1491
      %v1540 = vunpack.c.l.b16 %v1492
      %v1541 = vunpack.c.l.b16 %v1493
      %v1542 = vunpack.c.l.b16 %v1494
      %v1543 = vunpack.c.l.b16 %v1495
      %v1544 = vunpack.c.l.b16 %v1496
      %v1545 = vunpack.c.l.b16 %v1497
      %v1546 = vunpack.c.l.b16 %v1498
      %v1547 = vunpack.c.l.b16 %v1499
      %v1548 = vunpack.c.l.b16 %v1500
      %v1549 = vunpack.c.l.b16 %v1501
      %v1550 = vunpack.c.l.b16 %v1502
      %v1551 = vunpack.c.l.b16 %v1503
      %v1552 = vunpack.c.l.b16 %v1504
      %v1553 = vunpack.c.l.b16 %v1505
      %v1554 = vunpack.c.l.b16 %v1506
      %v1555 = vpack.c.b16 %v1532, %v1531
      %v1556 = vpack.c.b16 %v1533, %v1533
      %v1557 = vpack.c.b16 %v1535, %v1534
      %v1558 = vpack.c.b16 %v1536, %v1536
      %v1559 = vpack.c.b16 %v1538, %v1537
      %v1560 = vpack.c.b16 %v1539, %v1539
      %v1561 = vpack.c.b16 %v1541, %v1540
      %v1562 = vpack.c.b16 %v1542, %v1542
      %v1563 = vpack.c.b16 %v1544, %v1543
      %v1564 = vpack.c.b16 %v1545, %v1545
      %v1565 = vpack.c.b16 %v1547, %v1546
      %v1566 = vpack.c.b16 %v1548, %v1548
      %v1567 = vpack.c.b16 %v1550, %v1549
      %v1568 = vpack.c.b16 %v1551, %v1551
      %v1569 = vpack.c.b16 %v1553, %v1552
      %v1570 = vpack.c.b16 %v1554, %v1554
      %v1572 = vshrl.u32 %v1555, 16
      %v1574 = vshll.u32 %v1555, 16
      %v1576 = vrot.slane %v1574, 1
      %v1577 = vor.u32 %v1572, %v1576
      %v1579 = vshll.u32 %v1556, 16
      %v1581 = vrot.slane %v1579, 1
      %v1582 = vsel %vm767, %v1577, %v1581
      %v1584 = vshrl.u32 %v1557, 16
      %v1586 = vshll.u32 %v1557, 16
      %v1588 = vrot.slane %v1586, 1
      %v1589 = vor.u32 %v1584, %v1588
      %v1591 = vshll.u32 %v1558, 16
      %v1593 = vrot.slane %v1591, 1
      %v1594 = vsel %vm767, %v1589, %v1593
      %v1596 = vshrl.u32 %v1559, 16
      %v1598 = vshll.u32 %v1559, 16
      %v1600 = vrot.slane %v1598, 1
      %v1601 = vor.u32 %v1596, %v1600
      %v1603 = vshll.u32 %v1560, 16
      %v1605 = vrot.slane %v1603, 1
      %v1606 = vsel %vm767, %v1601, %v1605
      %v1608 = vshrl.u32 %v1561, 16
      %v1610 = vshll.u32 %v1561, 16
      %v1612 = vrot.slane %v1610, 1
      %v1613 = vor.u32 %v1608, %v1612
      %v1615 = vshll.u32 %v1562, 16
      %v1617 = vrot.slane %v1615, 1
      %v1618 = vsel %vm767, %v1613, %v1617
      %v1620 = vshrl.u32 %v1563, 16
      %v1622 = vshll.u32 %v1563, 16
      %v1624 = vrot.slane %v1622, 1
      %v1625 = vor.u32 %v1620, %v1624
      %v1627 = vshll.u32 %v1564, 16
      %v1629 = vrot.slane %v1627, 1
      %v1630 = vsel %vm767, %v1625, %v1629
      %v1632 = vshrl.u32 %v1565, 16
      %v1634 = vshll.u32 %v1565, 16
      %v1636 = vrot.slane %v1634, 1
      %v1637 = vor.u32 %v1632, %v1636
      %v1639 = vshll.u32 %v1566, 16
      %v1641 = vrot.slane %v1639, 1
      %v1642 = vsel %vm767, %v1637, %v1641
      %v1644 = vshrl.u32 %v1567, 16
      %v1646 = vshll.u32 %v1567, 16
      %v1648 = vrot.slane %v1646, 1
      %v1649 = vor.u32 %v1644, %v1648
      %v1651 = vshll.u32 %v1568, 16
      %v1653 = vrot.slane %v1651, 1
      %v1654 = vsel %vm767, %v1649, %v1653
      %v1656 = vshrl.u32 %v1569, 16
      %v1658 = vshll.u32 %v1569, 16
      %v1660 = vrot.slane %v1658, 1
      %v1661 = vor.u32 %v1656, %v1660
      %v1663 = vshll.u32 %v1570, 16
      %v1665 = vrot.slane %v1663, 1
      %v1666 = vsel %vm767, %v1661, %v1665
      %1675 = vst [vmem:[#allocation2 + $0x38] sm:$0xff] %v1582
      %1676 = vst [vmem:[#allocation2 + $0x80] sm:$0xff] %v1594
      %1677 = vst [vmem:[#allocation2 + $0xc8] sm:$0xff] %v1606
      %1678 = vst [vmem:[#allocation2 + $0x110] sm:$0xff] %v1618
      %1679 = vst [vmem:[#allocation2 + $0x158] sm:$0xff] %v1630
      %1680 = vst [vmem:[#allocation2 + $0x1a0] sm:$0xff] %v1642
      %1681 = vst [vmem:[#allocation2 + $0x1e8] sm:$0xff] %v1654
      %1682 = vst [vmem:[#allocation2 + $0x230] sm:$0xff] %v1666
      %v1683 = vld [vmem:[%s1410] sm:$0xe]
      %v1684 = vld [vmem:[%s1410 + $0x4] sm:$0xf]
      %v1685 = vld [vmem:[%s1410 + $0x8] sm:$0x1]
      %v1686 = vld [vmem:[%s1410 + $0xc] sm:$0xe]
      %v1687 = vld [vmem:[%s1410 + $0x10] sm:$0xf]
      %v1688 = vld [vmem:[%s1410 + $0x14] sm:$0x1]
      %v1689 = vld [vmem:[%s1410 + $0x18] sm:$0xe]
      %v1690 = vld [vmem:[%s1410 + $0x1c] sm:$0xf]
      %v1691 = vld [vmem:[%s1410 + $0x20] sm:$0x1]
      %v1692 = vld [vmem:[%s1410 + $0x24] sm:$0xe]
      %v1693 = vld [vmem:[%s1410 + $0x28] sm:$0xf]
      %v1694 = vld [vmem:[%s1410 + $0x2c] sm:$0x1]
      %v1695 = vld [vmem:[%s1410 + $0x30] sm:$0xe]
      %v1696 = vld [vmem:[%s1410 + $0x34] sm:$0xf]
      %v1697 = vld [vmem:[%s1410 + $0x38] sm:$0x1]
      %v1698 = vld [vmem:[%s1410 + $0x3c] sm:$0xe]
      %v1699 = vld [vmem:[%s1410 + $0x40] sm:$0xf]
      %v1700 = vld [vmem:[%s1410 + $0x44] sm:$0x1]
      %v1701 = vld [vmem:[%s1410 + $0x48] sm:$0xe]
      %v1702 = vld [vmem:[%s1410 + $0x4c] sm:$0xf]
      %v1703 = vld [vmem:[%s1410 + $0x50] sm:$0x1]
      %v1704 = vld [vmem:[%s1410 + $0x54] sm:$0xe]
      %v1705 = vld [vmem:[%s1410 + $0x58] sm:$0xf]
      %v1706 = vld [vmem:[%s1410 + $0x5c] sm:$0x1]
      %v1731 = vunpack.c.l.b16 %v1683
      %v1732 = vunpack.c.l.b16 %v1684
      %v1733 = vunpack.c.l.b16 %v1685
      %v1734 = vunpack.c.l.b16 %v1686
      %v1735 = vunpack.c.l.b16 %v1687
      %v1736 = vunpack.c.l.b16 %v1688
      %v1737 = vunpack.c.l.b16 %v1689
      %v1738 = vunpack.c.l.b16 %v1690
      %v1739 = vunpack.c.l.b16 %v1691
      %v1740 = vunpack.c.l.b16 %v1692
      %v1741 = vunpack.c.l.b16 %v1693
      %v1742 = vunpack.c.l.b16 %v1694
      %v1743 = vunpack.c.l.b16 %v1695
      %v1744 = vunpack.c.l.b16 %v1696
      %v1745 = vunpack.c.l.b16 %v1697
      %v1746 = vunpack.c.l.b16 %v1698
      %v1747 = vunpack.c.l.b16 %v1699
      %v1748 = vunpack.c.l.b16 %v1700
      %v1749 = vunpack.c.l.b16 %v1701
      %v1750 = vunpack.c.l.b16 %v1702
      %v1751 = vunpack.c.l.b16 %v1703
      %v1752 = vunpack.c.l.b16 %v1704
      %v1753 = vunpack.c.l.b16 %v1705
      %v1754 = vunpack.c.l.b16 %v1706
      %v1755 = vpack.c.b16 %v1732, %v1731
      %v1756 = vpack.c.b16 %v1733, %v1733
      %v1757 = vpack.c.b16 %v1735, %v1734
      %v1758 = vpack.c.b16 %v1736, %v1736
      %v1759 = vpack.c.b16 %v1738, %v1737
      %v1760 = vpack.c.b16 %v1739, %v1739
      %v1761 = vpack.c.b16 %v1741, %v1740
      %v1762 = vpack.c.b16 %v1742, %v1742
      %v1763 = vpack.c.b16 %v1744, %v1743
      %v1764 = vpack.c.b16 %v1745, %v1745
      %v1765 = vpack.c.b16 %v1747, %v1746
      %v1766 = vpack.c.b16 %v1748, %v1748
      %v1767 = vpack.c.b16 %v1750, %v1749
      %v1768 = vpack.c.b16 %v1751, %v1751
      %v1769 = vpack.c.b16 %v1753, %v1752
      %v1770 = vpack.c.b16 %v1754, %v1754
      %v1771 = vrot.slane %v1755, 1
      %v1772 = vrot.slane %v1756, 1
      %v1773 = vsel %vm968, %v1771, %v1772
      %v1774 = vrot.slane %v1757, 1
      %v1775 = vrot.slane %v1758, 1
      %v1776 = vsel %vm968, %v1774, %v1775
      %v1777 = vrot.slane %v1759, 1
      %v1778 = vrot.slane %v1760, 1
      %v1779 = vsel %vm968, %v1777, %v1778
      %v1780 = vrot.slane %v1761, 1
      %v1781 = vrot.slane %v1762, 1
      %v1782 = vsel %vm968, %v1780, %v1781
      %v1783 = vrot.slane %v1763, 1
      %v1784 = vrot.slane %v1764, 1
      %v1785 = vsel %vm968, %v1783, %v1784
      %v1786 = vrot.slane %v1765, 1
      %v1787 = vrot.slane %v1766, 1
      %v1788 = vsel %vm968, %v1786, %v1787
      %v1789 = vrot.slane %v1767, 1
      %v1790 = vrot.slane %v1768, 1
      %v1791 = vsel %vm968, %v1789, %v1790
      %v1792 = vrot.slane %v1769, 1
      %v1793 = vrot.slane %v1770, 1
      %v1794 = vsel %vm968, %v1792, %v1793
      %1803 = vst [vmem:[#allocation2 + $0x40] sm:$0xff] %v1773
      %1804 = vst [vmem:[#allocation2 + $0x88] sm:$0xff] %v1776
      %1805 = vst [vmem:[#allocation2 + $0xd0] sm:$0xff] %v1779
      %1806 = vst [vmem:[#allocation2 + $0x118] sm:$0xff] %v1782
      %1807 = vst [vmem:[#allocation2 + $0x160] sm:$0xff] %v1785
      %1808 = vst [vmem:[#allocation2 + $0x1a8] sm:$0xff] %v1788
      %1809 = vst [vmem:[#allocation2 + $0x1f0] sm:$0xff] %v1791
      %1810 = vst [vmem:[#allocation2 + $0x238] sm:$0xff] %v1794
      %v1811 = vld [vmem:[#allocation2] sm:$0xff]
      %v1812 = vld [vmem:[#allocation2 + $0x8] sm:$0xff]
      %v1813 = vld [vmem:[#allocation2 + $0x10] sm:$0xff]
      %v1814 = vld [vmem:[#allocation2 + $0x18] sm:$0xff]
      %v1815 = vld [vmem:[#allocation2 + $0x20] sm:$0xff]
      %v1816 = vld [vmem:[#allocation2 + $0x28] sm:$0xff]
      %v1817 = vld [vmem:[#allocation2 + $0x30] sm:$0xff]
      %v1818 = vld [vmem:[#allocation2 + $0x38] sm:$0xff]
      %v1819 = vld [vmem:[#allocation2 + $0x40] sm:$0xff]
      %v1820 = vld [vmem:[#allocation2 + $0x48] sm:$0xff]
      %v1821 = vld [vmem:[#allocation2 + $0x50] sm:$0xff]
      %v1822 = vld [vmem:[#allocation2 + $0x58] sm:$0xff]
      %v1823 = vld [vmem:[#allocation2 + $0x60] sm:$0xff]
      %v1824 = vld [vmem:[#allocation2 + $0x68] sm:$0xff]
      %v1825 = vld [vmem:[#allocation2 + $0x70] sm:$0xff]
      %v1826 = vld [vmem:[#allocation2 + $0x78] sm:$0xff]
      %v1827 = vld [vmem:[#allocation2 + $0x80] sm:$0xff]
      %v1828 = vld [vmem:[#allocation2 + $0x88] sm:$0xff]
      %v1829 = vld [vmem:[#allocation2 + $0x90] sm:$0xff]
      %v1830 = vld [vmem:[#allocation2 + $0x98] sm:$0xff]
      %v1831 = vld [vmem:[#allocation2 + $0xa0] sm:$0xff]
      %v1832 = vld [vmem:[#allocation2 + $0xa8] sm:$0xff]
      %v1833 = vld [vmem:[#allocation2 + $0xb0] sm:$0xff]
      %v1834 = vld [vmem:[#allocation2 + $0xb8] sm:$0xff]
      %v1835 = vld [vmem:[#allocation2 + $0xc0] sm:$0xff]
      %v1836 = vld [vmem:[#allocation2 + $0xc8] sm:$0xff]
      %v1837 = vld [vmem:[#allocation2 + $0xd0] sm:$0xff]
      %v1838 = vld [vmem:[#allocation2 + $0xd8] sm:$0xff]
      %v1839 = vld [vmem:[#allocation2 + $0xe0] sm:$0xff]
      %v1840 = vld [vmem:[#allocation2 + $0xe8] sm:$0xff]
      %v1841 = vld [vmem:[#allocation2 + $0xf0] sm:$0xff]
      %v1842 = vld [vmem:[#allocation2 + $0xf8] sm:$0xff]
      %v1843 = vld [vmem:[#allocation2 + $0x100] sm:$0xff]
      %v1844 = vld [vmem:[#allocation2 + $0x108] sm:$0xff]
      %v1845 = vld [vmem:[#allocation2 + $0x110] sm:$0xff]
      %v1846 = vld [vmem:[#allocation2 + $0x118] sm:$0xff]
      %v1847 = vld [vmem:[#allocation2 + $0x120] sm:$0xff]
      %v1848 = vld [vmem:[#allocation2 + $0x128] sm:$0xff]
      %v1849 = vld [vmem:[#allocation2 + $0x130] sm:$0xff]
      %v1850 = vld [vmem:[#allocation2 + $0x138] sm:$0xff]
      %v1851 = vld [vmem:[#allocation2 + $0x140] sm:$0xff]
      %v1852 = vld [vmem:[#allocation2 + $0x148] sm:$0xff]
      %v1853 = vld [vmem:[#allocation2 + $0x150] sm:$0xff]
      %v1854 = vld [vmem:[#allocation2 + $0x158] sm:$0xff]
      %v1855 = vld [vmem:[#allocation2 + $0x160] sm:$0xff]
      %v1856 = vld [vmem:[#allocation2 + $0x168] sm:$0xff]
      %v1857 = vld [vmem:[#allocation2 + $0x170] sm:$0xff]
      %v1858 = vld [vmem:[#allocation2 + $0x178] sm:$0xff]
      %v1859 = vld [vmem:[#allocation2 + $0x180] sm:$0xff]
      %v1860 = vld [vmem:[#allocation2 + $0x188] sm:$0xff]
      %v1861 = vld [vmem:[#allocation2 + $0x190] sm:$0xff]
      %v1862 = vld [vmem:[#allocation2 + $0x198] sm:$0xff]
      %v1863 = vld [vmem:[#allocation2 + $0x1a0] sm:$0xff]
      %v1864 = vld [vmem:[#allocation2 + $0x1a8] sm:$0xff]
      %v1865 = vld [vmem:[#allocation2 + $0x1b0] sm:$0xff]
      %v1866 = vld [vmem:[#allocation2 + $0x1b8] sm:$0xff]
      %v1867 = vld [vmem:[#allocation2 + $0x1c0] sm:$0xff]
      %v1868 = vld [vmem:[#allocation2 + $0x1c8] sm:$0xff]
      %v1869 = vld [vmem:[#allocation2 + $0x1d0] sm:$0xff]
      %v1870 = vld [vmem:[#allocation2 + $0x1d8] sm:$0xff]
      %v1871 = vld [vmem:[#allocation2 + $0x1e0] sm:$0xff]
      %v1872 = vld [vmem:[#allocation2 + $0x1e8] sm:$0xff]
      %v1873 = vld [vmem:[#allocation2 + $0x1f0] sm:$0xff]
      %v1874 = vld [vmem:[#allocation2 + $0x1f8] sm:$0xff]
      %v1875 = vld [vmem:[#allocation2 + $0x200] sm:$0xff]
      %v1876 = vld [vmem:[#allocation2 + $0x208] sm:$0xff]
      %v1877 = vld [vmem:[#allocation2 + $0x210] sm:$0xff]
      %v1878 = vld [vmem:[#allocation2 + $0x218] sm:$0xff]
      %v1879 = vld [vmem:[#allocation2 + $0x220] sm:$0xff]
      %v1880 = vld [vmem:[#allocation2 + $0x228] sm:$0xff]
      %v1881 = vld [vmem:[#allocation2 + $0x230] sm:$0xff]
      %v1882 = vld [vmem:[#allocation2 + $0x238] sm:$0xff]
      %v1883 = vld [vmem:[%s1] sm:$0xf]
      %v1884 = vld [vmem:[%s1 + $0x4] sm:$0xf]
      %v1885 = vld [vmem:[%s1 + $0x8] sm:$0xf]
      %v1886 = vld [vmem:[%s1 + $0xc] sm:$0xf]
      %v1887 = vld [vmem:[%s1 + $0x10] sm:$0xf]
      %v1888 = vld [vmem:[%s1 + $0x14] sm:$0xf]
      %v1889 = vld [vmem:[%s1 + $0x18] sm:$0xf]
      %v1890 = vld [vmem:[%s1 + $0x1c] sm:$0xf]
      %v1891 = vld [vmem:[%s1 + $0x20] sm:$0xf]
      %v1892 = vld [vmem:[%s1 + $0x24] sm:$0xf]
      %v1893 = vld [vmem:[%s1 + $0x28] sm:$0xf]
      %v1894 = vld [vmem:[%s1 + $0x2c] sm:$0xf]
      %v1895 = vld [vmem:[%s1 + $0x30] sm:$0xf]
      %v1896 = vld [vmem:[%s1 + $0x34] sm:$0xf]
      %v1897 = vld [vmem:[%s1 + $0x38] sm:$0xf]
      %v1898 = vld [vmem:[%s1 + $0x3c] sm:$0xf]
      %v1899 = vld [vmem:[%s1 + $0x40] sm:$0xf]
      %v1900 = vld [vmem:[%s1 + $0x44] sm:$0xf]
      %v1901 = vld [vmem:[%s1 + $0x48] sm:$0xf]
      %v1902 = vld [vmem:[%s1 + $0x4c] sm:$0xf]
      %v1903 = vld [vmem:[%s1 + $0x50] sm:$0xf]
      %v1904 = vld [vmem:[%s1 + $0x54] sm:$0xf]
      %v1905 = vld [vmem:[%s1 + $0x58] sm:$0xf]
      %v1906 = vld [vmem:[%s1 + $0x5c] sm:$0xf]
      %v1907 = vld [vmem:[%s1 + $0x60] sm:$0xf]
      %v1908 = vld [vmem:[%s1 + $0x64] sm:$0xf]
      %v1909 = vld [vmem:[%s1 + $0x68] sm:$0xf]
      %v1910 = vld [vmem:[%s1 + $0x6c] sm:$0xf]
      %v1911 = vld [vmem:[%s1 + $0x70] sm:$0xf]
      %v1912 = vld [vmem:[%s1 + $0x74] sm:$0xf]
      %v1913 = vld [vmem:[%s1 + $0x78] sm:$0xf]
      %v1914 = vld [vmem:[%s1 + $0x7c] sm:$0xf]
      %v1915 = vld [vmem:[%s1 + $0x80] sm:$0xf]
      %v1916 = vld [vmem:[%s1 + $0x84] sm:$0xf]
      %v1917 = vld [vmem:[%s1 + $0x88] sm:$0xf]
      %v1918 = vld [vmem:[%s1 + $0x8c] sm:$0xf]
      %v1919 = vld [vmem:[%s1 + $0x90] sm:$0xf]
      %v1920 = vld [vmem:[%s1 + $0x94] sm:$0xf]
      %v1921 = vld [vmem:[%s1 + $0x98] sm:$0xf]
      %v1922 = vld [vmem:[%s1 + $0x9c] sm:$0xf]
      %v1923 = vld [vmem:[%s1 + $0xa0] sm:$0xf]
      %v1924 = vld [vmem:[%s1 + $0xa4] sm:$0xf]
      %v1925 = vld [vmem:[%s1 + $0xa8] sm:$0xf]
      %v1926 = vld [vmem:[%s1 + $0xac] sm:$0xf]
      %v1927 = vld [vmem:[%s1 + $0xb0] sm:$0xf]
      %v1928 = vld [vmem:[%s1 + $0xb4] sm:$0xf]
      %v1929 = vld [vmem:[%s1 + $0xb8] sm:$0xf]
      %v1930 = vld [vmem:[%s1 + $0xbc] sm:$0xf]
      %v1931 = vld [vmem:[%s1 + $0xc0] sm:$0xf]
      %v1932 = vld [vmem:[%s1 + $0xc4] sm:$0xf]
      %v1933 = vld [vmem:[%s1 + $0xc8] sm:$0xf]
      %v1934 = vld [vmem:[%s1 + $0xcc] sm:$0xf]
      %v1935 = vld [vmem:[%s1 + $0xd0] sm:$0xf]
      %v1936 = vld [vmem:[%s1 + $0xd4] sm:$0xf]
      %v1937 = vld [vmem:[%s1 + $0xd8] sm:$0xf]
      %v1938 = vld [vmem:[%s1 + $0xdc] sm:$0xf]
      %v1939 = vld [vmem:[%s1 + $0xe0] sm:$0xf]
      %v1940 = vld [vmem:[%s1 + $0xe4] sm:$0xf]
      %v1941 = vld [vmem:[%s1 + $0xe8] sm:$0xf]
      %v1942 = vld [vmem:[%s1 + $0xec] sm:$0xf]
      %v1943 = vld [vmem:[%s1 + $0xf0] sm:$0xf]
      %v1944 = vld [vmem:[%s1 + $0xf4] sm:$0xf]
      %v1945 = vld [vmem:[%s1 + $0xf8] sm:$0xf]
      %v1946 = vld [vmem:[%s1 + $0xfc] sm:$0xf]
      %v1947 = vld [vmem:[%s1 + $0x100] sm:$0xf]
      %v1948 = vld [vmem:[%s1 + $0x104] sm:$0xf]
      %v1949 = vld [vmem:[%s1 + $0x108] sm:$0xf]
      %v1950 = vld [vmem:[%s1 + $0x10c] sm:$0xf]
      %v1951 = vld [vmem:[%s1 + $0x110] sm:$0xf]
      %v1952 = vld [vmem:[%s1 + $0x114] sm:$0xf]
      %v1953 = vld [vmem:[%s1 + $0x118] sm:$0xf]
      %v1954 = vld [vmem:[%s1 + $0x11c] sm:$0xf]
      %v1955 = vld [vmem:[%s1 + $0x120] sm:$0xf]
      %v1956 = vld [vmem:[%s1 + $0x124] sm:$0xf]
      %v1957 = vld [vmem:[%s1 + $0x128] sm:$0xf]
      %v1958 = vld [vmem:[%s1 + $0x12c] sm:$0xf]
      %v1959 = vld [vmem:[%s1 + $0x130] sm:$0xf]
      %v1960 = vld [vmem:[%s1 + $0x134] sm:$0xf]
      %v1961 = vld [vmem:[%s1 + $0x138] sm:$0xf]
      %v1962 = vld [vmem:[%s1 + $0x13c] sm:$0xf]
      %v1963 = vld [vmem:[%s1 + $0x140] sm:$0xf]
      %v1964 = vld [vmem:[%s1 + $0x144] sm:$0xf]
      %v1965 = vld [vmem:[%s1 + $0x148] sm:$0xf]
      %v1966 = vld [vmem:[%s1 + $0x14c] sm:$0xf]
      %v1967 = vld [vmem:[%s1 + $0x150] sm:$0xf]
      %v1968 = vld [vmem:[%s1 + $0x154] sm:$0xf]
      %v1969 = vld [vmem:[%s1 + $0x158] sm:$0xf]
      %v1970 = vld [vmem:[%s1 + $0x15c] sm:$0xf]
      %v1971 = vld [vmem:[%s1 + $0x160] sm:$0xf]
      %v1972 = vld [vmem:[%s1 + $0x164] sm:$0xf]
      %v1973 = vld [vmem:[%s1 + $0x168] sm:$0xf]
      %v1974 = vld [vmem:[%s1 + $0x16c] sm:$0xf]
      %v1975 = vld [vmem:[%s1 + $0x170] sm:$0xf]
      %v1976 = vld [vmem:[%s1 + $0x174] sm:$0xf]
      %v1977 = vld [vmem:[%s1 + $0x178] sm:$0xf]
      %v1978 = vld [vmem:[%s1 + $0x17c] sm:$0xf]
      %v1979 = vld [vmem:[%s1 + $0x180] sm:$0xf]
      %v1980 = vld [vmem:[%s1 + $0x184] sm:$0xf]
      %v1981 = vld [vmem:[%s1 + $0x188] sm:$0xf]
      %v1982 = vld [vmem:[%s1 + $0x18c] sm:$0xf]
      %v1983 = vld [vmem:[%s1 + $0x190] sm:$0xf]
      %v1984 = vld [vmem:[%s1 + $0x194] sm:$0xf]
      %v1985 = vld [vmem:[%s1 + $0x198] sm:$0xf]
      %v1986 = vld [vmem:[%s1 + $0x19c] sm:$0xf]
      %v1987 = vld [vmem:[%s1 + $0x1a0] sm:$0xf]
      %v1988 = vld [vmem:[%s1 + $0x1a4] sm:$0xf]
      %v1989 = vld [vmem:[%s1 + $0x1a8] sm:$0xf]
      %v1990 = vld [vmem:[%s1 + $0x1ac] sm:$0xf]
      %v1991 = vld [vmem:[%s1 + $0x1b0] sm:$0xf]
      %v1992 = vld [vmem:[%s1 + $0x1b4] sm:$0xf]
      %v1993 = vld [vmem:[%s1 + $0x1b8] sm:$0xf]
      %v1994 = vld [vmem:[%s1 + $0x1bc] sm:$0xf]
      %v1995 = vld [vmem:[%s1 + $0x1c0] sm:$0xf]
      %v1996 = vld [vmem:[%s1 + $0x1c4] sm:$0xf]
      %v1997 = vld [vmem:[%s1 + $0x1c8] sm:$0xf]
      %v1998 = vld [vmem:[%s1 + $0x1cc] sm:$0xf]
      %v1999 = vld [vmem:[%s1 + $0x1d0] sm:$0xf]
      %v2000 = vld [vmem:[%s1 + $0x1d4] sm:$0xf]
      %v2001 = vld [vmem:[%s1 + $0x1d8] sm:$0xf]
      %v2002 = vld [vmem:[%s1 + $0x1dc] sm:$0xf]
      %v2003 = vld [vmem:[%s1 + $0x1e0] sm:$0xf]
      %v2004 = vld [vmem:[%s1 + $0x1e4] sm:$0xf]
      %v2005 = vld [vmem:[%s1 + $0x1e8] sm:$0xf]
      %v2006 = vld [vmem:[%s1 + $0x1ec] sm:$0xf]
      %v2007 = vld [vmem:[%s1 + $0x1f0] sm:$0xf]
      %v2008 = vld [vmem:[%s1 + $0x1f4] sm:$0xf]
      %v2009 = vld [vmem:[%s1 + $0x1f8] sm:$0xf]
      %v2010 = vld [vmem:[%s1 + $0x1fc] sm:$0xf]
      %v2011 = vld [vmem:[%s1 + $0x200] sm:$0xf]
      %v2012 = vld [vmem:[%s1 + $0x204] sm:$0xf]
      %v2013 = vld [vmem:[%s1 + $0x208] sm:$0xf]
      %v2014 = vld [vmem:[%s1 + $0x20c] sm:$0xf]
      %v2015 = vld [vmem:[%s1 + $0x210] sm:$0xf]
      %v2016 = vld [vmem:[%s1 + $0x214] sm:$0xf]
      %v2017 = vld [vmem:[%s1 + $0x218] sm:$0xf]
      %v2018 = vld [vmem:[%s1 + $0x21c] sm:$0xf]
      %v2019 = vld [vmem:[%s1 + $0x220] sm:$0xf]
      %v2020 = vld [vmem:[%s1 + $0x224] sm:$0xf]
      %v2021 = vld [vmem:[%s1 + $0x228] sm:$0xf]
      %v2022 = vld [vmem:[%s1 + $0x22c] sm:$0xf]
      %v2023 = vld [vmem:[%s1 + $0x230] sm:$0xf]
      %v2024 = vld [vmem:[%s1 + $0x234] sm:$0xf]
      %v2025 = vld [vmem:[%s1 + $0x238] sm:$0xf]
      %v2026 = vld [vmem:[%s1 + $0x23c] sm:$0xf]
      %v2171 = vunpack.c.l.b16 %v1883
      %v2172 = vunpack.c.l.b16 %v1884
      %v2173 = vunpack.c.l.b16 %v1885
      %v2174 = vunpack.c.l.b16 %v1886
      %v2175 = vunpack.c.l.b16 %v1887
      %v2176 = vunpack.c.l.b16 %v1888
      %v2177 = vunpack.c.l.b16 %v1889
      %v2178 = vunpack.c.l.b16 %v1890
      %v2179 = vunpack.c.l.b16 %v1891
      %v2180 = vunpack.c.l.b16 %v1892
      %v2181 = vunpack.c.l.b16 %v1893
      %v2182 = vunpack.c.l.b16 %v1894
      %v2183 = vunpack.c.l.b16 %v1895
      %v2184 = vunpack.c.l.b16 %v1896
      %v2185 = vunpack.c.l.b16 %v1897
      %v2186 = vunpack.c.l.b16 %v1898
      %v2187 = vunpack.c.l.b16 %v1899
      %v2188 = vunpack.c.l.b16 %v1900
      %v2189 = vunpack.c.l.b16 %v1901
      %v2190 = vunpack.c.l.b16 %v1902
      %v2191 = vunpack.c.l.b16 %v1903
      %v2192 = vunpack.c.l.b16 %v1904
      %v2193 = vunpack.c.l.b16 %v1905
      %v2194 = vunpack.c.l.b16 %v1906
      %v2195 = vunpack.c.l.b16 %v1907
      %v2196 = vunpack.c.l.b16 %v1908
      %v2197 = vunpack.c.l.b16 %v1909
      %v2198 = vunpack.c.l.b16 %v1910
      %v2199 = vunpack.c.l.b16 %v1911
      %v2200 = vunpack.c.l.b16 %v1912
      %v2201 = vunpack.c.l.b16 %v1913
      %v2202 = vunpack.c.l.b16 %v1914
      %v2203 = vunpack.c.l.b16 %v1915
      %v2204 = vunpack.c.l.b16 %v1916
      %v2205 = vunpack.c.l.b16 %v1917
      %v2206 = vunpack.c.l.b16 %v1918
      %v2207 = vunpack.c.l.b16 %v1919
      %v2208 = vunpack.c.l.b16 %v1920
      %v2209 = vunpack.c.l.b16 %v1921
      %v2210 = vunpack.c.l.b16 %v1922
      %v2211 = vunpack.c.l.b16 %v1923
      %v2212 = vunpack.c.l.b16 %v1924
      %v2213 = vunpack.c.l.b16 %v1925
      %v2214 = vunpack.c.l.b16 %v1926
      %v2215 = vunpack.c.l.b16 %v1927
      %v2216 = vunpack.c.l.b16 %v1928
      %v2217 = vunpack.c.l.b16 %v1929
      %v2218 = vunpack.c.l.b16 %v1930
      %v2219 = vunpack.c.l.b16 %v1931
      %v2220 = vunpack.c.l.b16 %v1932
      %v2221 = vunpack.c.l.b16 %v1933
      %v2222 = vunpack.c.l.b16 %v1934
      %v2223 = vunpack.c.l.b16 %v1935
      %v2224 = vunpack.c.l.b16 %v1936
      %v2225 = vunpack.c.l.b16 %v1937
      %v2226 = vunpack.c.l.b16 %v1938
      %v2227 = vunpack.c.l.b16 %v1939
      %v2228 = vunpack.c.l.b16 %v1940
      %v2229 = vunpack.c.l.b16 %v1941
      %v2230 = vunpack.c.l.b16 %v1942
      %v2231 = vunpack.c.l.b16 %v1943
      %v2232 = vunpack.c.l.b16 %v1944
      %v2233 = vunpack.c.l.b16 %v1945
      %v2234 = vunpack.c.l.b16 %v1946
      %v2235 = vunpack.c.l.b16 %v1947
      %v2236 = vunpack.c.l.b16 %v1948
      %v2237 = vunpack.c.l.b16 %v1949
      %v2238 = vunpack.c.l.b16 %v1950
      %v2239 = vunpack.c.l.b16 %v1951
      %v2240 = vunpack.c.l.b16 %v1952
      %v2241 = vunpack.c.l.b16 %v1953
      %v2242 = vunpack.c.l.b16 %v1954
      %v2243 = vunpack.c.l.b16 %v1955
      %v2244 = vunpack.c.l.b16 %v1956
      %v2245 = vunpack.c.l.b16 %v1957
      %v2246 = vunpack.c.l.b16 %v1958
      %v2247 = vunpack.c.l.b16 %v1959
      %v2248 = vunpack.c.l.b16 %v1960
      %v2249 = vunpack.c.l.b16 %v1961
      %v2250 = vunpack.c.l.b16 %v1962
      %v2251 = vunpack.c.l.b16 %v1963
      %v2252 = vunpack.c.l.b16 %v1964
      %v2253 = vunpack.c.l.b16 %v1965
      %v2254 = vunpack.c.l.b16 %v1966
      %v2255 = vunpack.c.l.b16 %v1967
      %v2256 = vunpack.c.l.b16 %v1968
      %v2257 = vunpack.c.l.b16 %v1969
      %v2258 = vunpack.c.l.b16 %v1970
      %v2259 = vunpack.c.l.b16 %v1971
      %v2260 = vunpack.c.l.b16 %v1972
      %v2261 = vunpack.c.l.b16 %v1973
      %v2262 = vunpack.c.l.b16 %v1974
      %v2263 = vunpack.c.l.b16 %v1975
      %v2264 = vunpack.c.l.b16 %v1976
      %v2265 = vunpack.c.l.b16 %v1977
      %v2266 = vunpack.c.l.b16 %v1978
      %v2267 = vunpack.c.l.b16 %v1979
      %v2268 = vunpack.c.l.b16 %v1980
      %v2269 = vunpack.c.l.b16 %v1981
      %v2270 = vunpack.c.l.b16 %v1982
      %v2271 = vunpack.c.l.b16 %v1983
      %v2272 = vunpack.c.l.b16 %v1984
      %v2273 = vunpack.c.l.b16 %v1985
      %v2274 = vunpack.c.l.b16 %v1986
      %v2275 = vunpack.c.l.b16 %v1987
      %v2276 = vunpack.c.l.b16 %v1988
      %v2277 = vunpack.c.l.b16 %v1989
      %v2278 = vunpack.c.l.b16 %v1990
      %v2279 = vunpack.c.l.b16 %v1991
      %v2280 = vunpack.c.l.b16 %v1992
      %v2281 = vunpack.c.l.b16 %v1993
      %v2282 = vunpack.c.l.b16 %v1994
      %v2283 = vunpack.c.l.b16 %v1995
      %v2284 = vunpack.c.l.b16 %v1996
      %v2285 = vunpack.c.l.b16 %v1997
      %v2286 = vunpack.c.l.b16 %v1998
      %v2287 = vunpack.c.l.b16 %v1999
      %v2288 = vunpack.c.l.b16 %v2000
      %v2289 = vunpack.c.l.b16 %v2001
      %v2290 = vunpack.c.l.b16 %v2002
      %v2291 = vunpack.c.l.b16 %v2003
      %v2292 = vunpack.c.l.b16 %v2004
      %v2293 = vunpack.c.l.b16 %v2005
      %v2294 = vunpack.c.l.b16 %v2006
      %v2295 = vunpack.c.l.b16 %v2007
      %v2296 = vunpack.c.l.b16 %v2008
      %v2297 = vunpack.c.l.b16 %v2009
      %v2298 = vunpack.c.l.b16 %v2010
      %v2299 = vunpack.c.l.b16 %v2011
      %v2300 = vunpack.c.l.b16 %v2012
      %v2301 = vunpack.c.l.b16 %v2013
      %v2302 = vunpack.c.l.b16 %v2014
      %v2303 = vunpack.c.l.b16 %v2015
      %v2304 = vunpack.c.l.b16 %v2016
      %v2305 = vunpack.c.l.b16 %v2017
      %v2306 = vunpack.c.l.b16 %v2018
      %v2307 = vunpack.c.l.b16 %v2019
      %v2308 = vunpack.c.l.b16 %v2020
      %v2309 = vunpack.c.l.b16 %v2021
      %v2310 = vunpack.c.l.b16 %v2022
      %v2311 = vunpack.c.l.b16 %v2023
      %v2312 = vunpack.c.l.b16 %v2024
      %v2313 = vunpack.c.l.b16 %v2025
      %v2314 = vunpack.c.l.b16 %v2026
      %v2315 = vpack.c.b16 %v2172, %v2171
      %v2316 = vpack.c.b16 %v2174, %v2173
      %v2317 = vpack.c.b16 %v2176, %v2175
      %v2318 = vpack.c.b16 %v2178, %v2177
      %v2319 = vpack.c.b16 %v2180, %v2179
      %v2320 = vpack.c.b16 %v2182, %v2181
      %v2321 = vpack.c.b16 %v2184, %v2183
      %v2322 = vpack.c.b16 %v2186, %v2185
      %v2323 = vpack.c.b16 %v2188, %v2187
      %v2324 = vpack.c.b16 %v2190, %v2189
      %v2325 = vpack.c.b16 %v2192, %v2191
      %v2326 = vpack.c.b16 %v2194, %v2193
      %v2327 = vpack.c.b16 %v2196, %v2195
      %v2328 = vpack.c.b16 %v2198, %v2197
      %v2329 = vpack.c.b16 %v2200, %v2199
      %v2330 = vpack.c.b16 %v2202, %v2201
      %v2331 = vpack.c.b16 %v2204, %v2203
      %v2332 = vpack.c.b16 %v2206, %v2205
      %v2333 = vpack.c.b16 %v2208, %v2207
      %v2334 = vpack.c.b16 %v2210, %v2209
      %v2335 = vpack.c.b16 %v2212, %v2211
      %v2336 = vpack.c.b16 %v2214, %v2213
      %v2337 = vpack.c.b16 %v2216, %v2215
      %v2338 = vpack.c.b16 %v2218, %v2217
      %v2339 = vpack.c.b16 %v2220, %v2219
      %v2340 = vpack.c.b16 %v2222, %v2221
      %v2341 = vpack.c.b16 %v2224, %v2223
      %v2342 = vpack.c.b16 %v2226, %v2225
      %v2343 = vpack.c.b16 %v2228, %v2227
      %v2344 = vpack.c.b16 %v2230, %v2229
      %v2345 = vpack.c.b16 %v2232, %v2231
      %v2346 = vpack.c.b16 %v2234, %v2233
      %v2347 = vpack.c.b16 %v2236, %v2235
      %v2348 = vpack.c.b16 %v2238, %v2237
      %v2349 = vpack.c.b16 %v2240, %v2239
      %v2350 = vpack.c.b16 %v2242, %v2241
      %v2351 = vpack.c.b16 %v2244, %v2243
      %v2352 = vpack.c.b16 %v2246, %v2245
      %v2353 = vpack.c.b16 %v2248, %v2247
      %v2354 = vpack.c.b16 %v2250, %v2249
      %v2355 = vpack.c.b16 %v2252, %v2251
      %v2356 = vpack.c.b16 %v2254, %v2253
      %v2357 = vpack.c.b16 %v2256, %v2255
      %v2358 = vpack.c.b16 %v2258, %v2257
      %v2359 = vpack.c.b16 %v2260, %v2259
      %v2360 = vpack.c.b16 %v2262, %v2261
      %v2361 = vpack.c.b16 %v2264, %v2263
      %v2362 = vpack.c.b16 %v2266, %v2265
      %v2363 = vpack.c.b16 %v2268, %v2267
      %v2364 = vpack.c.b16 %v2270, %v2269
      %v2365 = vpack.c.b16 %v2272, %v2271
      %v2366 = vpack.c.b16 %v2274, %v2273
      %v2367 = vpack.c.b16 %v2276, %v2275
      %v2368 = vpack.c.b16 %v2278, %v2277
      %v2369 = vpack.c.b16 %v2280, %v2279
      %v2370 = vpack.c.b16 %v2282, %v2281
      %v2371 = vpack.c.b16 %v2284, %v2283
      %v2372 = vpack.c.b16 %v2286, %v2285
      %v2373 = vpack.c.b16 %v2288, %v2287
      %v2374 = vpack.c.b16 %v2290, %v2289
      %v2375 = vpack.c.b16 %v2292, %v2291
      %v2376 = vpack.c.b16 %v2294, %v2293
      %v2377 = vpack.c.b16 %v2296, %v2295
      %v2378 = vpack.c.b16 %v2298, %v2297
      %v2379 = vpack.c.b16 %v2300, %v2299
      %v2380 = vpack.c.b16 %v2302, %v2301
      %v2381 = vpack.c.b16 %v2304, %v2303
      %v2382 = vpack.c.b16 %v2306, %v2305
      %v2383 = vpack.c.b16 %v2308, %v2307
      %v2384 = vpack.c.b16 %v2310, %v2309
      %v2385 = vpack.c.b16 %v2312, %v2311
      %v2386 = vpack.c.b16 %v2314, %v2313
      %2459 = vmatprep.subr.bf16.mxu0 0
      %2460 = vmatpush1.bf16.msra.mxu0 %v2315
      %2461 = vmatprep.subr.bf16.mxu0 0
      %2462 = vmatpush1.bf16.msra.mxu0 %v2316
      %2463 = vmatprep.subr.bf16.mxu0 0
      %2464 = vmatpush1.bf16.msra.mxu0 %v2317
      %2465 = vmatprep.subr.bf16.mxu0 0
      %2466 = vmatpush1.bf16.msra.mxu0 %v2318
      %2467 = vmatprep.subr.bf16.mxu0 0
      %2468 = vmatpush1.bf16.msra.mxu0 %v2319
      %2469 = vmatprep.subr.bf16.mxu0 0
      %2470 = vmatpush1.bf16.msra.mxu0 %v2320
      %2471 = vmatprep.subr.bf16.mxu0 0
      %2472 = vmatpush1.bf16.msra.mxu0 %v2321
      %2473 = vmatprep.subr.bf16.mxu0 0
      %2474 = vmatpush1.bf16.msra.mxu0 %v2322
      %2475 = vmatprep.subr.bf16.mxu0 0
      %2476 = vmatpush1.bf16.msra.mxu0 %v2323
      %2477 = vmatprep.subr.bf16.mxu0 0
      %2478 = vmatpush1.bf16.msra.mxu0 %v2324
      %2479 = vmatprep.subr.bf16.mxu0 0
      %2480 = vmatpush1.bf16.msra.mxu0 %v2325
      %2481 = vmatprep.subr.bf16.mxu0 0
      %2482 = vmatpush1.bf16.msra.mxu0 %v2326
      %2483 = vmatprep.subr.bf16.mxu0 0
      %2484 = vmatpush1.bf16.msra.mxu0 %v2327
      %2485 = vmatprep.subr.bf16.mxu0 0
      %2486 = vmatpush1.bf16.msra.mxu0 %v2328
      %2487 = vmatprep.subr.bf16.mxu0 0
      %2488 = vmatpush1.bf16.msra.mxu0 %v2329
      %2489 = vmatprep.subr.bf16.mxu0 0
      %2490 = vmatpush1.bf16.msra.mxu0 %v2330
      %2491 = vmatprep.mubr.bf16.mxu0 %v1812
      %2492 = vmatmul.mubr.bf16.gmra.mrb[0].mxu0 %v1811
      %v2493 = vpop.f32.mrb[0].mxu0
      %v2494 = vadd.f32 0.0, %v2493
      %v2495 = vpop.f32.mrb[0].mxu0
      %v2496 = vpop.f32.mrb[0].mxu0
      %v2497 = vadd.f32 0.0, %v2496
      %v2498 = vpop.f32.mrb[0].mxu0
      %2499 = vmatprep.mubr.bf16.mxu0 %v1821
      %2500 = vmatmul.mubr.bf16.gmra.mrb[0].mxu0 %v1820
      %v2501 = vpop.f32.mrb[0].mxu0
      %v2502 = vadd.f32 0.0, %v2501
      %v2503 = vpop.f32.mrb[0].mxu0
      %v2504 = vpop.f32.mrb[0].mxu0
      %v2505 = vadd.f32 0.0, %v2504
      %v2506 = vpop.f32.mrb[0].mxu0
      %2507 = vmatprep.mubr.bf16.mxu0 %v1830
      %2508 = vmatmul.mubr.bf16.gmra.mrb[0].mxu0 %v1829
      %v2509 = vpop.f32.mrb[0].mxu0
      %v2510 = vadd.f32 0.0, %v2509
      %v2511 = vpop.f32.mrb[0].mxu0
      %v2512 = vpop.f32.mrb[0].mxu0
      %v2513 = vadd.f32 0.0, %v2512
      %v2514 = vpop.f32.mrb[0].mxu0
      %2515 = vmatprep.mubr.bf16.mxu0 %v1839
      %2516 = vmatmul.mubr.bf16.gmra.mrb[0].mxu0 %v1838
      %v2517 = vpop.f32.mrb[0].mxu0
      %v2518 = vadd.f32 0.0, %v2517
      %v2519 = vpop.f32.mrb[0].mxu0
      %v2520 = vpop.f32.mrb[0].mxu0
      %v2521 = vadd.f32 0.0, %v2520
      %v2522 = vpop.f32.mrb[0].mxu0
      %2523 = vmatprep.mubr.bf16.mxu0 %v1848
      %2524 = vmatmul.mubr.bf16.gmra.mrb[0].mxu0 %v1847
      %v2525 = vpop.f32.mrb[0].mxu0
      %v2526 = vadd.f32 0.0, %v2525
      %v2527 = vpop.f32.mrb[0].mxu0
      %v2528 = vpop.f32.mrb[0].mxu0
      %v2529 = vadd.f32 0.0, %v2528
      %v2530 = vpop.f32.mrb[0].mxu0
      %2531 = vmatprep.mubr.bf16.mxu0 %v1857
      %2532 = vmatmul.mubr.bf16.gmra.mrb[0].mxu0 %v1856
      %v2533 = vpop.f32.mrb[0].mxu0
      %v2534 = vadd.f32 0.0, %v2533
      %v2535 = vpop.f32.mrb[0].mxu0
      %v2536 = vpop.f32.mrb[0].mxu0
      %v2537 = vadd.f32 0.0, %v2536
      %v2538 = vpop.f32.mrb[0].mxu0
      %2539 = vmatprep.mubr.bf16.mxu0 %v1866
      %2540 = vmatmul.mubr.bf16.gmra.mrb[0].mxu0 %v1865
      %v2541 = vpop.f32.mrb[0].mxu0
      %v2542 = vadd.f32 0.0, %v2541
      %v2543 = vpop.f32.mrb[0].mxu0
      %v2544 = vpop.f32.mrb[0].mxu0
      %v2545 = vadd.f32 0.0, %v2544
      %v2546 = vpop.f32.mrb[0].mxu0
      %2547 = vmatprep.mubr.bf16.mxu0 %v1875
      %2548 = vmatmul.mubr.bf16.gmra.mrb[0].mxu0 %v1874
      %v2549 = vpop.f32.mrb[0].mxu0
      %v2550 = vadd.f32 0.0, %v2549
      %v2551 = vpop.f32.mrb[0].mxu0
      %v2552 = vpop.f32.mrb[0].mxu0
      %v2553 = vadd.f32 0.0, %v2552
      %v2554 = vpop.f32.mrb[0].mxu0
      %2555 = vdwg.mxu0
      %2556 = vmatprep.subr.bf16.mxu0 0
      %2557 = vmatpush1.bf16.msra.mxu0 %v2331
      %2558 = vmatprep.subr.bf16.mxu0 0
      %2559 = vmatpush1.bf16.msra.mxu0 %v2332
      %2560 = vmatprep.subr.bf16.mxu0 0
      %2561 = vmatpush1.bf16.msra.mxu0 %v2333
      %2562 = vmatprep.subr.bf16.mxu0 0
      %2563 = vmatpush1.bf16.msra.mxu0 %v2334
      %2564 = vmatprep.subr.bf16.mxu0 0
      %2565 = vmatpush1.bf16.msra.mxu0 %v2335
      %2566 = vmatprep.subr.bf16.mxu0 0
      %2567 = vmatpush1.bf16.msra.mxu0 %v2336
      %2568 = vmatprep.subr.bf16.mxu0 0
      %2569 = vmatpush1.bf16.msra.mxu0 %v2337
      %2570 = vmatprep.subr.bf16.mxu0 0
      %2571 = vmatpush1.bf16.msra.mxu0 %v2338
      %2572 = vmatprep.subr.bf16.mxu0 0
      %2573 = vmatpush1.bf16.msra.mxu0 %v2339
      %2574 = vmatprep.subr.bf16.mxu0 0
      %2575 = vmatpush1.bf16.msra.mxu0 %v2340
      %2576 = vmatprep.subr.bf16.mxu0 0
      %2577 = vmatpush1.bf16.msra.mxu0 %v2341
      %2578 = vmatprep.subr.bf16.mxu0 0
      %2579 = vmatpush1.bf16.msra.mxu0 %v2342
      %2580 = vmatprep.subr.bf16.mxu0 0
      %2581 = vmatpush1.bf16.msra.mxu0 %v2343
      %2582 = vmatprep.subr.bf16.mxu0 0
      %2583 = vmatpush1.bf16.msra.mxu0 %v2344
      %2584 = vmatprep.subr.bf16.mxu0 0
      %2585 = vmatpush1.bf16.msra.mxu0 %v2345
      %2586 = vmatprep.subr.bf16.mxu0 0
      %2587 = vmatpush1.bf16.msra.mxu0 %v2346
      %2588 = vmatprep.mubr.bf16.mxu0 %v1814
      %2589 = vmatmul.mubr.bf16.gmra.mrb[0].mxu0 %v1813
      %v2590 = vpop.f32.mrb[0].mxu0
      %v2591 = vadd.f32 %v2494, %v2590
      %v2592 = vpop.f32.mrb[0].mxu0
      %v2593 = vpop.f32.mrb[0].mxu0
      %v2594 = vadd.f32 %v2497, %v2593
      %v2595 = vpop.f32.mrb[0].mxu0
      %2596 = vmatprep.mubr.bf16.mxu0 %v1823
      %2597 = vmatmul.mubr.bf16.gmra.mrb[0].mxu0 %v1822
      %v2598 = vpop.f32.mrb[0].mxu0
      %v2599 = vadd.f32 %v2502, %v2598
      %v2600 = vpop.f32.mrb[0].mxu0
      %v2601 = vpop.f32.mrb[0].mxu0
      %v2602 = vadd.f32 %v2505, %v2601
      %v2603 = vpop.f32.mrb[0].mxu0
      %2604 = vmatprep.mubr.bf16.mxu0 %v1832
      %2605 = vmatmul.mubr.bf16.gmra.mrb[0].mxu0 %v1831
      %v2606 = vpop.f32.mrb[0].mxu0
      %v2607 = vadd.f32 %v2510, %v2606
      %v2608 = vpop.f32.mrb[0].mxu0
      %v2609 = vpop.f32.mrb[0].mxu0
      %v2610 = vadd.f32 %v2513, %v2609
      %v2611 = vpop.f32.mrb[0].mxu0
      %2612 = vmatprep.mubr.bf16.mxu0 %v1841
      %2613 = vmatmul.mubr.bf16.gmra.mrb[0].mxu0 %v1840
      %v2614 = vpop.f32.mrb[0].mxu0
      %v2615 = vadd.f32 %v2518, %v2614
      %v2616 = vpop.f32.mrb[0].mxu0
      %v2617 = vpop.f32.mrb[0].mxu0
      %v2618 = vadd.f32 %v2521, %v2617
      %v2619 = vpop.f32.mrb[0].mxu0
      %2620 = vmatprep.mubr.bf16.mxu0 %v1850
      %2621 = vmatmul.mubr.bf16.gmra.mrb[0].mxu0 %v1849
      %v2622 = vpop.f32.mrb[0].mxu0
      %v2623 = vadd.f32 %v2526, %v2622
      %v2624 = vpop.f32.mrb[0].mxu0
      %v2625 = vpop.f32.mrb[0].mxu0
      %v2626 = vadd.f32 %v2529, %v2625
      %v2627 = vpop.f32.mrb[0].mxu0
      %2628 = vmatprep.mubr.bf16.mxu0 %v1859
      %2629 = vmatmul.mubr.bf16.gmra.mrb[0].mxu0 %v1858
      %v2630 = vpop.f32.mrb[0].mxu0
      %v2631 = vadd.f32 %v2534, %v2630
      %v2632 = vpop.f32.mrb[0].mxu0
      %v2633 = vpop.f32.mrb[0].mxu0
      %v2634 = vadd.f32 %v2537, %v2633
      %v2635 = vpop.f32.mrb[0].mxu0
      %2636 = vmatprep.mubr.bf16.mxu0 %v1868
      %2637 = vmatmul.mubr.bf16.gmra.mrb[0].mxu0 %v1867
      %v2638 = vpop.f32.mrb[0].mxu0
      %v2639 = vadd.f32 %v2542, %v2638
      %v2640 = vpop.f32.mrb[0].mxu0
      %v2641 = vpop.f32.mrb[0].mxu0
      %v2642 = vadd.f32 %v2545, %v2641
      %v2643 = vpop.f32.mrb[0].mxu0
      %2644 = vmatprep.mubr.bf16.mxu0 %v1877
      %2645 = vmatmul.mubr.bf16.gmra.mrb[0].mxu0 %v1876
      %v2646 = vpop.f32.mrb[0].mxu0
      %v2647 = vadd.f32 %v2550, %v2646
      %v2648 = vpop.f32.mrb[0].mxu0
      %v2649 = vpop.f32.mrb[0].mxu0
      %v2650 = vadd.f32 %v2553, %v2649
      %v2651 = vpop.f32.mrb[0].mxu0
      %2652 = vdwg.mxu0
      %2653 = vmatprep.subr.bf16.mxu0 0
      %2654 = vmatpush1.bf16.msra.mxu0 %v2347
      %2655 = vmatprep.subr.bf16.mxu0 0
      %2656 = vmatpush1.bf16.msra.mxu0 %v2348
      %2657 = vmatprep.subr.bf16.mxu0 0
      %2658 = vmatpush1.bf16.msra.mxu0 %v2349
      %2659 = vmatprep.subr.bf16.mxu0 0
      %2660 = vmatpush1.bf16.msra.mxu0 %v2350
      %2661 = vmatprep.subr.bf16.mxu0 0
      %2662 = vmatpush1.bf16.msra.mxu0 %v2351
      %2663 = vmatprep.subr.bf16.mxu0 0
      %2664 = vmatpush1.bf16.msra.mxu0 %v2352
      %2665 = vmatprep.subr.bf16.mxu0 0
      %2666 = vmatpush1.bf16.msra.mxu0 %v2353
      %2667 = vmatprep.subr.bf16.mxu0 0
      %2668 = vmatpush1.bf16.msra.mxu0 %v2354
      %2669 = vmatprep.subr.bf16.mxu0 0
      %2670 = vmatpush1.bf16.msra.mxu0 %v2355
      %2671 = vmatprep.subr.bf16.mxu0 0
      %2672 = vmatpush1.bf16.msra.mxu0 %v2356
      %2673 = vmatprep.subr.bf16.mxu0 0
      %2674 = vmatpush1.bf16.msra.mxu0 %v2357
      %2675 = vmatprep.subr.bf16.mxu0 0
      %2676 = vmatpush1.bf16.msra.mxu0 %v2358
      %2677 = vmatprep.subr.bf16.mxu0 0
      %2678 = vmatpush1.bf16.msra.mxu0 %v2359
      %2679 = vmatprep.subr.bf16.mxu0 0
      %2680 = vmatpush1.bf16.msra.mxu0 %v2360
      %2681 = vmatprep.subr.bf16.mxu0 0
      %2682 = vmatpush1.bf16.msra.mxu0 %v2361
      %2683 = vmatprep.subr.bf16.mxu0 0
      %2684 = vmatpush1.bf16.msra.mxu0 %v2362
      %2685 = vmatprep.mubr.bf16.mxu0 %v1816
      %2686 = vmatmul.mubr.bf16.gmra.mrb[0].mxu0 %v1815
      %v2687 = vpop.f32.mrb[0].mxu0
      %v2688 = vadd.f32 %v2591, %v2687
      %v2689 = vpop.f32.mrb[0].mxu0
      %v2690 = vpop.f32.mrb[0].mxu0
      %v2691 = vadd.f32 %v2594, %v2690
      %v2692 = vpop.f32.mrb[0].mxu0
      %2693 = vmatprep.mubr.bf16.mxu0 %v1825
      %2694 = vmatmul.mubr.bf16.gmra.mrb[0].mxu0 %v1824
      %v2695 = vpop.f32.mrb[0].mxu0
      %v2696 = vadd.f32 %v2599, %v2695
      %v2697 = vpop.f32.mrb[0].mxu0
      %v2698 = vpop.f32.mrb[0].mxu0
      %v2699 = vadd.f32 %v2602, %v2698
      %v2700 = vpop.f32.mrb[0].mxu0
      %2701 = vmatprep.mubr.bf16.mxu0 %v1834
      %2702 = vmatmul.mubr.bf16.gmra.mrb[0].mxu0 %v1833
      %v2703 = vpop.f32.mrb[0].mxu0
      %v2704 = vadd.f32 %v2607, %v2703
      %v2705 = vpop.f32.mrb[0].mxu0
      %v2706 = vpop.f32.mrb[0].mxu0
      %v2707 = vadd.f32 %v2610, %v2706
      %v2708 = vpop.f32.mrb[0].mxu0
      %2709 = vmatprep.mubr.bf16.mxu0 %v1843
      %2710 = vmatmul.mubr.bf16.gmra.mrb[0].mxu0 %v1842
      %v2711 = vpop.f32.mrb[0].mxu0
      %v2712 = vadd.f32 %v2615, %v2711
      %v2713 = vpop.f32.mrb[0].mxu0
      %v2714 = vpop.f32.mrb[0].mxu0
      %v2715 = vadd.f32 %v2618, %v2714
      %v2716 = vpop.f32.mrb[0].mxu0
      %2717 = vmatprep.mubr.bf16.mxu0 %v1852
      %2718 = vmatmul.mubr.bf16.gmra.mrb[0].mxu0 %v1851
      %v2719 = vpop.f32.mrb[0].mxu0
      %v2720 = vadd.f32 %v2623, %v2719
      %v2721 = vpop.f32.mrb[0].mxu0
      %v2722 = vpop.f32.mrb[0].mxu0
      %v2723 = vadd.f32 %v2626, %v2722
      %v2724 = vpop.f32.mrb[0].mxu0
      %2725 = vmatprep.mubr.bf16.mxu0 %v1861
      %2726 = vmatmul.mubr.bf16.gmra.mrb[0].mxu0 %v1860
      %v2727 = vpop.f32.mrb[0].mxu0
      %v2728 = vadd.f32 %v2631, %v2727
      %v2729 = vpop.f32.mrb[0].mxu0
      %v2730 = vpop.f32.mrb[0].mxu0
      %v2731 = vadd.f32 %v2634, %v2730
      %v2732 = vpop.f32.mrb[0].mxu0
      %2733 = vmatprep.mubr.bf16.mxu0 %v1870
      %2734 = vmatmul.mubr.bf16.gmra.mrb[0].mxu0 %v1869
      %v2735 = vpop.f32.mrb[0].mxu0
      %v2736 = vadd.f32 %v2639, %v2735
      %v2737 = vpop.f32.mrb[0].mxu0
      %v2738 = vpop.f32.mrb[0].mxu0
      %v2739 = vadd.f32 %v2642, %v2738
      %v2740 = vpop.f32.mrb[0].mxu0
      %2741 = vmatprep.mubr.bf16.mxu0 %v1879
      %2742 = vmatmul.mubr.bf16.gmra.mrb[0].mxu0 %v1878
      %v2743 = vpop.f32.mrb[0].mxu0
      %v2744 = vadd.f32 %v2647, %v2743
      %v2745 = vpop.f32.mrb[0].mxu0
      %v2746 = vpop.f32.mrb[0].mxu0
      %v2747 = vadd.f32 %v2650, %v2746
      %v2748 = vpop.f32.mrb[0].mxu0
      %2749 = vdwg.mxu0
      %2750 = vmatprep.subr.bf16.mxu0 0
      %2751 = vmatpush1.bf16.msra.mxu0 %v2363
      %2752 = vmatprep.subr.bf16.mxu0 0
      %2753 = vmatpush1.bf16.msra.mxu0 %v2364
      %2754 = vmatprep.subr.bf16.mxu0 0
      %2755 = vmatpush1.bf16.msra.mxu0 %v2365
      %2756 = vmatprep.subr.bf16.mxu0 0
      %2757 = vmatpush1.bf16.msra.mxu0 %v2366
      %2758 = vmatprep.subr.bf16.mxu0 0
      %2759 = vmatpush1.bf16.msra.mxu0 %v2367
      %2760 = vmatprep.subr.bf16.mxu0 0
      %2761 = vmatpush1.bf16.msra.mxu0 %v2368
      %2762 = vmatprep.subr.bf16.mxu0 0
      %2763 = vmatpush1.bf16.msra.mxu0 %v2369
      %2764 = vmatprep.subr.bf16.mxu0 0
      %2765 = vmatpush1.bf16.msra.mxu0 %v2370
      %2766 = vmatprep.subr.bf16.mxu0 0
      %2767 = vmatpush1.bf16.msra.mxu0 %v2371
      %2768 = vmatprep.subr.bf16.mxu0 0
      %2769 = vmatpush1.bf16.msra.mxu0 %v2372
      %2770 = vmatprep.subr.bf16.mxu0 0
      %2771 = vmatpush1.bf16.msra.mxu0 %v2373
      %2772 = vmatprep.subr.bf16.mxu0 0
      %2773 = vmatpush1.bf16.msra.mxu0 %v2374
      %2774 = vmatprep.subr.bf16.mxu0 0
      %2775 = vmatpush1.bf16.msra.mxu0 %v2375
      %2776 = vmatprep.subr.bf16.mxu0 0
      %2777 = vmatpush1.bf16.msra.mxu0 %v2376
      %2778 = vmatprep.subr.bf16.mxu0 0
      %2779 = vmatpush1.bf16.msra.mxu0 %v2377
      %2780 = vmatprep.subr.bf16.mxu0 0
      %2781 = vmatpush1.bf16.msra.mxu0 %v2378
      %2782 = vmatprep.mubr.bf16.mxu0 %v1818
      %2783 = vmatmul.mubr.bf16.gmra.mrb[0].mxu0 %v1817
      %v2784 = vpop.f32.mrb[0].mxu0
      %v2785 = vadd.f32 %v2688, %v2784
      %v2786 = vpop.f32.mrb[0].mxu0
      %v2787 = vpop.f32.mrb[0].mxu0
      %v2788 = vadd.f32 %v2691, %v2787
      %v2789 = vpop.f32.mrb[0].mxu0
      %2790 = vmatprep.mubr.bf16.mxu0 %v1827
      %2791 = vmatmul.mubr.bf16.gmra.mrb[0].mxu0 %v1826
      %v2792 = vpop.f32.mrb[0].mxu0
      %v2793 = vadd.f32 %v2696, %v2792
      %v2794 = vpop.f32.mrb[0].mxu0
      %v2795 = vpop.f32.mrb[0].mxu0
      %v2796 = vadd.f32 %v2699, %v2795
      %v2797 = vpop.f32.mrb[0].mxu0
      %2798 = vmatprep.mubr.bf16.mxu0 %v1836
      %2799 = vmatmul.mubr.bf16.gmra.mrb[0].mxu0 %v1835
      %v2800 = vpop.f32.mrb[0].mxu0
      %v2801 = vadd.f32 %v2704, %v2800
      %v2802 = vpop.f32.mrb[0].mxu0
      %v2803 = vpop.f32.mrb[0].mxu0
      %v2804 = vadd.f32 %v2707, %v2803
      %v2805 = vpop.f32.mrb[0].mxu0
      %2806 = vmatprep.mubr.bf16.mxu0 %v1845
      %2807 = vmatmul.mubr.bf16.gmra.mrb[0].mxu0 %v1844
      %v2808 = vpop.f32.mrb[0].mxu0
      %v2809 = vadd.f32 %v2712, %v2808
      %v2810 = vpop.f32.mrb[0].mxu0
      %v2811 = vpop.f32.mrb[0].mxu0
      %v2812 = vadd.f32 %v2715, %v2811
      %v2813 = vpop.f32.mrb[0].mxu0
      %2814 = vmatprep.mubr.bf16.mxu0 %v1854
      %2815 = vmatmul.mubr.bf16.gmra.mrb[0].mxu0 %v1853
      %v2816 = vpop.f32.mrb[0].mxu0
      %v2817 = vadd.f32 %v2720, %v2816
      %v2818 = vpop.f32.mrb[0].mxu0
      %v2819 = vpop.f32.mrb[0].mxu0
      %v2820 = vadd.f32 %v2723, %v2819
      %v2821 = vpop.f32.mrb[0].mxu0
      %2822 = vmatprep.mubr.bf16.mxu0 %v1863
      %2823 = vmatmul.mubr.bf16.gmra.mrb[0].mxu0 %v1862
      %v2824 = vpop.f32.mrb[0].mxu0
      %v2825 = vadd.f32 %v2728, %v2824
      %v2826 = vpop.f32.mrb[0].mxu0
      %v2827 = vpop.f32.mrb[0].mxu0
      %v2828 = vadd.f32 %v2731, %v2827
      %v2829 = vpop.f32.mrb[0].mxu0
      %2830 = vmatprep.mubr.bf16.mxu0 %v1872
      %2831 = vmatmul.mubr.bf16.gmra.mrb[0].mxu0 %v1871
      %v2832 = vpop.f32.mrb[0].mxu0
      %v2833 = vadd.f32 %v2736, %v2832
      %v2834 = vpop.f32.mrb[0].mxu0
      %v2835 = vpop.f32.mrb[0].mxu0
      %v2836 = vadd.f32 %v2739, %v2835
      %v2837 = vpop.f32.mrb[0].mxu0
      %2838 = vmatprep.mubr.bf16.mxu0 %v1881
      %2839 = vmatmul.mubr.bf16.gmra.mrb[0].mxu0 %v1880
      %v2840 = vpop.f32.mrb[0].mxu0
      %v2841 = vadd.f32 %v2744, %v2840
      %v2842 = vpop.f32.mrb[0].mxu0
      %v2843 = vpop.f32.mrb[0].mxu0
      %v2844 = vadd.f32 %v2747, %v2843
      %v2845 = vpop.f32.mrb[0].mxu0
      %2846 = vdwg.mxu0
      %2847 = vmatprep.subr.bf16.mxu0 0
      %2848 = vmatpush1.bf16.msra.mxu0 %v2379
      %2849 = vmatprep.subr.bf16.mxu0 0
      %2850 = vmatpush1.bf16.msra.mxu0 %v2380
      %2851 = vmatprep.subr.bf16.mxu0 0
      %2852 = vmatpush1.bf16.msra.mxu0 %v2381
      %2853 = vmatprep.subr.bf16.mxu0 0
      %2854 = vmatpush1.bf16.msra.mxu0 %v2382
      %2855 = vmatprep.subr.bf16.mxu0 0
      %2856 = vmatpush1.bf16.msra.mxu0 %v2383
      %2857 = vmatprep.subr.bf16.mxu0 0
      %2858 = vmatpush1.bf16.msra.mxu0 %v2384
      %2859 = vmatprep.subr.bf16.mxu0 0
      %2860 = vmatpush1.bf16.msra.mxu0 %v2385
      %2861 = vmatprep.subr.bf16.mxu0 0
      %2862 = vmatpush1.bf16.msra.mxu0 %v2386
      %2863 = vmatprep.subr.bf16.mxu0 0
      %2864 = vmatpush1.bf16.msra.mxu0 0
      %2865 = vmatprep.subr.bf16.mxu0 0
      %2866 = vmatpush1.bf16.msra.mxu0 0
      %2867 = vmatprep.subr.bf16.mxu0 0
      %2868 = vmatpush1.bf16.msra.mxu0 0
      %2869 = vmatprep.subr.bf16.mxu0 0
      %2870 = vmatpush1.bf16.msra.mxu0 0
      %2871 = vmatprep.subr.bf16.mxu0 0
      %2872 = vmatpush1.bf16.msra.mxu0 0
      %2873 = vmatprep.subr.bf16.mxu0 0
      %2874 = vmatpush1.bf16.msra.mxu0 0
      %2875 = vmatprep.subr.bf16.mxu0 0
      %2876 = vmatpush1.bf16.msra.mxu0 0
      %2877 = vmatprep.subr.bf16.mxu0 0
      %2878 = vmatpush1.bf16.msra.mxu0 0
      %2879 = vmatprep.mubr.bf16.mxu0 0
      %2880 = vmatmul.mubr.bf16.gmra.mrb[0].mxu0 %v1819
      %v2881 = vpop.f32.mrb[0].mxu0
      %v2882 = vadd.f32 %v2785, %v2881
      %v2883 = vpop.f32.mrb[0].mxu0
      %v2884 = vpop.f32.mrb[0].mxu0
      %v2885 = vadd.f32 %v2788, %v2884
      %v2886 = vpop.f32.mrb[0].mxu0
      %2887 = vmatprep.mubr.bf16.mxu0 0
      %2888 = vmatmul.mubr.bf16.gmra.mrb[0].mxu0 %v1828
      %v2889 = vpop.f32.mrb[0].mxu0
      %v2890 = vadd.f32 %v2793, %v2889
      %v2891 = vpop.f32.mrb[0].mxu0
      %v2892 = vpop.f32.mrb[0].mxu0
      %v2893 = vadd.f32 %v2796, %v2892
      %v2894 = vpop.f32.mrb[0].mxu0
      %2895 = vmatprep.mubr.bf16.mxu0 0
      %2896 = vmatmul.mubr.bf16.gmra.mrb[0].mxu0 %v1837
      %v2897 = vpop.f32.mrb[0].mxu0
      %v2898 = vadd.f32 %v2801, %v2897
      %v2899 = vpop.f32.mrb[0].mxu0
      %v2900 = vpop.f32.mrb[0].mxu0
      %v2901 = vadd.f32 %v2804, %v2900
      %v2902 = vpop.f32.mrb[0].mxu0
      %2903 = vmatprep.mubr.bf16.mxu0 0
      %2904 = vmatmul.mubr.bf16.gmra.mrb[0].mxu0 %v1846
      %v2905 = vpop.f32.mrb[0].mxu0
      %v2906 = vadd.f32 %v2809, %v2905
      %v2907 = vpop.f32.mrb[0].mxu0
      %v2908 = vpop.f32.mrb[0].mxu0
      %v2909 = vadd.f32 %v2812, %v2908
      %v2910 = vpop.f32.mrb[0].mxu0
      %2911 = vmatprep.mubr.bf16.mxu0 0
      %2912 = vmatmul.mubr.bf16.gmra.mrb[0].mxu0 %v1855
      %v2913 = vpop.f32.mrb[0].mxu0
      %v2914 = vadd.f32 %v2817, %v2913
      %v2915 = vpop.f32.mrb[0].mxu0
      %v2916 = vpop.f32.mrb[0].mxu0
      %v2917 = vadd.f32 %v2820, %v2916
      %v2918 = vpop.f32.mrb[0].mxu0
      %2919 = vmatprep.mubr.bf16.mxu0 0
      %2920 = vmatmul.mubr.bf16.gmra.mrb[0].mxu0 %v1864
      %v2921 = vpop.f32.mrb[0].mxu0
      %v2922 = vadd.f32 %v2825, %v2921
      %v2923 = vpop.f32.mrb[0].mxu0
      %v2924 = vpop.f32.mrb[0].mxu0
      %v2925 = vadd.f32 %v2828, %v2924
      %v2926 = vpop.f32.mrb[0].mxu0
      %2927 = vmatprep.mubr.bf16.mxu0 0
      %2928 = vmatmul.mubr.bf16.gmra.mrb[0].mxu0 %v1873
      %v2929 = vpop.f32.mrb[0].mxu0
      %v2930 = vadd.f32 %v2833, %v2929
      %v2931 = vpop.f32.mrb[0].mxu0
      %v2932 = vpop.f32.mrb[0].mxu0
      %v2933 = vadd.f32 %v2836, %v2932
      %v2934 = vpop.f32.mrb[0].mxu0
      %2935 = vmatprep.mubr.bf16.mxu0 0
      %2936 = vmatmul.mubr.bf16.gmra.mrb[0].mxu0 %v1882
      %v2937 = vpop.f32.mrb[0].mxu0
      %v2938 = vadd.f32 %v2841, %v2937
      %v2939 = vpop.f32.mrb[0].mxu0
      %v2940 = vpop.f32.mrb[0].mxu0
      %v2941 = vadd.f32 %v2844, %v2940
      %v2942 = vpop.f32.mrb[0].mxu0
      %2943 = vdwg.mxu0
      %v2944 = vadd.f32 %v2882, %v2885
      %v2945 = vadd.f32 %v2944, %v2890
      %v2946 = vadd.f32 %v2945, %v2893
      %v2947 = vadd.f32 %v2946, %v2898
      %v2948 = vadd.f32 %v2947, %v2901
      %v2949 = vadd.f32 %v2948, %v2906
      %v2950 = vadd.f32 %v2949, %v2909
      %v2951 = vadd.f32 %v2950, %v2914
      %v2952 = vadd.f32 %v2951, %v2917
      %v2953 = vadd.f32 %v2952, %v2922
      %v2954 = vadd.f32 %v2953, %v2925
      %v2955 = vadd.f32 %v2954, %v2930
      %v2956 = vadd.f32 %v2955, %v2933
      %v2957 = vadd.f32 %v2956, %v2938
      %v2958 = vadd.f32 %v2957, %v2941
      %v2959 = vrot.slane %v2958, 4
      %v2960 = vadd.f32 %v2958, %v2959
      %v2961 = vrot.slane %v2960, 2
      %v2962 = vadd.f32 %v2960, %v2961
      %v2963 = vrot.slane %v2962, 1
      %v2964 = vadd.f32 %v2962, %v2963
      %2965 = vst [vmem:[%s281] sm:$0x1] %v2964
      %v2966 = vmul.f32 %v2882, %v2882
      %v2967 = vmul.f32 %v2885, %v2885
      %v2968 = vmul.f32 %v2890, %v2890
      %v2969 = vmul.f32 %v2893, %v2893
      %v2970 = vmul.f32 %v2898, %v2898
      %v2971 = vmul.f32 %v2901, %v2901
      %v2972 = vmul.f32 %v2906, %v2906
      %v2973 = vmul.f32 %v2909, %v2909
      %v2974 = vmul.f32 %v2914, %v2914
      %v2975 = vmul.f32 %v2917, %v2917
      %v2976 = vmul.f32 %v2922, %v2922
      %v2977 = vmul.f32 %v2925, %v2925
      %v2978 = vmul.f32 %v2930, %v2930
      %v2979 = vmul.f32 %v2933, %v2933
      %v2980 = vmul.f32 %v2938, %v2938
      %v2981 = vmul.f32 %v2941, %v2941
      %v2982 = vadd.f32 %v2966, %v2967
      %v2983 = vadd.f32 %v2982, %v2968
      %v2984 = vadd.f32 %v2983, %v2969
      %v2985 = vadd.f32 %v2984, %v2970
      %v2986 = vadd.f32 %v2985, %v2971
      %v2987 = vadd.f32 %v2986, %v2972
      %v2988 = vadd.f32 %v2987, %v2973
      %v2989 = vadd.f32 %v2988, %v2974
      %v2990 = vadd.f32 %v2989, %v2975
      %v2991 = vadd.f32 %v2990, %v2976
      %v2992 = vadd.f32 %v2991, %v2977
      %v2993 = vadd.f32 %v2992, %v2978
      %v2994 = vadd.f32 %v2993, %v2979
      %v2995 = vadd.f32 %v2994, %v2980
      %v2996 = vadd.f32 %v2995, %v2981
      %v2997 = vrot.slane %v2996, 4
      %v2998 = vadd.f32 %v2996, %v2997
      %v2999 = vrot.slane %v2998, 2
      %v3000 = vadd.f32 %v2998, %v2999
      %v3001 = vrot.slane %v3000, 1
      %v3002 = vadd.f32 %v3000, %v3001
      %3003 = vst [vmem:[%s281 + $0x1] sm:$0x1] %v3002
      %v3004 = vpack.c.bf16 %v2885, %v2882
      %v3005 = vpack.c.bf16 %v2893, %v2890
      %v3006 = vpack.c.bf16 %v2901, %v2898
      %v3007 = vpack.c.bf16 %v2909, %v2906
      %v3008 = vpack.c.bf16 %v2917, %v2914
      %v3009 = vpack.c.bf16 %v2925, %v2922
      %v3010 = vpack.c.bf16 %v2933, %v2930
      %v3011 = vpack.c.bf16 %v2941, %v2938
      %v3020 = vunpack.c.l.b16 %v3004
      %v3021 = vunpack.c.h.b16 %v3004
      %v3022 = vunpack.c.l.b16 %v3005
      %v3023 = vunpack.c.h.b16 %v3005
      %v3024 = vunpack.c.l.b16 %v3006
      %v3025 = vunpack.c.h.b16 %v3006
      %v3026 = vunpack.c.l.b16 %v3007
      %v3027 = vunpack.c.h.b16 %v3007
      %v3028 = vunpack.c.l.b16 %v3008
      %v3029 = vunpack.c.h.b16 %v3008
      %v3030 = vunpack.c.l.b16 %v3009
      %v3031 = vunpack.c.h.b16 %v3009
      %v3032 = vunpack.c.l.b16 %v3010
      %v3033 = vunpack.c.h.b16 %v3010
      %v3034 = vunpack.c.l.b16 %v3011
      %v3035 = vunpack.c.h.b16 %v3011
      %v3036 = vpack.c.b16 %v3020, %v3020
      %v3037 = vpack.c.b16 %v3021, %v3021
      %v3038 = vpack.c.b16 %v3022, %v3022
      %v3039 = vpack.c.b16 %v3023, %v3023
      %v3040 = vpack.c.b16 %v3024, %v3024
      %v3041 = vpack.c.b16 %v3025, %v3025
      %v3042 = vpack.c.b16 %v3026, %v3026
      %v3043 = vpack.c.b16 %v3027, %v3027
      %v3044 = vpack.c.b16 %v3028, %v3028
      %v3045 = vpack.c.b16 %v3029, %v3029
      %v3046 = vpack.c.b16 %v3030, %v3030
      %v3047 = vpack.c.b16 %v3031, %v3031
      %v3048 = vpack.c.b16 %v3032, %v3032
      %v3049 = vpack.c.b16 %v3033, %v3033
      %v3050 = vpack.c.b16 %v3034, %v3034
      %v3051 = vpack.c.b16 %v3035, %v3035
      %3068 = vst [vmem:[%s273] sm:$0xf] %v3036
      %3069 = vst [vmem:[%s273 + $0x4] sm:$0xf] %v3037
      %3070 = vst [vmem:[%s273 + $0x8] sm:$0xf] %v3038
      %3071 = vst [vmem:[%s273 + $0xc] sm:$0xf] %v3039
      %3072 = vst [vmem:[%s273 + $0x10] sm:$0xf] %v3040
      %3073 = vst [vmem:[%s273 + $0x14] sm:$0xf] %v3041
      %3074 = vst [vmem:[%s273 + $0x18] sm:$0xf] %v3042
      %3075 = vst [vmem:[%s273 + $0x1c] sm:$0xf] %v3043
      %3076 = vst [vmem:[%s273 + $0x20] sm:$0xf] %v3044
      %3077 = vst [vmem:[%s273 + $0x24] sm:$0xf] %v3045
      %3078 = vst [vmem:[%s273 + $0x28] sm:$0xf] %v3046
      %3079 = vst [vmem:[%s273 + $0x2c] sm:$0xf] %v3047
      %3080 = vst [vmem:[%s273 + $0x30] sm:$0xf] %v3048
      %3081 = vst [vmem:[%s273 + $0x34] sm:$0xf] %v3049
      %3082 = vst [vmem:[%s273 + $0x38] sm:$0xf] %v3050
      %3083 = vst [vmem:[%s273 + $0x3c] sm:$0xf] %v3051
      %p3084 = scmp.lt.s32.totalorder %s21, 1
      %s3085 = scalar_select %p3084, %s21, 1
      %p3086 = scmp.lt.s32.totalorder %s22, 1
      %s3087 = scalar_select %p3086, %s22, 1
      %s3088 = smul.addr %s3087, 16
      %s3089 = smul.addr %s3085, 32
      %s3090 = sadd.s32 %s3088, %s3089
      %s3091 = smul.addr %s3090, 4
      %s3092 = scalar_lea.vmem %s4, %s3091
      %p3093 = scmp.lt.s32.totalorder %s21, 1
      %s3094 = scalar_select %p3093, %s21, 1
      %p3095 = scmp.lt.s32.totalorder %s22, 1
      %s3096 = scalar_select %p3095, %s22, 1
      %s3097 = smul.addr %s3094, 2
      %s3098 = sadd.s32 %s3096, %s3097
      %s3099 = smul.addr %s3098, 2
      %s3100 = scalar_lea.vmem %s5, %s3099
      // Predicated region
      $region37: #{unet_block.4} parent=35 // pred_check
        %p3101 = pneg %p140
      $region38: #{unet_block.4} parent=35 // pred_check_branch
        %3103 = sbr.rel (%p3101) target = $region40
      $region39: #{unet_block.4} parent=35 // pred_region
        _
      $region40: #{unet_block.4} parent=35 // pred_fallthru
        _
      // Predicated region
      $region41: #{unet_block.4} parent=35 // pred_check
        %p3104 = pneg %p168
      $region42: #{unet_block.4} parent=35 // pred_check_branch
        %3106 = sbr.rel (%p3104) target = $region44
      $region43: #{unet_block.4} parent=35 // pred_region
        _
      $region44: #{unet_block.4} parent=35 // pred_fallthru
        _
    $region36: #{unet_block.4} parent=5 // pred_fallthru
      _
    %p3107 = scmp.le.s32.totalorder 2, %s12
    // Predicated region
    $region45: #{unet_block.4} parent=5 // pred_check
      %p3108 = pneg %p3107
    $region46: #{unet_block.4} parent=5 // pred_check_branch
      %3110 = sbr.rel (%p3108) target = $region48
    $region47: #{unet_block.4} parent=5 // pred_region
      %s3111 = ssub.s32 %s12, 2
      // Predicated region
      $region49: #{unet_block.4} parent=47 // pred_check
        %p3112 = pneg %p146
      $region50: #{unet_block.4} parent=47 // pred_check_branch
        %3114 = sbr.rel (%p3112) target = $region52
      $region51: #{unet_block.4} parent=47 // pred_region
        %p3115 = scmp.lt.s32.totalorder %s23, 1
        %s3116 = scalar_select %p3115, %s23, 1
        %p3117 = scmp.lt.s32.totalorder %s24, 1
        %s3118 = scalar_select %p3117, %s24, 1
        %s3119 = smul.addr %s3118, 16
        %s3120 = smul.addr %s3116, 32
        %s3121 = sadd.s32 %s3119, %s3120
        %s3122 = smul.addr %s3121, 4
        %s3123 = scalar_lea.vmem %s4, %s3122
      $region52: #{unet_block.4} parent=47 // pred_fallthru
        _
      // Predicated region
      $region53: #{unet_block.4} parent=47 // pred_check
        %p3124 = pneg %p174
      $region54: #{unet_block.4} parent=47 // pred_check_branch
        %3126 = sbr.rel (%p3124) target = $region56
      $region55: #{unet_block.4} parent=47 // pred_region
        %p3127 = scmp.lt.s32.totalorder %s23, 1
        %s3128 = scalar_select %p3127, %s23, 1
        %p3129 = scmp.lt.s32.totalorder %s24, 1
        %s3130 = scalar_select %p3129, %s24, 1
        %s3131 = smul.addr %s3128, 2
        %s3132 = sadd.s32 %s3130, %s3131
        %s3133 = smul.addr %s3132, 2
        %s3134 = scalar_lea.vmem %s5, %s3133
      $region56: #{unet_block.4} parent=47 // pred_fallthru
        _
    $region48: #{unet_block.4} parent=5 // pred_fallthru
      _
  $region6: #{unet_block.4} parent=0 // loop_footer
    %s16 = sadd.s32 1, %s12
  $region7: #{unet_block.4} parent=0 // loop_footer_branch
    %11 = sbr.rel target = $region3
  $region8: #{unet_block.4} parent=0 // loop_exit
    _

</llo_original>
